<compile_context>
chip_gen: v5e
topology: v5e:2x2
jax: 0.10.0
libtpu: 0.0.40
codegen_flags: <defaults>
</compile_context>

<pallas_src>
import functools
import math

import jax
import jax.numpy as jnp
from jax.experimental import pallas as pl
from jax.experimental.pallas import tpu as pltpu

_LANE = 128
_SUBLANE = 8


def _round_up(x, m):
    return ((x + m - 1) // m) * m


# ----------------------------------------------------------------------------
# Fused kernel: all GRU layers (time loop fully unrolled in-kernel) + Linear.
# ----------------------------------------------------------------------------
def _make_gru_model_kernel(T, Bp, Hp, num_layers):
    """Builds the fused kernel.

    Ref layout (all feature dims padded to multiples of 128, batch to 8):
      x_ref      : (T*Bp, Ip)   time-major input, flattened over (t, b)
      per layer  : wih (inp, 3Hp) bf16, whh (Hp, 3Hp) bf16, bih (1,3Hp) f32, bhh (1,3Hp) f32
      wfc_ref    : (Hp, Op) bf16,  bfc_ref : (1, Op) f32
      out_ref    : (Bp, Op) f32
      gi_sc      : (T*Bp, 3Hp) f32   hoisted input projections (per layer, reused)
      seq_sc     : (T*Bp, Hp)  f32   per-layer output sequence (input to next layer)
    """

    def kernel(*refs):
        x_ref = refs[0]
        lrefs = refs[1:1 + 4 * num_layers]
        wfc_ref = refs[1 + 4 * num_layers]
        bfc_ref = refs[2 + 4 * num_layers]
        out_ref = refs[3 + 4 * num_layers]
        gi_sc = refs[4 + 4 * num_layers]
        seq_sc = refs[5 + 4 * num_layers]

        cur_in = x_ref                                  # (T*Bp, in_dim)
        h_last = jnp.zeros((Bp, Hp), jnp.float32)

        for layer in range(num_layers):
            wih_ref, whh_ref, bih_ref, bhh_ref = lrefs[4 * layer:4 * layer + 4]

            # Hoisted input projection: one (T*Bp, in) x (in, 3Hp) MXU matmul,
            # bias folded in here (off the serial recurrence path).
            gi_sc[...] = jnp.dot(cur_in[...].astype(jnp.bfloat16), wih_ref[...],
                                 preferred_element_type=jnp.float32) + bih_ref[...]

            whh = whh_ref[...]                          # (Hp, 3Hp) bf16, resident
            bhh = bhh_ref[...]                          # (1, 3Hp) f32

            # Sequential recurrence, fully unrolled (T is small & static).
            h = jnp.zeros((Bp, Hp), jnp.float32)
            for t in range(T):
                row = t * Bp                            # static, sublane-aligned
                gi_t = gi_sc[pl.ds(row, Bp), :]         # (Bp, 3Hp) f32
                gh = jnp.dot(h.astype(jnp.bfloat16), whh,
                             preferred_element_type=jnp.float32) + bhh
                # Each gate occupies a full 128-lane tile -> lane-aligned slices.
                r = jax.nn.sigmoid(gi_t[:, 0:Hp] + gh[:, 0:Hp])
                z = jax.nn.sigmoid(gi_t[:, Hp:2 * Hp] + gh[:, Hp:2 * Hp])
                n = jnp.tanh(gi_t[:, 2 * Hp:3 * Hp] + r * gh[:, 2 * Hp:3 * Hp])
                h = n + z * (h - n)                     # == (1-z)*n + z*h
                seq_sc[pl.ds(row, Bp), :] = h

            h_last = h
            cur_in = seq_sc                             # next layer reads (T*Bp, Hp)

        # Final Linear on the last time step of the last layer.
        out_ref[...] = (jnp.dot(h_last.astype(jnp.bfloat16), wfc_ref[...],
                                preferred_element_type=jnp.float32)
                        + bfc_ref[...]).astype(out_ref.dtype)

    return kernel


def _full_spec(shape):
    nd = len(shape)
    return pl.BlockSpec(shape, lambda i, _nd=nd: (0,) * _nd)


# ----------------------------------------------------------------------------
# Wrapper
# ----------------------------------------------------------------------------
@functools.partial(jax.jit, static_argnames=("output_size",))
def gru_model_forward(params, x_bti, *, output_size):
    """Forward pass of GRUModel.  x_bti: (B, T, input_size) -> (B, output_size)."""
    B, T, I = x_bti.shape
    gru_layers = params["gru"]
    num_layers = len(gru_layers)
    Ip = gru_layers[0]["w_ih_t"].shape[0]
    Hp = gru_layers[0]["w_hh_t"].shape[0]
    Op = params["fc"]["w_t"].shape[1]
    Bp = _round_up(max(B, 1), _SUBLANE)

    # batch-first -> time-major, zero-pad batch (sublanes) & features (lanes),
    # flatten (t, b) so the kernel never reshapes values internally.
    x_tbi = jnp.transpose(x_bti, (1, 0, 2)).astype(jnp.float32)
    x_pad = jnp.zeros((T, Bp, Ip), jnp.float32).at[:, :B, :I].set(x_tbi)
    x_flat = x_pad.reshape(T * Bp, Ip)

    inputs = [x_flat]
    for lp in gru_layers:
        inputs += [lp["w_ih_t"], lp["w_hh_t"], lp["b_ih"], lp["b_hh"]]
    inputs += [params["fc"]["w_t"], params["fc"]["b"]]

    grid_spec = pltpu.PrefetchScalarGridSpec(
        num_scalar_prefetch=0,
        grid=(1,),
        in_specs=[_full_spec(a.shape) for a in inputs],
        out_specs=_full_spec((Bp, Op)),
        scratch_shapes=[
            pltpu.VMEM((T * Bp, 3 * Hp), jnp.float32),   # hoisted input projections
            pltpu.VMEM((T * Bp, Hp), jnp.float32),       # per-layer output sequence
        ],
    )

    out_pad = pl.pallas_call(
        _make_gru_model_kernel(T, Bp, Hp, num_layers),
        out_shape=jax.ShapeDtypeStruct((Bp, Op), jnp.float32),
        grid_spec=grid_spec,
        compiler_params=pltpu.CompilerParams(
            dimension_semantics=("arbitrary",)),
    )(*inputs)

    return out_pad[:B, :output_size]


# ----------------------------------------------------------------------------
# Parameter init (PyTorch-style U(-1/sqrt(H), 1/sqrt(H))), padded & packed.
# ----------------------------------------------------------------------------
def init_params(key, input_size, hidden_size, num_layers, output_size):
    H = hidden_size
    Hp = _round_up(H, _LANE)
    Ip = _round_up(input_size, _LANE)
    Op = _round_up(output_size, _LANE)
    k = 1.0 / math.sqrt(H)

    def pack_w(w, in_dim, in_p):
        # w: (3H, in_dim) PyTorch layout -> (in_p, 3*Hp); gate g occupies the
        # lane-aligned column block [g*Hp, g*Hp+H), zero elsewhere.
        wt = w.T                                        # (in_dim, 3H)
        out = jnp.zeros((in_p, 3 * Hp), jnp.float32)
        for g in range(3):
            out = out.at[:in_dim, g * Hp:g * Hp + H].set(wt[:, g * H:(g + 1) * H])
        return out.astype(jnp.bfloat16)

    def pack_b(b):
        out = jnp.zeros((1, 3 * Hp), jnp.float32)
        for g in range(3):
            out = out.at[0, g * Hp:g * Hp + H].set(b[g * H:(g + 1) * H])
        return out

    params = {"gru": [], "fc": None}
    for layer in range(num_layers):
        in_sz = input_size if layer == 0 else H
        in_p = Ip if layer == 0 else Hp
        key, k1, k2, k3, k4 = jax.random.split(key, 5)
        w_ih = jax.random.uniform(k1, (3 * H, in_sz), jnp.float32, -k, k)
        w_hh = jax.random.uniform(k2, (3 * H, H), jnp.float32, -k, k)
        b_ih = jax.random.uniform(k3, (3 * H,), jnp.float32, -k, k)
        b_hh = jax.random.uniform(k4, (3 * H,), jnp.float32, -k, k)
        params["gru"].append({
            "w_ih_t": pack_w(w_ih, in_sz, in_p),        # (in_p, 3Hp) bf16
            "w_hh_t": pack_w(w_hh, H, Hp),              # (Hp, 3Hp)  bf16
            "b_ih": pack_b(b_ih),                       # (1, 3Hp)   f32
            "b_hh": pack_b(b_hh),                       # (1, 3Hp)   f32
        })

    key, k1, k2 = jax.random.split(key, 3)
    w_fc = jax.random.uniform(k1, (output_size, H), jnp.float32, -k, k)
    b_fc = jax.random.uniform(k2, (output_size,), jnp.float32, -k, k)
    w_fc_p = jnp.zeros((Hp, Op), jnp.float32).at[:H, :output_size].set(w_fc.T)
    b_fc_p = jnp.zeros((1, Op), jnp.float32).at[0, :output_size].set(b_fc)
    params["fc"] = {"w_t": w_fc_p.astype(jnp.bfloat16), "b": b_fc_p}
    return params


# ----------------------------------------------------------------------------
# Main
# ----------------------------------------------------------------------------
if __name__ == "__main__":
    input_size = 16
    hidden_size = 32
    num_layers = 2
    dropout = 0.1     # inactive (eval semantics)
    output_size = 4

    batch = 2
    seq_len = 8

    key = jax.random.PRNGKey(0)
    key, pkey, xkey = jax.random.split(key, 3)
    params = init_params(pkey, input_size, hidden_size, num_layers, output_size)
    x = jax.random.normal(xkey, (batch, seq_len, input_size), jnp.float32)

    out = gru_model_forward(params, x, output_size=output_size)
    jax.block_until_ready(out)
    assert out.shape == (batch, output_size), out.shape
    assert bool(jnp.all(jnp.isfinite(out)))
    print("KERNEL_OK")
</pallas_src>

<mosaic_0001>
module attributes {stable_mosaic.version = 11 : i64} {
  func.func @kernel(%arg0: i32, %arg1: memref<64x128xf32, #tpu.memory_space<vmem>>, %arg2: memref<128x384xbf16, #tpu.memory_space<vmem>>, %arg3: memref<128x384xbf16, #tpu.memory_space<vmem>>, %arg4: memref<1x384xf32, #tpu.memory_space<vmem>>, %arg5: memref<1x384xf32, #tpu.memory_space<vmem>>, %arg6: memref<128x384xbf16, #tpu.memory_space<vmem>>, %arg7: memref<128x384xbf16, #tpu.memory_space<vmem>>, %arg8: memref<1x384xf32, #tpu.memory_space<vmem>>, %arg9: memref<1x384xf32, #tpu.memory_space<vmem>>, %arg10: memref<128x128xbf16, #tpu.memory_space<vmem>>, %arg11: memref<1x128xf32, #tpu.memory_space<vmem>>, %arg12: memref<8x128xf32, #tpu.memory_space<vmem>>, %arg13: memref<64x384xf32, #tpu.memory_space<vmem>>, %arg14: memref<64x128xf32, #tpu.memory_space<vmem>>) attributes {dimension_semantics = [#tpu.dimension_semantics<arbitrary>], iteration_bounds = array<i64: 1>, scalar_prefetch = 0 : i64, scratch_operands = 2 : i64, tpu.core_type = #tpu.core_type<tc>, window_params = [{pipeline_mode = #tpu.pipeline_mode<synchronous>, transform_indices = @transform_0, window_bounds = array<i64: 64, 128>}, {pipeline_mode = #tpu.pipeline_mode<synchronous>, transform_indices = @transform_1, window_bounds = array<i64: 128, 384>}, {pipeline_mode = #tpu.pipeline_mode<synchronous>, transform_indices = @transform_2, window_bounds = array<i64: 128, 384>}, {pipeline_mode = #tpu.pipeline_mode<synchronous>, transform_indices = @transform_3, window_bounds = array<i64: 1, 384>}, {pipeline_mode = #tpu.pipeline_mode<synchronous>, transform_indices = @transform_4, window_bounds = array<i64: 1, 384>}, {pipeline_mode = #tpu.pipeline_mode<synchronous>, transform_indices = @transform_5, window_bounds = array<i64: 128, 384>}, {pipeline_mode = #tpu.pipeline_mode<synchronous>, transform_indices = @transform_6, window_bounds = array<i64: 128, 384>}, {pipeline_mode = #tpu.pipeline_mode<synchronous>, transform_indices = @transform_7, window_bounds = array<i64: 1, 384>}, {pipeline_mode = #tpu.pipeline_mode<synchronous>, transform_indices = @transform_8, window_bounds = array<i64: 1, 384>}, {pipeline_mode = #tpu.pipeline_mode<synchronous>, transform_indices = @transform_9, window_bounds = array<i64: 128, 128>}, {pipeline_mode = #tpu.pipeline_mode<synchronous>, transform_indices = @transform_10, window_bounds = array<i64: 1, 128>}, {pipeline_mode = #tpu.pipeline_mode<synchronous>, transform_indices = @transform_11, window_bounds = array<i64: 8, 128>}]} {
    %c0 = arith.constant 0 : index
    %c0_0 = arith.constant 0 : index
    %0 = vector.load %arg1[%c0, %c0_0] : memref<64x128xf32, #tpu.memory_space<vmem>>, vector<64x128xf32>
    %1 = arith.truncf %0 : vector<64x128xf32> to vector<64x128xbf16>
    %c0_1 = arith.constant 0 : index
    %c0_2 = arith.constant 0 : index
    %2 = vector.load %arg2[%c0_1, %c0_2] : memref<128x384xbf16, #tpu.memory_space<vmem>>, vector<128x384xbf16>
    %cst = arith.constant dense<0.000000e+00> : vector<64x384xf32>
    %3 = tpu.matmul %1, %2, %cst {dimension_numbers = #tpu.dot_dimension_numbers<[1], [0], [0], [1], [0, 0, 1, 1], [], []>} : vector<64x128xbf16>, vector<128x384xbf16>, vector<64x384xf32> -> vector<64x384xf32>
    %c0_3 = arith.constant 0 : index
    %c0_4 = arith.constant 0 : index
    %4 = vector.load %arg4[%c0_3, %c0_4] : memref<1x384xf32, #tpu.memory_space<vmem>>, vector<1x384xf32>
    %5 = vector.broadcast %4 : vector<1x384xf32> to vector<64x384xf32>
    %6 = arith.addf %3, %5 : vector<64x384xf32>
    %c0_5 = arith.constant 0 : index
    %c0_6 = arith.constant 0 : index
    %7 = vector.load %arg13[%c0_5, %c0_6] : memref<64x384xf32, #tpu.memory_space<vmem>>, vector<64x384xf32>
    tpu.vector_store %arg13[%c0_5, %c0_6], %6 {strides = array<i32>} : memref<64x384xf32, #tpu.memory_space<vmem>>, vector<64x384xf32>,
    %c0_7 = arith.constant 0 : index
    %c0_8 = arith.constant 0 : index
    %8 = vector.load %arg3[%c0_7, %c0_8] : memref<128x384xbf16, #tpu.memory_space<vmem>>, vector<128x384xbf16>
    %c0_9 = arith.constant 0 : index
    %c0_10 = arith.constant 0 : index
    %9 = vector.load %arg5[%c0_9, %c0_10] : memref<1x384xf32, #tpu.memory_space<vmem>>, vector<1x384xf32>
    %cst_11 = arith.constant 0.000000e+00 : f32
    %10 = vector.broadcast %cst_11 : f32 to vector<8x128xf32>
    %c0_12 = arith.constant 0 : index
    %c0_13 = arith.constant 0 : index
    %11 = vector.load %arg13[%c0_12, %c0_13] : memref<64x384xf32, #tpu.memory_space<vmem>>, vector<8x384xf32>
    %12 = arith.truncf %10 : vector<8x128xf32> to vector<8x128xbf16>
    %cst_14 = arith.constant dense<0.000000e+00> : vector<8x384xf32>
    %13 = tpu.matmul %12, %8, %cst_14 {dimension_numbers = #tpu.dot_dimension_numbers<[1], [0], [0], [1], [0, 0, 1, 1], [], []>} : vector<8x128xbf16>, vector<128x384xbf16>, vector<8x384xf32> -> vector<8x384xf32>
    %14 = vector.broadcast %9 : vector<1x384xf32> to vector<8x384xf32>
    %15 = arith.addf %13, %14 : vector<8x384xf32>
    %16 = vector.extract_strided_slice %11 {offsets = [0, 0], sizes = [8, 128], strides = [1, 1]} : vector<8x384xf32> to vector<8x128xf32>
    %17 = vector.extract_strided_slice %15 {offsets = [0, 0], sizes = [8, 128], strides = [1, 1]} : vector<8x384xf32> to vector<8x128xf32>
    %18 = arith.addf %16, %17 : vector<8x128xf32>
    %19 = arith.negf %18 : vector<8x128xf32>
    %20 = math.exp %19 : vector<8x128xf32>
    %cst_15 = arith.constant 1.000000e+00 : f32
    %21 = vector.broadcast %cst_15 : f32 to vector<8x128xf32>
    %22 = arith.addf %21, %20 : vector<8x128xf32>
    %23 = arith.divf %21, %22 : vector<8x128xf32>
    %24 = vector.extract_strided_slice %11 {offsets = [0, 128], sizes = [8, 128], strides = [1, 1]} : vector<8x384xf32> to vector<8x128xf32>
    %25 = vector.extract_strided_slice %15 {offsets = [0, 128], sizes = [8, 128], strides = [1, 1]} : vector<8x384xf32> to vector<8x128xf32>
    %26 = arith.addf %24, %25 : vector<8x128xf32>
    %27 = arith.negf %26 : vector<8x128xf32>
    %28 = math.exp %27 : vector<8x128xf32>
    %cst_16 = arith.constant 1.000000e+00 : f32
    %29 = vector.broadcast %cst_16 : f32 to vector<8x128xf32>
    %30 = arith.addf %29, %28 : vector<8x128xf32>
    %31 = arith.divf %29, %30 : vector<8x128xf32>
    %32 = vector.extract_strided_slice %11 {offsets = [0, 256], sizes = [8, 128], strides = [1, 1]} : vector<8x384xf32> to vector<8x128xf32>
    %33 = vector.extract_strided_slice %15 {offsets = [0, 256], sizes = [8, 128], strides = [1, 1]} : vector<8x384xf32> to vector<8x128xf32>
    %34 = arith.mulf %23, %33 : vector<8x128xf32>
    %35 = arith.addf %32, %34 : vector<8x128xf32>
    %36 = math.tanh %35 : vector<8x128xf32>
    %37 = arith.subf %10, %36 : vector<8x128xf32>
    %38 = arith.mulf %31, %37 : vector<8x128xf32>
    %39 = arith.addf %36, %38 : vector<8x128xf32>
    %c0_17 = arith.constant 0 : index
    %c0_18 = arith.constant 0 : index
    %40 = vector.load %arg14[%c0_17, %c0_18] : memref<64x128xf32, #tpu.memory_space<vmem>>, vector<8x128xf32>
    tpu.vector_store %arg14[%c0_17, %c0_18], %39 {strides = array<i32>} : memref<64x128xf32, #tpu.memory_space<vmem>>, vector<8x128xf32>,
    %c8 = arith.constant 8 : index
    %c0_19 = arith.constant 0 : index
    %41 = vector.load %arg13[%c8, %c0_19] : memref<64x384xf32, #tpu.memory_space<vmem>>, vector<8x384xf32>
    %42 = arith.truncf %39 : vector<8x128xf32> to vector<8x128xbf16>
    %cst_20 = arith.constant dense<0.000000e+00> : vector<8x384xf32>
    %43 = tpu.matmul %42, %8, %cst_20 {dimension_numbers = #tpu.dot_dimension_numbers<[1], [0], [0], [1], [0, 0, 1, 1], [], []>} : vector<8x128xbf16>, vector<128x384xbf16>, vector<8x384xf32> -> vector<8x384xf32>
    %44 = vector.broadcast %9 : vector<1x384xf32> to vector<8x384xf32>
    %45 = arith.addf %43, %44 : vector<8x384xf32>
    %46 = vector.extract_strided_slice %41 {offsets = [0, 0], sizes = [8, 128], strides = [1, 1]} : vector<8x384xf32> to vector<8x128xf32>
    %47 = vector.extract_strided_slice %45 {offsets = [0, 0], sizes = [8, 128], strides = [1, 1]} : vector<8x384xf32> to vector<8x128xf32>
    %48 = arith.addf %46, %47 : vector<8x128xf32>
    %49 = arith.negf %48 : vector<8x128xf32>
    %50 = math.exp %49 : vector<8x128xf32>
    %cst_21 = arith.constant 1.000000e+00 : f32
    %51 = vector.broadcast %cst_21 : f32 to vector<8x128xf32>
    %52 = arith.addf %51, %50 : vector<8x128xf32>
    %53 = arith.divf %51, %52 : vector<8x128xf32>
    %54 = vector.extract_strided_slice %41 {offsets = [0, 128], sizes = [8, 128], strides = [1, 1]} : vector<8x384xf32> to vector<8x128xf32>
    %55 = vector.extract_strided_slice %45 {offsets = [0, 128], sizes = [8, 128], strides = [1, 1]} : vector<8x384xf32> to vector<8x128xf32>
    %56 = arith.addf %54, %55 : vector<8x128xf32>
    %57 = arith.negf %56 : vector<8x128xf32>
    %58 = math.exp %57 : vector<8x128xf32>
    %cst_22 = arith.constant 1.000000e+00 : f32
    %59 = vector.broadcast %cst_22 : f32 to vector<8x128xf32>
    %60 = arith.addf %59, %58 : vector<8x128xf32>
    %61 = arith.divf %59, %60 : vector<8x128xf32>
    %62 = vector.extract_strided_slice %41 {offsets = [0, 256], sizes = [8, 128], strides = [1, 1]} : vector<8x384xf32> to vector<8x128xf32>
    %63 = vector.extract_strided_slice %45 {offsets = [0, 256], sizes = [8, 128], strides = [1, 1]} : vector<8x384xf32> to vector<8x128xf32>
    %64 = arith.mulf %53, %63 : vector<8x128xf32>
    %65 = arith.addf %62, %64 : vector<8x128xf32>
    %66 = math.tanh %65 : vector<8x128xf32>
    %67 = arith.subf %39, %66 : vector<8x128xf32>
    %68 = arith.mulf %61, %67 : vector<8x128xf32>
    %69 = arith.addf %66, %68 : vector<8x128xf32>
    %c8_23 = arith.constant 8 : index
    %c0_24 = arith.constant 0 : index
    %70 = vector.load %arg14[%c8_23, %c0_24] : memref<64x128xf32, #tpu.memory_space<vmem>>, vector<8x128xf32>
    tpu.vector_store %arg14[%c8_23, %c0_24], %69 {strides = array<i32>} : memref<64x128xf32, #tpu.memory_space<vmem>>, vector<8x128xf32>,
    %c16 = arith.constant 16 : index
    %c0_25 = arith.constant 0 : index
    %71 = vector.load %arg13[%c16, %c0_25] : memref<64x384xf32, #tpu.memory_space<vmem>>, vector<8x384xf32>
    %72 = arith.truncf %69 : vector<8x128xf32> to vector<8x128xbf16>
    %cst_26 = arith.constant dense<0.000000e+00> : vector<8x384xf32>
    %73 = tpu.matmul %72, %8, %cst_26 {dimension_numbers = #tpu.dot_dimension_numbers<[1], [0], [0], [1], [0, 0, 1, 1], [], []>} : vector<8x128xbf16>, vector<128x384xbf16>, vector<8x384xf32> -> vector<8x384xf32>
    %74 = vector.broadcast %9 : vector<1x384xf32> to vector<8x384xf32>
    %75 = arith.addf %73, %74 : vector<8x384xf32>
    %76 = vector.extract_strided_slice %71 {offsets = [0, 0], sizes = [8, 128], strides = [1, 1]} : vector<8x384xf32> to vector<8x128xf32>
    %77 = vector.extract_strided_slice %75 {offsets = [0, 0], sizes = [8, 128], strides = [1, 1]} : vector<8x384xf32> to vector<8x128xf32>
    %78 = arith.addf %76, %77 : vector<8x128xf32>
    %79 = arith.negf %78 : vector<8x128xf32>
    %80 = math.exp %79 : vector<8x128xf32>
    %cst_27 = arith.constant 1.000000e+00 : f32
    %81 = vector.broadcast %cst_27 : f32 to vector<8x128xf32>
    %82 = arith.addf %81, %80 : vector<8x128xf32>
    %83 = arith.divf %81, %82 : vector<8x128xf32>
    %84 = vector.extract_strided_slice %71 {offsets = [0, 128], sizes = [8, 128], strides = [1, 1]} : vector<8x384xf32> to vector<8x128xf32>
    %85 = vector.extract_strided_slice %75 {offsets = [0, 128], sizes = [8, 128], strides = [1, 1]} : vector<8x384xf32> to vector<8x128xf32>
    %86 = arith.addf %84, %85 : vector<8x128xf32>
    %87 = arith.negf %86 : vector<8x128xf32>
    %88 = math.exp %87 : vector<8x128xf32>
    %cst_28 = arith.constant 1.000000e+00 : f32
    %89 = vector.broadcast %cst_28 : f32 to vector<8x128xf32>
    %90 = arith.addf %89, %88 : vector<8x128xf32>
    %91 = arith.divf %89, %90 : vector<8x128xf32>
    %92 = vector.extract_strided_slice %71 {offsets = [0, 256], sizes = [8, 128], strides = [1, 1]} : vector<8x384xf32> to vector<8x128xf32>
    %93 = vector.extract_strided_slice %75 {offsets = [0, 256], sizes = [8, 128], strides = [1, 1]} : vector<8x384xf32> to vector<8x128xf32>
    %94 = arith.mulf %83, %93 : vector<8x128xf32>
    %95 = arith.addf %92, %94 : vector<8x128xf32>
    %96 = math.tanh %95 : vector<8x128xf32>
    %97 = arith.subf %69, %96 : vector<8x128xf32>
    %98 = arith.mulf %91, %97 : vector<8x128xf32>
    %99 = arith.addf %96, %98 : vector<8x128xf32>
    %c16_29 = arith.constant 16 : index
    %c0_30 = arith.constant 0 : index
    %100 = vector.load %arg14[%c16_29, %c0_30] : memref<64x128xf32, #tpu.memory_space<vmem>>, vector<8x128xf32>
    tpu.vector_store %arg14[%c16_29, %c0_30], %99 {strides = array<i32>} : memref<64x128xf32, #tpu.memory_space<vmem>>, vector<8x128xf32>,
    %c24 = arith.constant 24 : index
    %c0_31 = arith.constant 0 : index
    %101 = vector.load %arg13[%c24, %c0_31] : memref<64x384xf32, #tpu.memory_space<vmem>>, vector<8x384xf32>
    %102 = arith.truncf %99 : vector<8x128xf32> to vector<8x128xbf16>
    %cst_32 = arith.constant dense<0.000000e+00> : vector<8x384xf32>
    %103 = tpu.matmul %102, %8, %cst_32 {dimension_numbers = #tpu.dot_dimension_numbers<[1], [0], [0], [1], [0, 0, 1, 1], [], []>} : vector<8x128xbf16>, vector<128x384xbf16>, vector<8x384xf32> -> vector<8x384xf32>
    %104 = vector.broadcast %9 : vector<1x384xf32> to vector<8x384xf32>
    %105 = arith.addf %103, %104 : vector<8x384xf32>
    %106 = vector.extract_strided_slice %101 {offsets = [0, 0], sizes = [8, 128], strides = [1, 1]} : vector<8x384xf32> to vector<8x128xf32>
    %107 = vector.extract_strided_slice %105 {offsets = [0, 0], sizes = [8, 128], strides = [1, 1]} : vector<8x384xf32> to vector<8x128xf32>
    %108 = arith.addf %106, %107 : vector<8x128xf32>
    %109 = arith.negf %108 : vector<8x128xf32>
    %110 = math.exp %109 : vector<8x128xf32>
    %cst_33 = arith.constant 1.000000e+00 : f32
    %111 = vector.broadcast %cst_33 : f32 to vector<8x128xf32>
    %112 = arith.addf %111, %110 : vector<8x128xf32>
    %113 = arith.divf %111, %112 : vector<8x128xf32>
    %114 = vector.extract_strided_slice %101 {offsets = [0, 128], sizes = [8, 128], strides = [1, 1]} : vector<8x384xf32> to vector<8x128xf32>
    %115 = vector.extract_strided_slice %105 {offsets = [0, 128], sizes = [8, 128], strides = [1, 1]} : vector<8x384xf32> to vector<8x128xf32>
    %116 = arith.addf %114, %115 : vector<8x128xf32>
    %117 = arith.negf %116 : vector<8x128xf32>
    %118 = math.exp %117 : vector<8x128xf32>
    %cst_34 = arith.constant 1.000000e+00 : f32
    %119 = vector.broadcast %cst_34 : f32 to vector<8x128xf32>
    %120 = arith.addf %119, %118 : vector<8x128xf32>
    %121 = arith.divf %119, %120 : vector<8x128xf32>
    %122 = vector.extract_strided_slice %101 {offsets = [0, 256], sizes = [8, 128], strides = [1, 1]} : vector<8x384xf32> to vector<8x128xf32>
    %123 = vector.extract_strided_slice %105 {offsets = [0, 256], sizes = [8, 128], strides = [1, 1]} : vector<8x384xf32> to vector<8x128xf32>
    %124 = arith.mulf %113, %123 : vector<8x128xf32>
    %125 = arith.addf %122, %124 : vector<8x128xf32>
    %126 = math.tanh %125 : vector<8x128xf32>
    %127 = arith.subf %99, %126 : vector<8x128xf32>
    %128 = arith.mulf %121, %127 : vector<8x128xf32>
    %129 = arith.addf %126, %128 : vector<8x128xf32>
    %c24_35 = arith.constant 24 : index
    %c0_36 = arith.constant 0 : index
    %130 = vector.load %arg14[%c24_35, %c0_36] : memref<64x128xf32, #tpu.memory_space<vmem>>, vector<8x128xf32>
    tpu.vector_store %arg14[%c24_35, %c0_36], %129 {strides = array<i32>} : memref<64x128xf32, #tpu.memory_space<vmem>>, vector<8x128xf32>,
    %c32 = arith.constant 32 : index
    %c0_37 = arith.constant 0 : index
    %131 = vector.load %arg13[%c32, %c0_37] : memref<64x384xf32, #tpu.memory_space<vmem>>, vector<8x384xf32>
    %132 = arith.truncf %129 : vector<8x128xf32> to vector<8x128xbf16>
    %cst_38 = arith.constant dense<0.000000e+00> : vector<8x384xf32>
    %133 = tpu.matmul %132, %8, %cst_38 {dimension_numbers = #tpu.dot_dimension_numbers<[1], [0], [0], [1], [0, 0, 1, 1], [], []>} : vector<8x128xbf16>, vector<128x384xbf16>, vector<8x384xf32> -> vector<8x384xf32>
    %134 = vector.broadcast %9 : vector<1x384xf32> to vector<8x384xf32>
    %135 = arith.addf %133, %134 : vector<8x384xf32>
    %136 = vector.extract_strided_slice %131 {offsets = [0, 0], sizes = [8, 128], strides = [1, 1]} : vector<8x384xf32> to vector<8x128xf32>
    %137 = vector.extract_strided_slice %135 {offsets = [0, 0], sizes = [8, 128], strides = [1, 1]} : vector<8x384xf32> to vector<8x128xf32>
    %138 = arith.addf %136, %137 : vector<8x128xf32>
    %139 = arith.negf %138 : vector<8x128xf32>
    %140 = math.exp %139 : vector<8x128xf32>
    %cst_39 = arith.constant 1.000000e+00 : f32
    %141 = vector.broadcast %cst_39 : f32 to vector<8x128xf32>
    %142 = arith.addf %141, %140 : vector<8x128xf32>
    %143 = arith.divf %141, %142 : vector<8x128xf32>
    %144 = vector.extract_strided_slice %131 {offsets = [0, 128], sizes = [8, 128], strides = [1, 1]} : vector<8x384xf32> to vector<8x128xf32>
    %145 = vector.extract_strided_slice %135 {offsets = [0, 128], sizes = [8, 128], strides = [1, 1]} : vector<8x384xf32> to vector<8x128xf32>
    %146 = arith.addf %144, %145 : vector<8x128xf32>
    %147 = arith.negf %146 : vector<8x128xf32>
    %148 = math.exp %147 : vector<8x128xf32>
    %cst_40 = arith.constant 1.000000e+00 : f32
    %149 = vector.broadcast %cst_40 : f32 to vector<8x128xf32>
    %150 = arith.addf %149, %148 : vector<8x128xf32>
    %151 = arith.divf %149, %150 : vector<8x128xf32>
    %152 = vector.extract_strided_slice %131 {offsets = [0, 256], sizes = [8, 128], strides = [1, 1]} : vector<8x384xf32> to vector<8x128xf32>
    %153 = vector.extract_strided_slice %135 {offsets = [0, 256], sizes = [8, 128], strides = [1, 1]} : vector<8x384xf32> to vector<8x128xf32>
    %154 = arith.mulf %143, %153 : vector<8x128xf32>
    %155 = arith.addf %152, %154 : vector<8x128xf32>
    %156 = math.tanh %155 : vector<8x128xf32>
    %157 = arith.subf %129, %156 : vector<8x128xf32>
    %158 = arith.mulf %151, %157 : vector<8x128xf32>
    %159 = arith.addf %156, %158 : vector<8x128xf32>
    %c32_41 = arith.constant 32 : index
    %c0_42 = arith.constant 0 : index
    %160 = vector.load %arg14[%c32_41, %c0_42] : memref<64x128xf32, #tpu.memory_space<vmem>>, vector<8x128xf32>
    tpu.vector_store %arg14[%c32_41, %c0_42], %159 {strides = array<i32>} : memref<64x128xf32, #tpu.memory_space<vmem>>, vector<8x128xf32>,
    %c40 = arith.constant 40 : index
    %c0_43 = arith.constant 0 : index
    %161 = vector.load %arg13[%c40, %c0_43] : memref<64x384xf32, #tpu.memory_space<vmem>>, vector<8x384xf32>
    %162 = arith.truncf %159 : vector<8x128xf32> to vector<8x128xbf16>
    %cst_44 = arith.constant dense<0.000000e+00> : vector<8x384xf32>
    %163 = tpu.matmul %162, %8, %cst_44 {dimension_numbers = #tpu.dot_dimension_numbers<[1], [0], [0], [1], [0, 0, 1, 1], [], []>} : vector<8x128xbf16>, vector<128x384xbf16>, vector<8x384xf32> -> vector<8x384xf32>
    %164 = vector.broadcast %9 : vector<1x384xf32> to vector<8x384xf32>
    %165 = arith.addf %163, %164 : vector<8x384xf32>
    %166 = vector.extract_strided_slice %161 {offsets = [0, 0], sizes = [8, 128], strides = [1, 1]} : vector<8x384xf32> to vector<8x128xf32>
    %167 = vector.extract_strided_slice %165 {offsets = [0, 0], sizes = [8, 128], strides = [1, 1]} : vector<8x384xf32> to vector<8x128xf32>
    %168 = arith.addf %166, %167 : vector<8x128xf32>
    %169 = arith.negf %168 : vector<8x128xf32>
    %170 = math.exp %169 : vector<8x128xf32>
    %cst_45 = arith.constant 1.000000e+00 : f32
    %171 = vector.broadcast %cst_45 : f32 to vector<8x128xf32>
    %172 = arith.addf %171, %170 : vector<8x128xf32>
    %173 = arith.divf %171, %172 : vector<8x128xf32>
    %174 = vector.extract_strided_slice %161 {offsets = [0, 128], sizes = [8, 128], strides = [1, 1]} : vector<8x384xf32> to vector<8x128xf32>
    %175 = vector.extract_strided_slice %165 {offsets = [0, 128], sizes = [8, 128], strides = [1, 1]} : vector<8x384xf32> to vector<8x128xf32>
    %176 = arith.addf %174, %175 : vector<8x128xf32>
    %177 = arith.negf %176 : vector<8x128xf32>
    %178 = math.exp %177 : vector<8x128xf32>
    %cst_46 = arith.constant 1.000000e+00 : f32
    %179 = vector.broadcast %cst_46 : f32 to vector<8x128xf32>
    %180 = arith.addf %179, %178 : vector<8x128xf32>
    %181 = arith.divf %179, %180 : vector<8x128xf32>
    %182 = vector.extract_strided_slice %161 {offsets = [0, 256], sizes = [8, 128], strides = [1, 1]} : vector<8x384xf32> to vector<8x128xf32>
    %183 = vector.extract_strided_slice %165 {offsets = [0, 256], sizes = [8, 128], strides = [1, 1]} : vector<8x384xf32> to vector<8x128xf32>
    %184 = arith.mulf %173, %183 : vector<8x128xf32>
    %185 = arith.addf %182, %184 : vector<8x128xf32>
    %186 = math.tanh %185 : vector<8x128xf32>
    %187 = arith.subf %159, %186 : vector<8x128xf32>
    %188 = arith.mulf %181, %187 : vector<8x128xf32>
    %189 = arith.addf %186, %188 : vector<8x128xf32>
    %c40_47 = arith.constant 40 : index
    %c0_48 = arith.constant 0 : index
    %190 = vector.load %arg14[%c40_47, %c0_48] : memref<64x128xf32, #tpu.memory_space<vmem>>, vector<8x128xf32>
    tpu.vector_store %arg14[%c40_47, %c0_48], %189 {strides = array<i32>} : memref<64x128xf32, #tpu.memory_space<vmem>>, vector<8x128xf32>,
    %c48 = arith.constant 48 : index
    %c0_49 = arith.constant 0 : index
    %191 = vector.load %arg13[%c48, %c0_49] : memref<64x384xf32, #tpu.memory_space<vmem>>, vector<8x384xf32>
    %192 = arith.truncf %189 : vector<8x128xf32> to vector<8x128xbf16>
    %cst_50 = arith.constant dense<0.000000e+00> : vector<8x384xf32>
    %193 = tpu.matmul %192, %8, %cst_50 {dimension_numbers = #tpu.dot_dimension_numbers<[1], [0], [0], [1], [0, 0, 1, 1], [], []>} : vector<8x128xbf16>, vector<128x384xbf16>, vector<8x384xf32> -> vector<8x384xf32>
    %194 = vector.broadcast %9 : vector<1x384xf32> to vector<8x384xf32>
    %195 = arith.addf %193, %194 : vector<8x384xf32>
    %196 = vector.extract_strided_slice %191 {offsets = [0, 0], sizes = [8, 128], strides = [1, 1]} : vector<8x384xf32> to vector<8x128xf32>
    %197 = vector.extract_strided_slice %195 {offsets = [0, 0], sizes = [8, 128], strides = [1, 1]} : vector<8x384xf32> to vector<8x128xf32>
    %198 = arith.addf %196, %197 : vector<8x128xf32>
    %199 = arith.negf %198 : vector<8x128xf32>
    %200 = math.exp %199 : vector<8x128xf32>
    %cst_51 = arith.constant 1.000000e+00 : f32
    %201 = vector.broadcast %cst_51 : f32 to vector<8x128xf32>
    %202 = arith.addf %201, %200 : vector<8x128xf32>
    %203 = arith.divf %201, %202 : vector<8x128xf32>
    %204 = vector.extract_strided_slice %191 {offsets = [0, 128], sizes = [8, 128], strides = [1, 1]} : vector<8x384xf32> to vector<8x128xf32>
    %205 = vector.extract_strided_slice %195 {offsets = [0, 128], sizes = [8, 128], strides = [1, 1]} : vector<8x384xf32> to vector<8x128xf32>
    %206 = arith.addf %204, %205 : vector<8x128xf32>
    %207 = arith.negf %206 : vector<8x128xf32>
    %208 = math.exp %207 : vector<8x128xf32>
    %cst_52 = arith.constant 1.000000e+00 : f32
    %209 = vector.broadcast %cst_52 : f32 to vector<8x128xf32>
    %210 = arith.addf %209, %208 : vector<8x128xf32>
    %211 = arith.divf %209, %210 : vector<8x128xf32>
    %212 = vector.extract_strided_slice %191 {offsets = [0, 256], sizes = [8, 128], strides = [1, 1]} : vector<8x384xf32> to vector<8x128xf32>
    %213 = vector.extract_strided_slice %195 {offsets = [0, 256], sizes = [8, 128], strides = [1, 1]} : vector<8x384xf32> to vector<8x128xf32>
    %214 = arith.mulf %203, %213 : vector<8x128xf32>
    %215 = arith.addf %212, %214 : vector<8x128xf32>
    %216 = math.tanh %215 : vector<8x128xf32>
    %217 = arith.subf %189, %216 : vector<8x128xf32>
    %218 = arith.mulf %211, %217 : vector<8x128xf32>
    %219 = arith.addf %216, %218 : vector<8x128xf32>
    %c48_53 = arith.constant 48 : index
    %c0_54 = arith.constant 0 : index
    %220 = vector.load %arg14[%c48_53, %c0_54] : memref<64x128xf32, #tpu.memory_space<vmem>>, vector<8x128xf32>
    tpu.vector_store %arg14[%c48_53, %c0_54], %219 {strides = array<i32>} : memref<64x128xf32, #tpu.memory_space<vmem>>, vector<8x128xf32>,
    %c56 = arith.constant 56 : index
    %c0_55 = arith.constant 0 : index
    %221 = vector.load %arg13[%c56, %c0_55] : memref<64x384xf32, #tpu.memory_space<vmem>>, vector<8x384xf32>
    %222 = arith.truncf %219 : vector<8x128xf32> to vector<8x128xbf16>
    %cst_56 = arith.constant dense<0.000000e+00> : vector<8x384xf32>
    %223 = tpu.matmul %222, %8, %cst_56 {dimension_numbers = #tpu.dot_dimension_numbers<[1], [0], [0], [1], [0, 0, 1, 1], [], []>} : vector<8x128xbf16>, vector<128x384xbf16>, vector<8x384xf32> -> vector<8x384xf32>
    %224 = vector.broadcast %9 : vector<1x384xf32> to vector<8x384xf32>
    %225 = arith.addf %223, %224 : vector<8x384xf32>
    %226 = vector.extract_strided_slice %221 {offsets = [0, 0], sizes = [8, 128], strides = [1, 1]} : vector<8x384xf32> to vector<8x128xf32>
    %227 = vector.extract_strided_slice %225 {offsets = [0, 0], sizes = [8, 128], strides = [1, 1]} : vector<8x384xf32> to vector<8x128xf32>
    %228 = arith.addf %226, %227 : vector<8x128xf32>
    %229 = arith.negf %228 : vector<8x128xf32>
    %230 = math.exp %229 : vector<8x128xf32>
    %cst_57 = arith.constant 1.000000e+00 : f32
    %231 = vector.broadcast %cst_57 : f32 to vector<8x128xf32>
    %232 = arith.addf %231, %230 : vector<8x128xf32>
    %233 = arith.divf %231, %232 : vector<8x128xf32>
    %234 = vector.extract_strided_slice %221 {offsets = [0, 128], sizes = [8, 128], strides = [1, 1]} : vector<8x384xf32> to vector<8x128xf32>
    %235 = vector.extract_strided_slice %225 {offsets = [0, 128], sizes = [8, 128], strides = [1, 1]} : vector<8x384xf32> to vector<8x128xf32>
    %236 = arith.addf %234, %235 : vector<8x128xf32>
    %237 = arith.negf %236 : vector<8x128xf32>
    %238 = math.exp %237 : vector<8x128xf32>
    %cst_58 = arith.constant 1.000000e+00 : f32
    %239 = vector.broadcast %cst_58 : f32 to vector<8x128xf32>
    %240 = arith.addf %239, %238 : vector<8x128xf32>
    %241 = arith.divf %239, %240 : vector<8x128xf32>
    %242 = vector.extract_strided_slice %221 {offsets = [0, 256], sizes = [8, 128], strides = [1, 1]} : vector<8x384xf32> to vector<8x128xf32>
    %243 = vector.extract_strided_slice %225 {offsets = [0, 256], sizes = [8, 128], strides = [1, 1]} : vector<8x384xf32> to vector<8x128xf32>
    %244 = arith.mulf %233, %243 : vector<8x128xf32>
    %245 = arith.addf %242, %244 : vector<8x128xf32>
    %246 = math.tanh %245 : vector<8x128xf32>
    %247 = arith.subf %219, %246 : vector<8x128xf32>
    %248 = arith.mulf %241, %247 : vector<8x128xf32>
    %249 = arith.addf %246, %248 : vector<8x128xf32>
    %c56_59 = arith.constant 56 : index
    %c0_60 = arith.constant 0 : index
    %250 = vector.load %arg14[%c56_59, %c0_60] : memref<64x128xf32, #tpu.memory_space<vmem>>, vector<8x128xf32>
    tpu.vector_store %arg14[%c56_59, %c0_60], %249 {strides = array<i32>} : memref<64x128xf32, #tpu.memory_space<vmem>>, vector<8x128xf32>,
    %c0_61 = arith.constant 0 : index
    %c0_62 = arith.constant 0 : index
    %251 = vector.load %arg14[%c0_61, %c0_62] : memref<64x128xf32, #tpu.memory_space<vmem>>, vector<64x128xf32>
    %252 = arith.truncf %251 : vector<64x128xf32> to vector<64x128xbf16>
    %c0_63 = arith.constant 0 : index
    %c0_64 = arith.constant 0 : index
    %253 = vector.load %arg6[%c0_63, %c0_64] : memref<128x384xbf16, #tpu.memory_space<vmem>>, vector<128x384xbf16>
    %cst_65 = arith.constant dense<0.000000e+00> : vector<64x384xf32>
    %254 = tpu.matmul %252, %253, %cst_65 {dimension_numbers = #tpu.dot_dimension_numbers<[1], [0], [0], [1], [0, 0, 1, 1], [], []>} : vector<64x128xbf16>, vector<128x384xbf16>, vector<64x384xf32> -> vector<64x384xf32>
    %c0_66 = arith.constant 0 : index
    %c0_67 = arith.constant 0 : index
    %255 = vector.load %arg8[%c0_66, %c0_67] : memref<1x384xf32, #tpu.memory_space<vmem>>, vector<1x384xf32>
    %256 = vector.broadcast %255 : vector<1x384xf32> to vector<64x384xf32>
    %257 = arith.addf %254, %256 : vector<64x384xf32>
    %c0_68 = arith.constant 0 : index
    %c0_69 = arith.constant 0 : index
    %258 = vector.load %arg13[%c0_68, %c0_69] : memref<64x384xf32, #tpu.memory_space<vmem>>, vector<64x384xf32>
    tpu.vector_store %arg13[%c0_68, %c0_69], %257 {strides = array<i32>} : memref<64x384xf32, #tpu.memory_space<vmem>>, vector<64x384xf32>,
    %c0_70 = arith.constant 0 : index
    %c0_71 = arith.constant 0 : index
    %259 = vector.load %arg7[%c0_70, %c0_71] : memref<128x384xbf16, #tpu.memory_space<vmem>>, vector<128x384xbf16>
    %c0_72 = arith.constant 0 : index
    %c0_73 = arith.constant 0 : index
    %260 = vector.load %arg9[%c0_72, %c0_73] : memref<1x384xf32, #tpu.memory_space<vmem>>, vector<1x384xf32>
    %cst_74 = arith.constant 0.000000e+00 : f32
    %261 = vector.broadcast %cst_74 : f32 to vector<8x128xf32>
    %c0_75 = arith.constant 0 : index
    %c0_76 = arith.constant 0 : index
    %262 = vector.load %arg13[%c0_75, %c0_76] : memref<64x384xf32, #tpu.memory_space<vmem>>, vector<8x384xf32>
    %263 = arith.truncf %261 : vector<8x128xf32> to vector<8x128xbf16>
    %cst_77 = arith.constant dense<0.000000e+00> : vector<8x384xf32>
    %264 = tpu.matmul %263, %259, %cst_77 {dimension_numbers = #tpu.dot_dimension_numbers<[1], [0], [0], [1], [0, 0, 1, 1], [], []>} : vector<8x128xbf16>, vector<128x384xbf16>, vector<8x384xf32> -> vector<8x384xf32>
    %265 = vector.broadcast %260 : vector<1x384xf32> to vector<8x384xf32>
    %266 = arith.addf %264, %265 : vector<8x384xf32>
    %267 = vector.extract_strided_slice %262 {offsets = [0, 0], sizes = [8, 128], strides = [1, 1]} : vector<8x384xf32> to vector<8x128xf32>
    %268 = vector.extract_strided_slice %266 {offsets = [0, 0], sizes = [8, 128], strides = [1, 1]} : vector<8x384xf32> to vector<8x128xf32>
    %269 = arith.addf %267, %268 : vector<8x128xf32>
    %270 = arith.negf %269 : vector<8x128xf32>
    %271 = math.exp %270 : vector<8x128xf32>
    %cst_78 = arith.constant 1.000000e+00 : f32
    %272 = vector.broadcast %cst_78 : f32 to vector<8x128xf32>
    %273 = arith.addf %272, %271 : vector<8x128xf32>
    %274 = arith.divf %272, %273 : vector<8x128xf32>
    %275 = vector.extract_strided_slice %262 {offsets = [0, 128], sizes = [8, 128], strides = [1, 1]} : vector<8x384xf32> to vector<8x128xf32>
    %276 = vector.extract_strided_slice %266 {offsets = [0, 128], sizes = [8, 128], strides = [1, 1]} : vector<8x384xf32> to vector<8x128xf32>
    %277 = arith.addf %275, %276 : vector<8x128xf32>
    %278 = arith.negf %277 : vector<8x128xf32>
    %279 = math.exp %278 : vector<8x128xf32>
    %cst_79 = arith.constant 1.000000e+00 : f32
    %280 = vector.broadcast %cst_79 : f32 to vector<8x128xf32>
    %281 = arith.addf %280, %279 : vector<8x128xf32>
    %282 = arith.divf %280, %281 : vector<8x128xf32>
    %283 = vector.extract_strided_slice %262 {offsets = [0, 256], sizes = [8, 128], strides = [1, 1]} : vector<8x384xf32> to vector<8x128xf32>
    %284 = vector.extract_strided_slice %266 {offsets = [0, 256], sizes = [8, 128], strides = [1, 1]} : vector<8x384xf32> to vector<8x128xf32>
    %285 = arith.mulf %274, %284 : vector<8x128xf32>
    %286 = arith.addf %283, %285 : vector<8x128xf32>
    %287 = math.tanh %286 : vector<8x128xf32>
    %288 = arith.subf %261, %287 : vector<8x128xf32>
    %289 = arith.mulf %282, %288 : vector<8x128xf32>
    %290 = arith.addf %287, %289 : vector<8x128xf32>
    %c0_80 = arith.constant 0 : index
    %c0_81 = arith.constant 0 : index
    %291 = vector.load %arg14[%c0_80, %c0_81] : memref<64x128xf32, #tpu.memory_space<vmem>>, vector<8x128xf32>
    tpu.vector_store %arg14[%c0_80, %c0_81], %290 {strides = array<i32>} : memref<64x128xf32, #tpu.memory_space<vmem>>, vector<8x128xf32>,
    %c8_82 = arith.constant 8 : index
    %c0_83 = arith.constant 0 : index
    %292 = vector.load %arg13[%c8_82, %c0_83] : memref<64x384xf32, #tpu.memory_space<vmem>>, vector<8x384xf32>
    %293 = arith.truncf %290 : vector<8x128xf32> to vector<8x128xbf16>
    %cst_84 = arith.constant dense<0.000000e+00> : vector<8x384xf32>
    %294 = tpu.matmul %293, %259, %cst_84 {dimension_numbers = #tpu.dot_dimension_numbers<[1], [0], [0], [1], [0, 0, 1, 1], [], []>} : vector<8x128xbf16>, vector<128x384xbf16>, vector<8x384xf32> -> vector<8x384xf32>
    %295 = vector.broadcast %260 : vector<1x384xf32> to vector<8x384xf32>
    %296 = arith.addf %294, %295 : vector<8x384xf32>
    %297 = vector.extract_strided_slice %292 {offsets = [0, 0], sizes = [8, 128], strides = [1, 1]} : vector<8x384xf32> to vector<8x128xf32>
    %298 = vector.extract_strided_slice %296 {offsets = [0, 0], sizes = [8, 128], strides = [1, 1]} : vector<8x384xf32> to vector<8x128xf32>
    %299 = arith.addf %297, %298 : vector<8x128xf32>
    %300 = arith.negf %299 : vector<8x128xf32>
    %301 = math.exp %300 : vector<8x128xf32>
    %cst_85 = arith.constant 1.000000e+00 : f32
    %302 = vector.broadcast %cst_85 : f32 to vector<8x128xf32>
    %303 = arith.addf %302, %301 : vector<8x128xf32>
    %304 = arith.divf %302, %303 : vector<8x128xf32>
    %305 = vector.extract_strided_slice %292 {offsets = [0, 128], sizes = [8, 128], strides = [1, 1]} : vector<8x384xf32> to vector<8x128xf32>
    %306 = vector.extract_strided_slice %296 {offsets = [0, 128], sizes = [8, 128], strides = [1, 1]} : vector<8x384xf32> to vector<8x128xf32>
    %307 = arith.addf %305, %306 : vector<8x128xf32>
    %308 = arith.negf %307 : vector<8x128xf32>
    %309 = math.exp %308 : vector<8x128xf32>
    %cst_86 = arith.constant 1.000000e+00 : f32
    %310 = vector.broadcast %cst_86 : f32 to vector<8x128xf32>
    %311 = arith.addf %310, %309 : vector<8x128xf32>
    %312 = arith.divf %310, %311 : vector<8x128xf32>
    %313 = vector.extract_strided_slice %292 {offsets = [0, 256], sizes = [8, 128], strides = [1, 1]} : vector<8x384xf32> to vector<8x128xf32>
    %314 = vector.extract_strided_slice %296 {offsets = [0, 256], sizes = [8, 128], strides = [1, 1]} : vector<8x384xf32> to vector<8x128xf32>
    %315 = arith.mulf %304, %314 : vector<8x128xf32>
    %316 = arith.addf %313, %315 : vector<8x128xf32>
    %317 = math.tanh %316 : vector<8x128xf32>
    %318 = arith.subf %290, %317 : vector<8x128xf32>
    %319 = arith.mulf %312, %318 : vector<8x128xf32>
    %320 = arith.addf %317, %319 : vector<8x128xf32>
    %c8_87 = arith.constant 8 : index
    %c0_88 = arith.constant 0 : index
    %321 = vector.load %arg14[%c8_87, %c0_88] : memref<64x128xf32, #tpu.memory_space<vmem>>, vector<8x128xf32>
    tpu.vector_store %arg14[%c8_87, %c0_88], %320 {strides = array<i32>} : memref<64x128xf32, #tpu.memory_space<vmem>>, vector<8x128xf32>,
    %c16_89 = arith.constant 16 : index
    %c0_90 = arith.constant 0 : index
    %322 = vector.load %arg13[%c16_89, %c0_90] : memref<64x384xf32, #tpu.memory_space<vmem>>, vector<8x384xf32>
    %323 = arith.truncf %320 : vector<8x128xf32> to vector<8x128xbf16>
    %cst_91 = arith.constant dense<0.000000e+00> : vector<8x384xf32>
    %324 = tpu.matmul %323, %259, %cst_91 {dimension_numbers = #tpu.dot_dimension_numbers<[1], [0], [0], [1], [0, 0, 1, 1], [], []>} : vector<8x128xbf16>, vector<128x384xbf16>, vector<8x384xf32> -> vector<8x384xf32>
    %325 = vector.broadcast %260 : vector<1x384xf32> to vector<8x384xf32>
    %326 = arith.addf %324, %325 : vector<8x384xf32>
    %327 = vector.extract_strided_slice %322 {offsets = [0, 0], sizes = [8, 128], strides = [1, 1]} : vector<8x384xf32> to vector<8x128xf32>
    %328 = vector.extract_strided_slice %326 {offsets = [0, 0], sizes = [8, 128], strides = [1, 1]} : vector<8x384xf32> to vector<8x128xf32>
    %329 = arith.addf %327, %328 : vector<8x128xf32>
    %330 = arith.negf %329 : vector<8x128xf32>
    %331 = math.exp %330 : vector<8x128xf32>
    %cst_92 = arith.constant 1.000000e+00 : f32
    %332 = vector.broadcast %cst_92 : f32 to vector<8x128xf32>
    %333 = arith.addf %332, %331 : vector<8x128xf32>
    %334 = arith.divf %332, %333 : vector<8x128xf32>
    %335 = vector.extract_strided_slice %322 {offsets = [0, 128], sizes = [8, 128], strides = [1, 1]} : vector<8x384xf32> to vector<8x128xf32>
    %336 = vector.extract_strided_slice %326 {offsets = [0, 128], sizes = [8, 128], strides = [1, 1]} : vector<8x384xf32> to vector<8x128xf32>
    %337 = arith.addf %335, %336 : vector<8x128xf32>
    %338 = arith.negf %337 : vector<8x128xf32>
    %339 = math.exp %338 : vector<8x128xf32>
    %cst_93 = arith.constant 1.000000e+00 : f32
    %340 = vector.broadcast %cst_93 : f32 to vector<8x128xf32>
    %341 = arith.addf %340, %339 : vector<8x128xf32>
    %342 = arith.divf %340, %341 : vector<8x128xf32>
    %343 = vector.extract_strided_slice %322 {offsets = [0, 256], sizes = [8, 128], strides = [1, 1]} : vector<8x384xf32> to vector<8x128xf32>
    %344 = vector.extract_strided_slice %326 {offsets = [0, 256], sizes = [8, 128], strides = [1, 1]} : vector<8x384xf32> to vector<8x128xf32>
    %345 = arith.mulf %334, %344 : vector<8x128xf32>
    %346 = arith.addf %343, %345 : vector<8x128xf32>
    %347 = math.tanh %346 : vector<8x128xf32>
    %348 = arith.subf %320, %347 : vector<8x128xf32>
    %349 = arith.mulf %342, %348 : vector<8x128xf32>
    %350 = arith.addf %347, %349 : vector<8x128xf32>
    %c16_94 = arith.constant 16 : index
    %c0_95 = arith.constant 0 : index
    %351 = vector.load %arg14[%c16_94, %c0_95] : memref<64x128xf32, #tpu.memory_space<vmem>>, vector<8x128xf32>
    tpu.vector_store %arg14[%c16_94, %c0_95], %350 {strides = array<i32>} : memref<64x128xf32, #tpu.memory_space<vmem>>, vector<8x128xf32>,
    %c24_96 = arith.constant 24 : index
    %c0_97 = arith.constant 0 : index
    %352 = vector.load %arg13[%c24_96, %c0_97] : memref<64x384xf32, #tpu.memory_space<vmem>>, vector<8x384xf32>
    %353 = arith.truncf %350 : vector<8x128xf32> to vector<8x128xbf16>
    %cst_98 = arith.constant dense<0.000000e+00> : vector<8x384xf32>
    %354 = tpu.matmul %353, %259, %cst_98 {dimension_numbers = #tpu.dot_dimension_numbers<[1], [0], [0], [1], [0, 0, 1, 1], [], []>} : vector<8x128xbf16>, vector<128x384xbf16>, vector<8x384xf32> -> vector<8x384xf32>
    %355 = vector.broadcast %260 : vector<1x384xf32> to vector<8x384xf32>
    %356 = arith.addf %354, %355 : vector<8x384xf32>
    %357 = vector.extract_strided_slice %352 {offsets = [0, 0], sizes = [8, 128], strides = [1, 1]} : vector<8x384xf32> to vector<8x128xf32>
    %358 = vector.extract_strided_slice %356 {offsets = [0, 0], sizes = [8, 128], strides = [1, 1]} : vector<8x384xf32> to vector<8x128xf32>
    %359 = arith.addf %357, %358 : vector<8x128xf32>
    %360 = arith.negf %359 : vector<8x128xf32>
    %361 = math.exp %360 : vector<8x128xf32>
    %cst_99 = arith.constant 1.000000e+00 : f32
    %362 = vector.broadcast %cst_99 : f32 to vector<8x128xf32>
    %363 = arith.addf %362, %361 : vector<8x128xf32>
    %364 = arith.divf %362, %363 : vector<8x128xf32>
    %365 = vector.extract_strided_slice %352 {offsets = [0, 128], sizes = [8, 128], strides = [1, 1]} : vector<8x384xf32> to vector<8x128xf32>
    %366 = vector.extract_strided_slice %356 {offsets = [0, 128], sizes = [8, 128], strides = [1, 1]} : vector<8x384xf32> to vector<8x128xf32>
    %367 = arith.addf %365, %366 : vector<8x128xf32>
    %368 = arith.negf %367 : vector<8x128xf32>
    %369 = math.exp %368 : vector<8x128xf32>
    %cst_100 = arith.constant 1.000000e+00 : f32
    %370 = vector.broadcast %cst_100 : f32 to vector<8x128xf32>
    %371 = arith.addf %370, %369 : vector<8x128xf32>
    %372 = arith.divf %370, %371 : vector<8x128xf32>
    %373 = vector.extract_strided_slice %352 {offsets = [0, 256], sizes = [8, 128], strides = [1, 1]} : vector<8x384xf32> to vector<8x128xf32>
    %374 = vector.extract_strided_slice %356 {offsets = [0, 256], sizes = [8, 128], strides = [1, 1]} : vector<8x384xf32> to vector<8x128xf32>
    %375 = arith.mulf %364, %374 : vector<8x128xf32>
    %376 = arith.addf %373, %375 : vector<8x128xf32>
    %377 = math.tanh %376 : vector<8x128xf32>
    %378 = arith.subf %350, %377 : vector<8x128xf32>
    %379 = arith.mulf %372, %378 : vector<8x128xf32>
    %380 = arith.addf %377, %379 : vector<8x128xf32>
    %c24_101 = arith.constant 24 : index
    %c0_102 = arith.constant 0 : index
    %381 = vector.load %arg14[%c24_101, %c0_102] : memref<64x128xf32, #tpu.memory_space<vmem>>, vector<8x128xf32>
    tpu.vector_store %arg14[%c24_101, %c0_102], %380 {strides = array<i32>} : memref<64x128xf32, #tpu.memory_space<vmem>>, vector<8x128xf32>,
    %c32_103 = arith.constant 32 : index
    %c0_104 = arith.constant 0 : index
    %382 = vector.load %arg13[%c32_103, %c0_104] : memref<64x384xf32, #tpu.memory_space<vmem>>, vector<8x384xf32>
    %383 = arith.truncf %380 : vector<8x128xf32> to vector<8x128xbf16>
    %cst_105 = arith.constant dense<0.000000e+00> : vector<8x384xf32>
    %384 = tpu.matmul %383, %259, %cst_105 {dimension_numbers = #tpu.dot_dimension_numbers<[1], [0], [0], [1], [0, 0, 1, 1], [], []>} : vector<8x128xbf16>, vector<128x384xbf16>, vector<8x384xf32> -> vector<8x384xf32>
    %385 = vector.broadcast %260 : vector<1x384xf32> to vector<8x384xf32>
    %386 = arith.addf %384, %385 : vector<8x384xf32>
    %387 = vector.extract_strided_slice %382 {offsets = [0, 0], sizes = [8, 128], strides = [1, 1]} : vector<8x384xf32> to vector<8x128xf32>
    %388 = vector.extract_strided_slice %386 {offsets = [0, 0], sizes = [8, 128], strides = [1, 1]} : vector<8x384xf32> to vector<8x128xf32>
    %389 = arith.addf %387, %388 : vector<8x128xf32>
    %390 = arith.negf %389 : vector<8x128xf32>
    %391 = math.exp %390 : vector<8x128xf32>
    %cst_106 = arith.constant 1.000000e+00 : f32
    %392 = vector.broadcast %cst_106 : f32 to vector<8x128xf32>
    %393 = arith.addf %392, %391 : vector<8x128xf32>
    %394 = arith.divf %392, %393 : vector<8x128xf32>
    %395 = vector.extract_strided_slice %382 {offsets = [0, 128], sizes = [8, 128], strides = [1, 1]} : vector<8x384xf32> to vector<8x128xf32>
    %396 = vector.extract_strided_slice %386 {offsets = [0, 128], sizes = [8, 128], strides = [1, 1]} : vector<8x384xf32> to vector<8x128xf32>
    %397 = arith.addf %395, %396 : vector<8x128xf32>
    %398 = arith.negf %397 : vector<8x128xf32>
    %399 = math.exp %398 : vector<8x128xf32>
    %cst_107 = arith.constant 1.000000e+00 : f32
    %400 = vector.broadcast %cst_107 : f32 to vector<8x128xf32>
    %401 = arith.addf %400, %399 : vector<8x128xf32>
    %402 = arith.divf %400, %401 : vector<8x128xf32>
    %403 = vector.extract_strided_slice %382 {offsets = [0, 256], sizes = [8, 128], strides = [1, 1]} : vector<8x384xf32> to vector<8x128xf32>
    %404 = vector.extract_strided_slice %386 {offsets = [0, 256], sizes = [8, 128], strides = [1, 1]} : vector<8x384xf32> to vector<8x128xf32>
    %405 = arith.mulf %394, %404 : vector<8x128xf32>
    %406 = arith.addf %403, %405 : vector<8x128xf32>
    %407 = math.tanh %406 : vector<8x128xf32>
    %408 = arith.subf %380, %407 : vector<8x128xf32>
    %409 = arith.mulf %402, %408 : vector<8x128xf32>
    %410 = arith.addf %407, %409 : vector<8x128xf32>
    %c32_108 = arith.constant 32 : index
    %c0_109 = arith.constant 0 : index
    %411 = vector.load %arg14[%c32_108, %c0_109] : memref<64x128xf32, #tpu.memory_space<vmem>>, vector<8x128xf32>
    tpu.vector_store %arg14[%c32_108, %c0_109], %410 {strides = array<i32>} : memref<64x128xf32, #tpu.memory_space<vmem>>, vector<8x128xf32>,
    %c40_110 = arith.constant 40 : index
    %c0_111 = arith.constant 0 : index
    %412 = vector.load %arg13[%c40_110, %c0_111] : memref<64x384xf32, #tpu.memory_space<vmem>>, vector<8x384xf32>
    %413 = arith.truncf %410 : vector<8x128xf32> to vector<8x128xbf16>
    %cst_112 = arith.constant dense<0.000000e+00> : vector<8x384xf32>
    %414 = tpu.matmul %413, %259, %cst_112 {dimension_numbers = #tpu.dot_dimension_numbers<[1], [0], [0], [1], [0, 0, 1, 1], [], []>} : vector<8x128xbf16>, vector<128x384xbf16>, vector<8x384xf32> -> vector<8x384xf32>
    %415 = vector.broadcast %260 : vector<1x384xf32> to vector<8x384xf32>
    %416 = arith.addf %414, %415 : vector<8x384xf32>
    %417 = vector.extract_strided_slice %412 {offsets = [0, 0], sizes = [8, 128], strides = [1, 1]} : vector<8x384xf32> to vector<8x128xf32>
    %418 = vector.extract_strided_slice %416 {offsets = [0, 0], sizes = [8, 128], strides = [1, 1]} : vector<8x384xf32> to vector<8x128xf32>
    %419 = arith.addf %417, %418 : vector<8x128xf32>
    %420 = arith.negf %419 : vector<8x128xf32>
    %421 = math.exp %420 : vector<8x128xf32>
    %cst_113 = arith.constant 1.000000e+00 : f32
    %422 = vector.broadcast %cst_113 : f32 to vector<8x128xf32>
    %423 = arith.addf %422, %421 : vector<8x128xf32>
    %424 = arith.divf %422, %423 : vector<8x128xf32>
    %425 = vector.extract_strided_slice %412 {offsets = [0, 128], sizes = [8, 128], strides = [1, 1]} : vector<8x384xf32> to vector<8x128xf32>
    %426 = vector.extract_strided_slice %416 {offsets = [0, 128], sizes = [8, 128], strides = [1, 1]} : vector<8x384xf32> to vector<8x128xf32>
    %427 = arith.addf %425, %426 : vector<8x128xf32>
    %428 = arith.negf %427 : vector<8x128xf32>
    %429 = math.exp %428 : vector<8x128xf32>
    %cst_114 = arith.constant 1.000000e+00 : f32
    %430 = vector.broadcast %cst_114 : f32 to vector<8x128xf32>
    %431 = arith.addf %430, %429 : vector<8x128xf32>
    %432 = arith.divf %430, %431 : vector<8x128xf32>
    %433 = vector.extract_strided_slice %412 {offsets = [0, 256], sizes = [8, 128], strides = [1, 1]} : vector<8x384xf32> to vector<8x128xf32>
    %434 = vector.extract_strided_slice %416 {offsets = [0, 256], sizes = [8, 128], strides = [1, 1]} : vector<8x384xf32> to vector<8x128xf32>
    %435 = arith.mulf %424, %434 : vector<8x128xf32>
    %436 = arith.addf %433, %435 : vector<8x128xf32>
    %437 = math.tanh %436 : vector<8x128xf32>
    %438 = arith.subf %410, %437 : vector<8x128xf32>
    %439 = arith.mulf %432, %438 : vector<8x128xf32>
    %440 = arith.addf %437, %439 : vector<8x128xf32>
    %c40_115 = arith.constant 40 : index
    %c0_116 = arith.constant 0 : index
    %441 = vector.load %arg14[%c40_115, %c0_116] : memref<64x128xf32, #tpu.memory_space<vmem>>, vector<8x128xf32>
    tpu.vector_store %arg14[%c40_115, %c0_116], %440 {strides = array<i32>} : memref<64x128xf32, #tpu.memory_space<vmem>>, vector<8x128xf32>,
    %c48_117 = arith.constant 48 : index
    %c0_118 = arith.constant 0 : index
    %442 = vector.load %arg13[%c48_117, %c0_118] : memref<64x384xf32, #tpu.memory_space<vmem>>, vector<8x384xf32>
    %443 = arith.truncf %440 : vector<8x128xf32> to vector<8x128xbf16>
    %cst_119 = arith.constant dense<0.000000e+00> : vector<8x384xf32>
    %444 = tpu.matmul %443, %259, %cst_119 {dimension_numbers = #tpu.dot_dimension_numbers<[1], [0], [0], [1], [0, 0, 1, 1], [], []>} : vector<8x128xbf16>, vector<128x384xbf16>, vector<8x384xf32> -> vector<8x384xf32>
    %445 = vector.broadcast %260 : vector<1x384xf32> to vector<8x384xf32>
    %446 = arith.addf %444, %445 : vector<8x384xf32>
    %447 = vector.extract_strided_slice %442 {offsets = [0, 0], sizes = [8, 128], strides = [1, 1]} : vector<8x384xf32> to vector<8x128xf32>
    %448 = vector.extract_strided_slice %446 {offsets = [0, 0], sizes = [8, 128], strides = [1, 1]} : vector<8x384xf32> to vector<8x128xf32>
    %449 = arith.addf %447, %448 : vector<8x128xf32>
    %450 = arith.negf %449 : vector<8x128xf32>
    %451 = math.exp %450 : vector<8x128xf32>
    %cst_120 = arith.constant 1.000000e+00 : f32
    %452 = vector.broadcast %cst_120 : f32 to vector<8x128xf32>
    %453 = arith.addf %452, %451 : vector<8x128xf32>
    %454 = arith.divf %452, %453 : vector<8x128xf32>
    %455 = vector.extract_strided_slice %442 {offsets = [0, 128], sizes = [8, 128], strides = [1, 1]} : vector<8x384xf32> to vector<8x128xf32>
    %456 = vector.extract_strided_slice %446 {offsets = [0, 128], sizes = [8, 128], strides = [1, 1]} : vector<8x384xf32> to vector<8x128xf32>
    %457 = arith.addf %455, %456 : vector<8x128xf32>
    %458 = arith.negf %457 : vector<8x128xf32>
    %459 = math.exp %458 : vector<8x128xf32>
    %cst_121 = arith.constant 1.000000e+00 : f32
    %460 = vector.broadcast %cst_121 : f32 to vector<8x128xf32>
    %461 = arith.addf %460, %459 : vector<8x128xf32>
    %462 = arith.divf %460, %461 : vector<8x128xf32>
    %463 = vector.extract_strided_slice %442 {offsets = [0, 256], sizes = [8, 128], strides = [1, 1]} : vector<8x384xf32> to vector<8x128xf32>
    %464 = vector.extract_strided_slice %446 {offsets = [0, 256], sizes = [8, 128], strides = [1, 1]} : vector<8x384xf32> to vector<8x128xf32>
    %465 = arith.mulf %454, %464 : vector<8x128xf32>
    %466 = arith.addf %463, %465 : vector<8x128xf32>
    %467 = math.tanh %466 : vector<8x128xf32>
    %468 = arith.subf %440, %467 : vector<8x128xf32>
    %469 = arith.mulf %462, %468 : vector<8x128xf32>
    %470 = arith.addf %467, %469 : vector<8x128xf32>
    %c48_122 = arith.constant 48 : index
    %c0_123 = arith.constant 0 : index
    %471 = vector.load %arg14[%c48_122, %c0_123] : memref<64x128xf32, #tpu.memory_space<vmem>>, vector<8x128xf32>
    tpu.vector_store %arg14[%c48_122, %c0_123], %470 {strides = array<i32>} : memref<64x128xf32, #tpu.memory_space<vmem>>, vector<8x128xf32>,
    %c56_124 = arith.constant 56 : index
    %c0_125 = arith.constant 0 : index
    %472 = vector.load %arg13[%c56_124, %c0_125] : memref<64x384xf32, #tpu.memory_space<vmem>>, vector<8x384xf32>
    %473 = arith.truncf %470 : vector<8x128xf32> to vector<8x128xbf16>
    %cst_126 = arith.constant dense<0.000000e+00> : vector<8x384xf32>
    %474 = tpu.matmul %473, %259, %cst_126 {dimension_numbers = #tpu.dot_dimension_numbers<[1], [0], [0], [1], [0, 0, 1, 1], [], []>} : vector<8x128xbf16>, vector<128x384xbf16>, vector<8x384xf32> -> vector<8x384xf32>
    %475 = vector.broadcast %260 : vector<1x384xf32> to vector<8x384xf32>
    %476 = arith.addf %474, %475 : vector<8x384xf32>
    %477 = vector.extract_strided_slice %472 {offsets = [0, 0], sizes = [8, 128], strides = [1, 1]} : vector<8x384xf32> to vector<8x128xf32>
    %478 = vector.extract_strided_slice %476 {offsets = [0, 0], sizes = [8, 128], strides = [1, 1]} : vector<8x384xf32> to vector<8x128xf32>
    %479 = arith.addf %477, %478 : vector<8x128xf32>
    %480 = arith.negf %479 : vector<8x128xf32>
    %481 = math.exp %480 : vector<8x128xf32>
    %cst_127 = arith.constant 1.000000e+00 : f32
    %482 = vector.broadcast %cst_127 : f32 to vector<8x128xf32>
    %483 = arith.addf %482, %481 : vector<8x128xf32>
    %484 = arith.divf %482, %483 : vector<8x128xf32>
    %485 = vector.extract_strided_slice %472 {offsets = [0, 128], sizes = [8, 128], strides = [1, 1]} : vector<8x384xf32> to vector<8x128xf32>
    %486 = vector.extract_strided_slice %476 {offsets = [0, 128], sizes = [8, 128], strides = [1, 1]} : vector<8x384xf32> to vector<8x128xf32>
    %487 = arith.addf %485, %486 : vector<8x128xf32>
    %488 = arith.negf %487 : vector<8x128xf32>
    %489 = math.exp %488 : vector<8x128xf32>
    %cst_128 = arith.constant 1.000000e+00 : f32
    %490 = vector.broadcast %cst_128 : f32 to vector<8x128xf32>
    %491 = arith.addf %490, %489 : vector<8x128xf32>
    %492 = arith.divf %490, %491 : vector<8x128xf32>
    %493 = vector.extract_strided_slice %472 {offsets = [0, 256], sizes = [8, 128], strides = [1, 1]} : vector<8x384xf32> to vector<8x128xf32>
    %494 = vector.extract_strided_slice %476 {offsets = [0, 256], sizes = [8, 128], strides = [1, 1]} : vector<8x384xf32> to vector<8x128xf32>
    %495 = arith.mulf %484, %494 : vector<8x128xf32>
    %496 = arith.addf %493, %495 : vector<8x128xf32>
    %497 = math.tanh %496 : vector<8x128xf32>
    %498 = arith.subf %470, %497 : vector<8x128xf32>
    %499 = arith.mulf %492, %498 : vector<8x128xf32>
    %500 = arith.addf %497, %499 : vector<8x128xf32>
    %c56_129 = arith.constant 56 : index
    %c0_130 = arith.constant 0 : index
    %501 = vector.load %arg14[%c56_129, %c0_130] : memref<64x128xf32, #tpu.memory_space<vmem>>, vector<8x128xf32>
    tpu.vector_store %arg14[%c56_129, %c0_130], %500 {strides = array<i32>} : memref<64x128xf32, #tpu.memory_space<vmem>>, vector<8x128xf32>,
    %502 = arith.truncf %500 : vector<8x128xf32> to vector<8x128xbf16>
    %c0_131 = arith.constant 0 : index
    %c0_132 = arith.constant 0 : index
    %503 = vector.load %arg10[%c0_131, %c0_132] : memref<128x128xbf16, #tpu.memory_space<vmem>>, vector<128x128xbf16>
    %cst_133 = arith.constant dense<0.000000e+00> : vector<8x128xf32>
    %504 = tpu.matmul %502, %503, %cst_133 {dimension_numbers = #tpu.dot_dimension_numbers<[1], [0], [0], [1], [0, 0, 1, 1], [], []>} : vector<8x128xbf16>, vector<128x128xbf16>, vector<8x128xf32> -> vector<8x128xf32>
    %c0_134 = arith.constant 0 : index
    %c0_135 = arith.constant 0 : index
    %505 = vector.load %arg11[%c0_134, %c0_135] : memref<1x128xf32, #tpu.memory_space<vmem>>, vector<1x128xf32>
    %506 = vector.broadcast %505 : vector<1x128xf32> to vector<8x128xf32>
    %507 = arith.addf %504, %506 : vector<8x128xf32>
    %c0_136 = arith.constant 0 : index
    %c0_137 = arith.constant 0 : index
    %508 = vector.load %arg12[%c0_136, %c0_137] : memref<8x128xf32, #tpu.memory_space<vmem>>, vector<8x128xf32>
    tpu.vector_store %arg12[%c0_136, %c0_137], %507 {strides = array<i32>} : memref<8x128xf32, #tpu.memory_space<vmem>>, vector<8x128xf32>,
    return
  }
  func.func @transform_0(%arg0: i32) -> (i32, i32) {
    %c0_i32 = arith.constant 0 : i32
    %c0_i32_0 = arith.constant 0 : i32
    %c0_i32_1 = arith.constant 0 : i32
    return %c0_i32, %c0_i32_0 : i32, i32
  }
  func.func @transform_1(%arg0: i32) -> (i32, i32) {
    %c0_i32 = arith.constant 0 : i32
    %c0_i32_0 = arith.constant 0 : i32
    %c0_i32_1 = arith.constant 0 : i32
    return %c0_i32, %c0_i32_0 : i32, i32
  }
  func.func @transform_2(%arg0: i32) -> (i32, i32) {
    %c0_i32 = arith.constant 0 : i32
    %c0_i32_0 = arith.constant 0 : i32
    %c0_i32_1 = arith.constant 0 : i32
    return %c0_i32, %c0_i32_0 : i32, i32
  }
  func.func @transform_3(%arg0: i32) -> (i32, i32) {
    %c0_i32 = arith.constant 0 : i32
    %c0_i32_0 = arith.constant 0 : i32
    %c0_i32_1 = arith.constant 0 : i32
    return %c0_i32, %c0_i32_0 : i32, i32
  }
  func.func @transform_4(%arg0: i32) -> (i32, i32) {
    %c0_i32 = arith.constant 0 : i32
    %c0_i32_0 = arith.constant 0 : i32
    %c0_i32_1 = arith.constant 0 : i32
    return %c0_i32, %c0_i32_0 : i32, i32
  }
  func.func @transform_5(%arg0: i32) -> (i32, i32) {
    %c0_i32 = arith.constant 0 : i32
    %c0_i32_0 = arith.constant 0 : i32
    %c0_i32_1 = arith.constant 0 : i32
    return %c0_i32, %c0_i32_0 : i32, i32
  }
  func.func @transform_6(%arg0: i32) -> (i32, i32) {
    %c0_i32 = arith.constant 0 : i32
    %c0_i32_0 = arith.constant 0 : i32
    %c0_i32_1 = arith.constant 0 : i32
    return %c0_i32, %c0_i32_0 : i32, i32
  }
  func.func @transform_7(%arg0: i32) -> (i32, i32) {
    %c0_i32 = arith.constant 0 : i32
    %c0_i32_0 = arith.constant 0 : i32
    %c0_i32_1 = arith.constant 0 : i32
    return %c0_i32, %c0_i32_0 : i32, i32
  }
  func.func @transform_8(%arg0: i32) -> (i32, i32) {
    %c0_i32 = arith.constant 0 : i32
    %c0_i32_0 = arith.constant 0 : i32
    %c0_i32_1 = arith.constant 0 : i32
    return %c0_i32, %c0_i32_0 : i32, i32
  }
  func.func @transform_9(%arg0: i32) -> (i32, i32) {
    %c0_i32 = arith.constant 0 : i32
    %c0_i32_0 = arith.constant 0 : i32
    %c0_i32_1 = arith.constant 0 : i32
    return %c0_i32, %c0_i32_0 : i32, i32
  }
  func.func @transform_10(%arg0: i32) -> (i32, i32) {
    %c0_i32 = arith.constant 0 : i32
    %c0_i32_0 = arith.constant 0 : i32
    %c0_i32_1 = arith.constant 0 : i32
    return %c0_i32, %c0_i32_0 : i32, i32
  }
  func.func @transform_11(%arg0: i32) -> (i32, i32) {
    %c0_i32 = arith.constant 0 : i32
    %c0_i32_0 = arith.constant 0 : i32
    %c0_i32_1 = arith.constant 0 : i32
    return %c0_i32, %c0_i32_0 : i32, i32
  }
}

</mosaic_0001>

<llo_original>
// kernel: gru_model_forward.1
$region0: #{gru_model_forward.1}
  #allocation0 [shape = 'u32[]', space=smem, size = 0x4, offset = 0x4, fixed_abs, tag = 'smem constant byte address 0x4 - core index']
  #allocation1 [shape = 'u32[72,128]{1,0:T(1,128)}', space=vmem, size = 0x9000, scoped, tag = 'internal scratch']
  #allocation2 [shape = 'f32[64,384]{1,0:T(8,128)}', space=vmem, size = 0x18000, scoped, tag = 'scratch operand']
  #allocation3 [shape = 'f32[64,128]{1,0:T(8,128)}', space=vmem, size = 0x8000, scoped, tag = 'scratch operand']
  %s0 = inlined_call_operand.vmem [shape: f32[64,128], index: 0, kind: input, shape index: {}]
  %s1 = inlined_call_operand.hbm [shape: bf16[128,384], index: 1, kind: input, shape index: {}]
  %s2 = inlined_call_operand.hbm [shape: bf16[128,384], index: 2, kind: input, shape index: {}]
  %s3 = inlined_call_operand.vmem [shape: f32[1,384], index: 3, kind: input, shape index: {}]
  %s4 = inlined_call_operand.vmem [shape: f32[1,384], index: 4, kind: input, shape index: {}]
  %s5 = inlined_call_operand.hbm [shape: bf16[128,384], index: 5, kind: input, shape index: {}]
  %s6 = inlined_call_operand.hbm [shape: bf16[128,384], index: 6, kind: input, shape index: {}]
  %s7 = inlined_call_operand.vmem [shape: f32[1,384], index: 7, kind: input, shape index: {}]
  %s8 = inlined_call_operand.vmem [shape: f32[1,384], index: 8, kind: input, shape index: {}]
  %s9 = inlined_call_operand.vmem [shape: bf16[128,128], index: 9, kind: input, shape index: {}]
  %s10 = inlined_call_operand.vmem [shape: f32[1,128], index: 10, kind: input, shape index: {}]
  %s11 = inlined_call_operand.vmem [shape: f32[8,128], index: 11, kind: output, shape index: {}]
  %s12 = sld [smem:[#allocation0]]
  $region70: #{gru_model_forward.1} parent=0
    _
  %s14 = ssub.s32 1, %s12
  %s15 = scalar_select 0, %s14, %s12
  $region1: #{gru_model_forward.1} parent=0
    #allocation4 [shape = 'u8[98304]{0}', space=vmem, size = 0x18000, scoped, tag = 'input window, operand 1, single buffered']
    #allocation5 [shape = 's32[1]{0}', space=sflag, size = 0x4, scoped, tag = 'scoped memory for gru_model_forward.1']
    #allocation6 [shape = 'u8[98304]{0}', space=vmem, size = 0x18000, scoped, tag = 'input window, operand 2, single buffered']
    #allocation7 [shape = 's32[1]{0}', space=sflag, size = 0x4, scoped, tag = 'scoped memory for gru_model_forward.1']
    #allocation8 [shape = 'u8[98304]{0}', space=vmem, size = 0x18000, scoped, tag = 'input window, operand 5, single buffered']
    #allocation9 [shape = 'u8[98304]{0}', space=vmem, size = 0x18000, scoped, tag = 'input window, operand 6, single buffered']
    #allocation10 [shape = 's32[1]{0}', space=sflag, size = 0x4, scoped, tag = 'scoped memory for gru_model_forward.1']
    %16 = vsyncpa [#allocation5], 0
    %17 = vsyncpa [#allocation7], 0
    %18 = vsyncpa [#allocation10], 0
    // Predicated region
    $region2: #{gru_model_forward.1} parent=1 // pred_check
      _
    $region3: #{gru_model_forward.1} parent=1 // pred_check_branch
      %20 = sbr.rel (0) target = $region5
    $region4: #{gru_model_forward.1} parent=1 // pred_region
      _
    $region5: #{gru_model_forward.1} parent=1 // pred_fallthru
      _
    // Predicated region
    $region6: #{gru_model_forward.1} parent=1 // pred_check
      _
    $region7: #{gru_model_forward.1} parent=1 // pred_check_branch
      %22 = sbr.rel (0) target = $region9
    $region8: #{gru_model_forward.1} parent=1 // pred_region
      %24 = vsyncadd [#allocation5], 0
      %s25 = sshll.u32 %s1, 4
      %s26 = int_to_ptr.hbm [resolvable:$true] %s25
      %s27 = sshll.u32 [#allocation4], 4
      %s28 = int_to_ptr.vmem [resolvable:$true] %s27
      %33 = dma.hbm_to_vmem [thread:$0]  %s26, 3072, %s28, [#allocation5], 192, 192, 12
    $region9: #{gru_model_forward.1} parent=1 // pred_fallthru
      _
    // Predicated region
    $region10: #{gru_model_forward.1} parent=1 // pred_check
      _
    $region11: #{gru_model_forward.1} parent=1 // pred_check_branch
      %35 = sbr.rel (0) target = $region13
    $region12: #{gru_model_forward.1} parent=1 // pred_region
      %37 = vsyncadd [#allocation7], 0
      %s38 = sshll.u32 %s2, 4
      %s39 = int_to_ptr.hbm [resolvable:$true] %s38
      %s40 = sshll.u32 [#allocation6], 4
      %s41 = int_to_ptr.vmem [resolvable:$true] %s40
      %46 = dma.hbm_to_vmem [thread:$0]  %s39, 3072, %s41, [#allocation7], 192, 192, 12
    $region13: #{gru_model_forward.1} parent=1 // pred_fallthru
      _
    // Predicated region
    $region14: #{gru_model_forward.1} parent=1 // pred_check
      _
    $region15: #{gru_model_forward.1} parent=1 // pred_check_branch
      %48 = sbr.rel (0) target = $region17
    $region16: #{gru_model_forward.1} parent=1 // pred_region
      _
    $region17: #{gru_model_forward.1} parent=1 // pred_fallthru
      _
    // Predicated region
    $region18: #{gru_model_forward.1} parent=1 // pred_check
      _
    $region19: #{gru_model_forward.1} parent=1 // pred_check_branch
      %50 = sbr.rel (0) target = $region21
    $region20: #{gru_model_forward.1} parent=1 // pred_region
      _
    $region21: #{gru_model_forward.1} parent=1 // pred_fallthru
      _
    // Predicated region
    $region22: #{gru_model_forward.1} parent=1 // pred_check
      _
    $region23: #{gru_model_forward.1} parent=1 // pred_check_branch
      %52 = sbr.rel (0) target = $region25
    $region24: #{gru_model_forward.1} parent=1 // pred_region
      %54 = vsyncadd [#allocation7], 0
      %s55 = sshll.u32 %s5, 4
      %s56 = int_to_ptr.hbm [resolvable:$true] %s55
      %s57 = sshll.u32 [#allocation8], 4
      %s58 = int_to_ptr.vmem [resolvable:$true] %s57
      %63 = dma.hbm_to_vmem [thread:$0]  %s56, 3072, %s58, [#allocation7], 192, 192, 12
    $region25: #{gru_model_forward.1} parent=1 // pred_fallthru
      _
    // Predicated region
    $region26: #{gru_model_forward.1} parent=1 // pred_check
      _
    $region27: #{gru_model_forward.1} parent=1 // pred_check_branch
      %65 = sbr.rel (0) target = $region29
    $region28: #{gru_model_forward.1} parent=1 // pred_region
      %67 = vsyncadd [#allocation10], 0
      %s68 = sshll.u32 %s6, 4
      %s69 = int_to_ptr.hbm [resolvable:$true] %s68
      %s70 = sshll.u32 [#allocation9], 4
      %s71 = int_to_ptr.vmem [resolvable:$true] %s70
      %76 = dma.hbm_to_vmem [thread:$0]  %s69, 3072, %s71, [#allocation10], 192, 192, 12
    $region29: #{gru_model_forward.1} parent=1 // pred_fallthru
      _
    // Predicated region
    $region30: #{gru_model_forward.1} parent=1 // pred_check
      _
    $region31: #{gru_model_forward.1} parent=1 // pred_check_branch
      %78 = sbr.rel (0) target = $region33
    $region32: #{gru_model_forward.1} parent=1 // pred_region
      _
    $region33: #{gru_model_forward.1} parent=1 // pred_fallthru
      _
    // Predicated region
    $region34: #{gru_model_forward.1} parent=1 // pred_check
      _
    $region35: #{gru_model_forward.1} parent=1 // pred_check_branch
      %80 = sbr.rel (0) target = $region37
    $region36: #{gru_model_forward.1} parent=1 // pred_region
      _
    $region37: #{gru_model_forward.1} parent=1 // pred_fallthru
      _
    // Predicated region
    $region38: #{gru_model_forward.1} parent=1 // pred_check
      _
    $region39: #{gru_model_forward.1} parent=1 // pred_check_branch
      %82 = sbr.rel (0) target = $region41
    $region40: #{gru_model_forward.1} parent=1 // pred_region
      _
    $region41: #{gru_model_forward.1} parent=1 // pred_fallthru
      _
    // Predicated region
    $region42: #{gru_model_forward.1} parent=1 // pred_check
      _
    $region43: #{gru_model_forward.1} parent=1 // pred_check_branch
      %84 = sbr.rel (0) target = $region45
    $region44: #{gru_model_forward.1} parent=1 // pred_region
      _
    $region45: #{gru_model_forward.1} parent=1 // pred_fallthru
      _
    // Predicated region
    $region46: #{gru_model_forward.1} parent=1 // pred_check
      _
    $region47: #{gru_model_forward.1} parent=1 // pred_check_branch
      %86 = sbr.rel (0) target = $region49
    $region48: #{gru_model_forward.1} parent=1 // pred_region
      %88 = dma.done [#allocation5], 3072
    $region49: #{gru_model_forward.1} parent=1 // pred_fallthru
      _
    // Predicated region
    $region50: #{gru_model_forward.1} parent=1 // pred_check
      _
    $region51: #{gru_model_forward.1} parent=1 // pred_check_branch
      %90 = sbr.rel (0) target = $region53
    $region52: #{gru_model_forward.1} parent=1 // pred_region
      %92 = dma.done [#allocation7], 3072
    $region53: #{gru_model_forward.1} parent=1 // pred_fallthru
      _
    // Predicated region
    $region54: #{gru_model_forward.1} parent=1 // pred_check
      _
    $region55: #{gru_model_forward.1} parent=1 // pred_check_branch
      %94 = sbr.rel (0) target = $region57
    $region56: #{gru_model_forward.1} parent=1 // pred_region
      %96 = dma.done [#allocation7], 3072
    $region57: #{gru_model_forward.1} parent=1 // pred_fallthru
      _
    // Predicated region
    $region58: #{gru_model_forward.1} parent=1 // pred_check
      _
    $region59: #{gru_model_forward.1} parent=1 // pred_check_branch
      %98 = sbr.rel (0) target = $region61
    $region60: #{gru_model_forward.1} parent=1 // pred_region
      %100 = dma.done [#allocation10], 3072
    $region61: #{gru_model_forward.1} parent=1 // pred_fallthru
      _
    %v102 = vld [vmem:[%s0] sm:$0xff]
    %v103 = vld [vmem:[%s0 + $0x8] sm:$0xff]
    %v104 = vld [vmem:[%s0 + $0x10] sm:$0xff]
    %v105 = vld [vmem:[%s0 + $0x18] sm:$0xff]
    %v106 = vld [vmem:[%s0 + $0x20] sm:$0xff]
    %v107 = vld [vmem:[%s0 + $0x28] sm:$0xff]
    %v108 = vld [vmem:[%s0 + $0x30] sm:$0xff]
    %v109 = vld [vmem:[%s0 + $0x38] sm:$0xff]
    %v110 = vpack.c.bf16 %v103, %v102
    %v111 = vpack.c.bf16 %v105, %v104
    %v112 = vpack.c.bf16 %v107, %v106
    %v113 = vpack.c.bf16 %v109, %v108
    %v114 = vld [vmem:[#allocation4] sm:$0xff]
    %v115 = vld [vmem:[#allocation4 + $0x8] sm:$0xf]
    %v116 = vld [vmem:[#allocation4 + $0xc] sm:$0xff]
    %v117 = vld [vmem:[#allocation4 + $0x14] sm:$0xf]
    %v118 = vld [vmem:[#allocation4 + $0x18] sm:$0xff]
    %v119 = vld [vmem:[#allocation4 + $0x20] sm:$0xf]
    %v120 = vld [vmem:[#allocation4 + $0x24] sm:$0xff]
    %v121 = vld [vmem:[#allocation4 + $0x2c] sm:$0xf]
    %v122 = vld [vmem:[#allocation4 + $0x30] sm:$0xff]
    %v123 = vld [vmem:[#allocation4 + $0x38] sm:$0xf]
    %v124 = vld [vmem:[#allocation4 + $0x3c] sm:$0xff]
    %v125 = vld [vmem:[#allocation4 + $0x44] sm:$0xf]
    %v126 = vld [vmem:[#allocation4 + $0x48] sm:$0xff]
    %v127 = vld [vmem:[#allocation4 + $0x50] sm:$0xf]
    %v128 = vld [vmem:[#allocation4 + $0x54] sm:$0xff]
    %v129 = vld [vmem:[#allocation4 + $0x5c] sm:$0xf]
    %v130 = vld [vmem:[#allocation4 + $0x60] sm:$0xff]
    %v131 = vld [vmem:[#allocation4 + $0x68] sm:$0xf]
    %v132 = vld [vmem:[#allocation4 + $0x6c] sm:$0xff]
    %v133 = vld [vmem:[#allocation4 + $0x74] sm:$0xf]
    %v134 = vld [vmem:[#allocation4 + $0x78] sm:$0xff]
    %v135 = vld [vmem:[#allocation4 + $0x80] sm:$0xf]
    %v136 = vld [vmem:[#allocation4 + $0x84] sm:$0xff]
    %v137 = vld [vmem:[#allocation4 + $0x8c] sm:$0xf]
    %v138 = vld [vmem:[#allocation4 + $0x90] sm:$0xff]
    %v139 = vld [vmem:[#allocation4 + $0x98] sm:$0xf]
    %v140 = vld [vmem:[#allocation4 + $0x9c] sm:$0xff]
    %v141 = vld [vmem:[#allocation4 + $0xa4] sm:$0xf]
    %v142 = vld [vmem:[#allocation4 + $0xa8] sm:$0xff]
    %v143 = vld [vmem:[#allocation4 + $0xb0] sm:$0xf]
    %v144 = vld [vmem:[#allocation4 + $0xb4] sm:$0xff]
    %v145 = vld [vmem:[#allocation4 + $0xbc] sm:$0xf]
    %v146 = vld [vmem:[%s3] sm:$0x7]
    %v148 = vperm.slane %v146, 0
    %v149 = vperm.slane %v146, 1
    %v150 = vperm.slane %v146, 2
    %v186 = vunpack.c.l.b16 %v114
    %v187 = vunpack.c.h.b16 %v114
    %v188 = vunpack.c.l.b16 %v115
    %v189 = vunpack.c.l.b16 %v116
    %v190 = vunpack.c.h.b16 %v116
    %v191 = vunpack.c.l.b16 %v117
    %v192 = vunpack.c.l.b16 %v118
    %v193 = vunpack.c.h.b16 %v118
    %v194 = vunpack.c.l.b16 %v119
    %v195 = vunpack.c.l.b16 %v120
    %v196 = vunpack.c.h.b16 %v120
    %v197 = vunpack.c.l.b16 %v121
    %v198 = vunpack.c.l.b16 %v122
    %v199 = vunpack.c.h.b16 %v122
    %v200 = vunpack.c.l.b16 %v123
    %v201 = vunpack.c.l.b16 %v124
    %v202 = vunpack.c.h.b16 %v124
    %v203 = vunpack.c.l.b16 %v125
    %v204 = vunpack.c.l.b16 %v126
    %v205 = vunpack.c.h.b16 %v126
    %v206 = vunpack.c.l.b16 %v127
    %v207 = vunpack.c.l.b16 %v128
    %v208 = vunpack.c.h.b16 %v128
    %v209 = vunpack.c.l.b16 %v129
    %v210 = vunpack.c.l.b16 %v130
    %v211 = vunpack.c.h.b16 %v130
    %v212 = vunpack.c.l.b16 %v131
    %v213 = vunpack.c.l.b16 %v132
    %v214 = vunpack.c.h.b16 %v132
    %v215 = vunpack.c.l.b16 %v133
    %v216 = vunpack.c.l.b16 %v134
    %v217 = vunpack.c.h.b16 %v134
    %v218 = vunpack.c.l.b16 %v135
    %v219 = vunpack.c.l.b16 %v136
    %v220 = vunpack.c.h.b16 %v136
    %v221 = vunpack.c.l.b16 %v137
    %v222 = vunpack.c.l.b16 %v138
    %v223 = vunpack.c.h.b16 %v138
    %v224 = vunpack.c.l.b16 %v139
    %v225 = vunpack.c.l.b16 %v140
    %v226 = vunpack.c.h.b16 %v140
    %v227 = vunpack.c.l.b16 %v141
    %v228 = vunpack.c.l.b16 %v142
    %v229 = vunpack.c.h.b16 %v142
    %v230 = vunpack.c.l.b16 %v143
    %v231 = vunpack.c.l.b16 %v144
    %v232 = vunpack.c.h.b16 %v144
    %v233 = vunpack.c.l.b16 %v145
    %v234 = vpack.c.b16 %v189, %v186
    %v235 = vpack.c.b16 %v190, %v187
    %v236 = vpack.c.b16 %v191, %v188
    %v237 = vpack.c.b16 %v195, %v192
    %v238 = vpack.c.b16 %v196, %v193
    %v239 = vpack.c.b16 %v197, %v194
    %v240 = vpack.c.b16 %v201, %v198
    %v241 = vpack.c.b16 %v202, %v199
    %v242 = vpack.c.b16 %v203, %v200
    %v243 = vpack.c.b16 %v207, %v204
    %v244 = vpack.c.b16 %v208, %v205
    %v245 = vpack.c.b16 %v209, %v206
    %v246 = vpack.c.b16 %v213, %v210
    %v247 = vpack.c.b16 %v214, %v211
    %v248 = vpack.c.b16 %v215, %v212
    %v249 = vpack.c.b16 %v219, %v216
    %v250 = vpack.c.b16 %v220, %v217
    %v251 = vpack.c.b16 %v221, %v218
    %v252 = vpack.c.b16 %v225, %v222
    %v253 = vpack.c.b16 %v226, %v223
    %v254 = vpack.c.b16 %v227, %v224
    %v255 = vpack.c.b16 %v231, %v228
    %v256 = vpack.c.b16 %v232, %v229
    %v257 = vpack.c.b16 %v233, %v230
    %282 = vmatpush.bf16.msra.mxu0 %v255
    %283 = vmatpush.bf16.msra.mxu0 %v252
    %284 = vmatpush.bf16.msra.mxu0 %v249
    %285 = vmatpush.bf16.msra.mxu0 %v246
    %286 = vmatpush.bf16.msra.mxu0 %v243
    %287 = vmatpush.bf16.msra.mxu0 %v240
    %288 = vmatpush.bf16.msra.mxu0 %v237
    %289 = vmatpush.bf16.msra.mxu0 %v234
    %290 = vmatmul.bf16.gmra.mxu0 %v110
    %v291 = vpop.f32.mrf.mxu0
    %v292 = vadd.f32 %v148, %v291
    %v293 = vpop.f32.mrf.mxu0
    %v294 = vadd.f32 %v148, %v293
    %295 = vmatmul.bf16.gmra.mxu0 %v111
    %v296 = vpop.f32.mrf.mxu0
    %v297 = vadd.f32 %v148, %v296
    %v298 = vpop.f32.mrf.mxu0
    %v299 = vadd.f32 %v148, %v298
    %300 = vmatmul.bf16.gmra.mxu0 %v112
    %v301 = vpop.f32.mrf.mxu0
    %v302 = vadd.f32 %v148, %v301
    %v303 = vpop.f32.mrf.mxu0
    %v304 = vadd.f32 %v148, %v303
    %305 = vmatmul.bf16.gmra.mxu0 %v113
    %v306 = vpop.f32.mrf.mxu0
    %v307 = vadd.f32 %v148, %v306
    %v308 = vpop.f32.mrf.mxu0
    %v309 = vadd.f32 %v148, %v308
    %310 = vdwg.mxu0
    %311 = vmatpush.bf16.msra.mxu0 %v256
    %312 = vmatpush.bf16.msra.mxu0 %v253
    %313 = vmatpush.bf16.msra.mxu0 %v250
    %314 = vmatpush.bf16.msra.mxu0 %v247
    %315 = vmatpush.bf16.msra.mxu0 %v244
    %316 = vmatpush.bf16.msra.mxu0 %v241
    %317 = vmatpush.bf16.msra.mxu0 %v238
    %318 = vmatpush.bf16.msra.mxu0 %v235
    %319 = vmatmul.bf16.gmra.mxu0 %v110
    %v320 = vpop.f32.mrf.mxu0
    %v321 = vadd.f32 %v149, %v320
    %v322 = vpop.f32.mrf.mxu0
    %v323 = vadd.f32 %v149, %v322
    %324 = vmatmul.bf16.gmra.mxu0 %v111
    %v325 = vpop.f32.mrf.mxu0
    %v326 = vadd.f32 %v149, %v325
    %v327 = vpop.f32.mrf.mxu0
    %v328 = vadd.f32 %v149, %v327
    %329 = vmatmul.bf16.gmra.mxu0 %v112
    %v330 = vpop.f32.mrf.mxu0
    %v331 = vadd.f32 %v149, %v330
    %v332 = vpop.f32.mrf.mxu0
    %v333 = vadd.f32 %v149, %v332
    %334 = vmatmul.bf16.gmra.mxu0 %v113
    %v335 = vpop.f32.mrf.mxu0
    %v336 = vadd.f32 %v149, %v335
    %v337 = vpop.f32.mrf.mxu0
    %v338 = vadd.f32 %v149, %v337
    %339 = vdwg.mxu0
    %340 = vmatpush.bf16.msra.mxu0 %v257
    %341 = vmatpush.bf16.msra.mxu0 %v254
    %342 = vmatpush.bf16.msra.mxu0 %v251
    %343 = vmatpush.bf16.msra.mxu0 %v248
    %344 = vmatpush.bf16.msra.mxu0 %v245
    %345 = vmatpush.bf16.msra.mxu0 %v242
    %346 = vmatpush.bf16.msra.mxu0 %v239
    %347 = vmatpush.bf16.msra.mxu0 %v236
    %348 = vmatmul.bf16.gmra.mxu0 %v110
    %v349 = vpop.f32.mrf.mxu0
    %v350 = vadd.f32 %v150, %v349
    %v351 = vpop.f32.mrf.mxu0
    %v352 = vadd.f32 %v150, %v351
    %353 = vmatmul.bf16.gmra.mxu0 %v111
    %v354 = vpop.f32.mrf.mxu0
    %v355 = vadd.f32 %v150, %v354
    %v356 = vpop.f32.mrf.mxu0
    %v357 = vadd.f32 %v150, %v356
    %358 = vmatmul.bf16.gmra.mxu0 %v112
    %v359 = vpop.f32.mrf.mxu0
    %v360 = vadd.f32 %v150, %v359
    %v361 = vpop.f32.mrf.mxu0
    %v362 = vadd.f32 %v150, %v361
    %363 = vmatmul.bf16.gmra.mxu0 %v113
    %v364 = vpop.f32.mrf.mxu0
    %v365 = vadd.f32 %v150, %v364
    %v366 = vpop.f32.mrf.mxu0
    %v367 = vadd.f32 %v150, %v366
    %368 = vdwg.mxu0
    %369 = vst [vmem:[#allocation2] sm:$0xff] %v292
    %370 = vst [vmem:[#allocation2 + $0x8] sm:$0xff] %v321
    %371 = vst [vmem:[#allocation2 + $0x10] sm:$0xff] %v350
    %372 = vst [vmem:[#allocation2 + $0x18] sm:$0xff] %v294
    %373 = vst [vmem:[#allocation2 + $0x20] sm:$0xff] %v323
    %374 = vst [vmem:[#allocation2 + $0x28] sm:$0xff] %v352
    %375 = vst [vmem:[#allocation2 + $0x30] sm:$0xff] %v297
    %376 = vst [vmem:[#allocation2 + $0x38] sm:$0xff] %v326
    %377 = vst [vmem:[#allocation2 + $0x40] sm:$0xff] %v355
    %378 = vst [vmem:[#allocation2 + $0x48] sm:$0xff] %v299
    %379 = vst [vmem:[#allocation2 + $0x50] sm:$0xff] %v328
    %380 = vst [vmem:[#allocation2 + $0x58] sm:$0xff] %v357
    %381 = vst [vmem:[#allocation2 + $0x60] sm:$0xff] %v302
    %382 = vst [vmem:[#allocation2 + $0x68] sm:$0xff] %v331
    %383 = vst [vmem:[#allocation2 + $0x70] sm:$0xff] %v360
    %384 = vst [vmem:[#allocation2 + $0x78] sm:$0xff] %v304
    %385 = vst [vmem:[#allocation2 + $0x80] sm:$0xff] %v333
    %386 = vst [vmem:[#allocation2 + $0x88] sm:$0xff] %v362
    %387 = vst [vmem:[#allocation2 + $0x90] sm:$0xff] %v307
    %388 = vst [vmem:[#allocation2 + $0x98] sm:$0xff] %v336
    %389 = vst [vmem:[#allocation2 + $0xa0] sm:$0xff] %v365
    %390 = vst [vmem:[#allocation2 + $0xa8] sm:$0xff] %v309
    %391 = vst [vmem:[#allocation2 + $0xb0] sm:$0xff] %v338
    %392 = vst [vmem:[#allocation2 + $0xb8] sm:$0xff] %v367
    %v393 = vld [vmem:[#allocation6] sm:$0xff]
    %v394 = vld [vmem:[#allocation6 + $0x8] sm:$0xf]
    %v395 = vld [vmem:[#allocation6 + $0xc] sm:$0xff]
    %v396 = vld [vmem:[#allocation6 + $0x14] sm:$0xf]
    %v397 = vld [vmem:[#allocation6 + $0x18] sm:$0xff]
    %v398 = vld [vmem:[#allocation6 + $0x20] sm:$0xf]
    %v399 = vld [vmem:[#allocation6 + $0x24] sm:$0xff]
    %v400 = vld [vmem:[#allocation6 + $0x2c] sm:$0xf]
    %v401 = vld [vmem:[#allocation6 + $0x30] sm:$0xff]
    %v402 = vld [vmem:[#allocation6 + $0x38] sm:$0xf]
    %v403 = vld [vmem:[#allocation6 + $0x3c] sm:$0xff]
    %v404 = vld [vmem:[#allocation6 + $0x44] sm:$0xf]
    %v405 = vld [vmem:[#allocation6 + $0x48] sm:$0xff]
    %v406 = vld [vmem:[#allocation6 + $0x50] sm:$0xf]
    %v407 = vld [vmem:[#allocation6 + $0x54] sm:$0xff]
    %v408 = vld [vmem:[#allocation6 + $0x5c] sm:$0xf]
    %v409 = vld [vmem:[#allocation6 + $0x60] sm:$0xff]
    %v410 = vld [vmem:[#allocation6 + $0x68] sm:$0xf]
    %v411 = vld [vmem:[#allocation6 + $0x6c] sm:$0xff]
    %v412 = vld [vmem:[#allocation6 + $0x74] sm:$0xf]
    %v413 = vld [vmem:[#allocation6 + $0x78] sm:$0xff]
    %v414 = vld [vmem:[#allocation6 + $0x80] sm:$0xf]
    %v415 = vld [vmem:[#allocation6 + $0x84] sm:$0xff]
    %v416 = vld [vmem:[#allocation6 + $0x8c] sm:$0xf]
    %v417 = vld [vmem:[#allocation6 + $0x90] sm:$0xff]
    %v418 = vld [vmem:[#allocation6 + $0x98] sm:$0xf]
    %v419 = vld [vmem:[#allocation6 + $0x9c] sm:$0xff]
    %v420 = vld [vmem:[#allocation6 + $0xa4] sm:$0xf]
    %v421 = vld [vmem:[#allocation6 + $0xa8] sm:$0xff]
    %v422 = vld [vmem:[#allocation6 + $0xb0] sm:$0xf]
    %v423 = vld [vmem:[#allocation6 + $0xb4] sm:$0xff]
    %v424 = vld [vmem:[#allocation6 + $0xbc] sm:$0xf]
    %v425 = vld [vmem:[%s4] sm:$0x7]
    %v426 = vld [vmem:[#allocation2] sm:$0xff]
    %v427 = vld [vmem:[#allocation2 + $0x8] sm:$0xff]
    %v428 = vld [vmem:[#allocation2 + $0x10] sm:$0xff]
    %v430 = vperm.slane %v425, 0
    %v431 = vperm.slane %v425, 1
    %v432 = vperm.slane %v425, 2
    %v468 = vunpack.c.l.b16 %v393
    %v469 = vunpack.c.h.b16 %v393
    %v470 = vunpack.c.l.b16 %v394
    %v471 = vunpack.c.l.b16 %v395
    %v472 = vunpack.c.h.b16 %v395
    %v473 = vunpack.c.l.b16 %v396
    %v474 = vunpack.c.l.b16 %v397
    %v475 = vunpack.c.h.b16 %v397
    %v476 = vunpack.c.l.b16 %v398
    %v477 = vunpack.c.l.b16 %v399
    %v478 = vunpack.c.h.b16 %v399
    %v479 = vunpack.c.l.b16 %v400
    %v480 = vunpack.c.l.b16 %v401
    %v481 = vunpack.c.h.b16 %v401
    %v482 = vunpack.c.l.b16 %v402
    %v483 = vunpack.c.l.b16 %v403
    %v484 = vunpack.c.h.b16 %v403
    %v485 = vunpack.c.l.b16 %v404
    %v486 = vunpack.c.l.b16 %v405
    %v487 = vunpack.c.h.b16 %v405
    %v488 = vunpack.c.l.b16 %v406
    %v489 = vunpack.c.l.b16 %v407
    %v490 = vunpack.c.h.b16 %v407
    %v491 = vunpack.c.l.b16 %v408
    %v492 = vunpack.c.l.b16 %v409
    %v493 = vunpack.c.h.b16 %v409
    %v494 = vunpack.c.l.b16 %v410
    %v495 = vunpack.c.l.b16 %v411
    %v496 = vunpack.c.h.b16 %v411
    %v497 = vunpack.c.l.b16 %v412
    %v498 = vunpack.c.l.b16 %v413
    %v499 = vunpack.c.h.b16 %v413
    %v500 = vunpack.c.l.b16 %v414
    %v501 = vunpack.c.l.b16 %v415
    %v502 = vunpack.c.h.b16 %v415
    %v503 = vunpack.c.l.b16 %v416
    %v504 = vunpack.c.l.b16 %v417
    %v505 = vunpack.c.h.b16 %v417
    %v506 = vunpack.c.l.b16 %v418
    %v507 = vunpack.c.l.b16 %v419
    %v508 = vunpack.c.h.b16 %v419
    %v509 = vunpack.c.l.b16 %v420
    %v510 = vunpack.c.l.b16 %v421
    %v511 = vunpack.c.h.b16 %v421
    %v512 = vunpack.c.l.b16 %v422
    %v513 = vunpack.c.l.b16 %v423
    %v514 = vunpack.c.h.b16 %v423
    %v515 = vunpack.c.l.b16 %v424
    %v516 = vpack.c.b16 %v471, %v468
    %v517 = vpack.c.b16 %v472, %v469
    %v518 = vpack.c.b16 %v473, %v470
    %v519 = vpack.c.b16 %v477, %v474
    %v520 = vpack.c.b16 %v478, %v475
    %v521 = vpack.c.b16 %v479, %v476
    %v522 = vpack.c.b16 %v483, %v480
    %v523 = vpack.c.b16 %v484, %v481
    %v524 = vpack.c.b16 %v485, %v482
    %v525 = vpack.c.b16 %v489, %v486
    %v526 = vpack.c.b16 %v490, %v487
    %v527 = vpack.c.b16 %v491, %v488
    %v528 = vpack.c.b16 %v495, %v492
    %v529 = vpack.c.b16 %v496, %v493
    %v530 = vpack.c.b16 %v497, %v494
    %v531 = vpack.c.b16 %v501, %v498
    %v532 = vpack.c.b16 %v502, %v499
    %v533 = vpack.c.b16 %v503, %v500
    %v534 = vpack.c.b16 %v507, %v504
    %v535 = vpack.c.b16 %v508, %v505
    %v536 = vpack.c.b16 %v509, %v506
    %v537 = vpack.c.b16 %v513, %v510
    %v538 = vpack.c.b16 %v514, %v511
    %v539 = vpack.c.b16 %v515, %v512
    %564 = vmatpush.bf16.msra.mxu0 %v537
    %565 = vmatpush.bf16.msra.mxu0 %v534
    %566 = vmatpush.bf16.msra.mxu0 %v531
    %567 = vmatpush.bf16.msra.mxu0 %v528
    %568 = vmatpush.bf16.msra.mxu0 %v525
    %569 = vmatpush.bf16.msra.mxu0 %v522
    %570 = vmatpush.bf16.msra.mxu0 %v519
    %571 = vmatpush.bf16.msra.mxu0 %v516
    %572 = vmatmul.bf16.gmra.mxu0 0
    %v573 = vpop.f32.mrf.mxu0
    %v574 = vadd.f32 %v430, %v573
    %v575 = vpop.f32.mrf.mxu0
    %576 = vdwg.mxu0
    %577 = vmatpush.bf16.msra.mxu0 %v538
    %578 = vmatpush.bf16.msra.mxu0 %v535
    %579 = vmatpush.bf16.msra.mxu0 %v532
    %580 = vmatpush.bf16.msra.mxu0 %v529
    %581 = vmatpush.bf16.msra.mxu0 %v526
    %582 = vmatpush.bf16.msra.mxu0 %v523
    %583 = vmatpush.bf16.msra.mxu0 %v520
    %584 = vmatpush.bf16.msra.mxu0 %v517
    %585 = vmatmul.bf16.gmra.mxu0 0
    %v586 = vpop.f32.mrf.mxu0
    %v587 = vadd.f32 %v431, %v586
    %v588 = vpop.f32.mrf.mxu0
    %589 = vdwg.mxu0
    %590 = vmatpush.bf16.msra.mxu0 %v539
    %591 = vmatpush.bf16.msra.mxu0 %v536
    %592 = vmatpush.bf16.msra.mxu0 %v533
    %593 = vmatpush.bf16.msra.mxu0 %v530
    %594 = vmatpush.bf16.msra.mxu0 %v527
    %595 = vmatpush.bf16.msra.mxu0 %v524
    %596 = vmatpush.bf16.msra.mxu0 %v521
    %597 = vmatpush.bf16.msra.mxu0 %v518
    %598 = vmatmul.bf16.gmra.mxu0 0
    %v599 = vpop.f32.mrf.mxu0
    %v600 = vadd.f32 %v432, %v599
    %v601 = vpop.f32.mrf.mxu0
    %602 = vdwg.mxu0
    %v603 = vadd.f32 %v426, %v574
    %v604 = vxor.u32 %v603, 2147483648
    %v605 = vmul.f32 %v604, 1.442695
    %v606 = vpow.pop %v605
    %v607 = vadd.f32 %v606, 1.0
    %v608 = vrcp.pop %v607
    %v609 = vmul.f32 %v607, %v608
    %v610 = vsub.f32 1.0, %v609
    %v611 = vmul.f32 %v608, %v610
    %v612 = vadd.f32 %v608, %v611
    %vm613 = vweird.f32 %v607
    %vm614 = vweird.f32 %v608
    %vm615 = vmor %vm613, %vm614
    %v616 = vsel %vm615, %v608, %v612
    %v617 = vand.u32 2147483647, %v607
    %vm618 = vcmp.eq.f32.partialorder %v617, 8.507059e+37
    %v619 = vand.u32 %v607, 2147483648
    %v620 = vor.u32 1.1754944e-38, %v619
    %v621 = vsel %vm618, %v620, %v616
    %v622 = vmul.f32 1.0, %v621
    %v623 = vadd.f32 %v427, %v587
    %v624 = vxor.u32 %v623, 2147483648
    %v625 = vmul.f32 %v624, 1.442695
    %v626 = vpow.pop %v625
    %v627 = vadd.f32 %v626, 1.0
    %v628 = vrcp.pop %v627
    %v629 = vmul.f32 %v627, %v628
    %v630 = vsub.f32 1.0, %v629
    %v631 = vmul.f32 %v628, %v630
    %v632 = vadd.f32 %v628, %v631
    %vm633 = vweird.f32 %v627
    %vm634 = vweird.f32 %v628
    %vm635 = vmor %vm633, %vm634
    %v636 = vsel %vm635, %v628, %v632
    %v637 = vand.u32 2147483647, %v627
    %vm638 = vcmp.eq.f32.partialorder %v637, 8.507059e+37
    %v639 = vand.u32 %v627, 2147483648
    %v640 = vor.u32 1.1754944e-38, %v639
    %v641 = vsel %vm638, %v640, %v636
    %v642 = vmul.f32 1.0, %v641
    %v643 = vmul.f32 %v622, %v600
    %v644 = vadd.f32 %v428, %v643
    %v645 = vtanh.pop %v644
    %v646 = vsub.f32 0.0, %v645
    %v647 = vmul.f32 %v642, %v646
    %v648 = vadd.f32 %v645, %v647
    %649 = vst [vmem:[#allocation3] sm:$0xff] %v648
    %v650 = vld [vmem:[#allocation2 + $0x18] sm:$0xff]
    %v651 = vld [vmem:[#allocation2 + $0x20] sm:$0xff]
    %v652 = vld [vmem:[#allocation2 + $0x28] sm:$0xff]
    %v653 = vpack.c.bf16 %v648, %v648
    %654 = vmatpush.bf16.msra.mxu0 %v537
    %655 = vmatpush.bf16.msra.mxu0 %v534
    %656 = vmatpush.bf16.msra.mxu0 %v531
    %657 = vmatpush.bf16.msra.mxu0 %v528
    %658 = vmatpush.bf16.msra.mxu0 %v525
    %659 = vmatpush.bf16.msra.mxu0 %v522
    %660 = vmatpush.bf16.msra.mxu0 %v519
    %661 = vmatpush.bf16.msra.mxu0 %v516
    %662 = vmatmul.bf16.gmra.mxu0 %v653
    %v663 = vpop.f32.mrf.mxu0
    %v664 = vadd.f32 %v430, %v663
    %v665 = vpop.f32.mrf.mxu0
    %666 = vdwg.mxu0
    %667 = vmatpush.bf16.msra.mxu0 %v538
    %668 = vmatpush.bf16.msra.mxu0 %v535
    %669 = vmatpush.bf16.msra.mxu0 %v532
    %670 = vmatpush.bf16.msra.mxu0 %v529
    %671 = vmatpush.bf16.msra.mxu0 %v526
    %672 = vmatpush.bf16.msra.mxu0 %v523
    %673 = vmatpush.bf16.msra.mxu0 %v520
    %674 = vmatpush.bf16.msra.mxu0 %v517
    %675 = vmatmul.bf16.gmra.mxu0 %v653
    %v676 = vpop.f32.mrf.mxu0
    %v677 = vadd.f32 %v431, %v676
    %v678 = vpop.f32.mrf.mxu0
    %679 = vdwg.mxu0
    %680 = vmatpush.bf16.msra.mxu0 %v539
    %681 = vmatpush.bf16.msra.mxu0 %v536
    %682 = vmatpush.bf16.msra.mxu0 %v533
    %683 = vmatpush.bf16.msra.mxu0 %v530
    %684 = vmatpush.bf16.msra.mxu0 %v527
    %685 = vmatpush.bf16.msra.mxu0 %v524
    %686 = vmatpush.bf16.msra.mxu0 %v521
    %687 = vmatpush.bf16.msra.mxu0 %v518
    %688 = vmatmul.bf16.gmra.mxu0 %v653
    %v689 = vpop.f32.mrf.mxu0
    %v690 = vadd.f32 %v432, %v689
    %v691 = vpop.f32.mrf.mxu0
    %692 = vdwg.mxu0
    %v693 = vadd.f32 %v650, %v664
    %v694 = vxor.u32 %v693, 2147483648
    %v695 = vmul.f32 %v694, 1.442695
    %v696 = vpow.pop %v695
    %v697 = vadd.f32 %v696, 1.0
    %v698 = vrcp.pop %v697
    %v699 = vmul.f32 %v697, %v698
    %v700 = vsub.f32 1.0, %v699
    %v701 = vmul.f32 %v698, %v700
    %v702 = vadd.f32 %v698, %v701
    %vm703 = vweird.f32 %v697
    %vm704 = vweird.f32 %v698
    %vm705 = vmor %vm703, %vm704
    %v706 = vsel %vm705, %v698, %v702
    %v707 = vand.u32 2147483647, %v697
    %vm708 = vcmp.eq.f32.partialorder %v707, 8.507059e+37
    %v709 = vand.u32 %v697, 2147483648
    %v710 = vor.u32 1.1754944e-38, %v709
    %v711 = vsel %vm708, %v710, %v706
    %v712 = vmul.f32 1.0, %v711
    %v713 = vadd.f32 %v651, %v677
    %v714 = vxor.u32 %v713, 2147483648
    %v715 = vmul.f32 %v714, 1.442695
    %v716 = vpow.pop %v715
    %v717 = vadd.f32 %v716, 1.0
    %v718 = vrcp.pop %v717
    %v719 = vmul.f32 %v717, %v718
    %v720 = vsub.f32 1.0, %v719
    %v721 = vmul.f32 %v718, %v720
    %v722 = vadd.f32 %v718, %v721
    %vm723 = vweird.f32 %v717
    %vm724 = vweird.f32 %v718
    %vm725 = vmor %vm723, %vm724
    %v726 = vsel %vm725, %v718, %v722
    %v727 = vand.u32 2147483647, %v717
    %vm728 = vcmp.eq.f32.partialorder %v727, 8.507059e+37
    %v729 = vand.u32 %v717, 2147483648
    %v730 = vor.u32 1.1754944e-38, %v729
    %v731 = vsel %vm728, %v730, %v726
    %v732 = vmul.f32 1.0, %v731
    %v733 = vmul.f32 %v712, %v690
    %v734 = vadd.f32 %v652, %v733
    %v735 = vtanh.pop %v734
    %v736 = vsub.f32 %v648, %v735
    %v737 = vmul.f32 %v732, %v736
    %v738 = vadd.f32 %v735, %v737
    %739 = vst [vmem:[#allocation3 + $0x8] sm:$0xff] %v738
    %v740 = vld [vmem:[#allocation2 + $0x30] sm:$0xff]
    %v741 = vld [vmem:[#allocation2 + $0x38] sm:$0xff]
    %v742 = vld [vmem:[#allocation2 + $0x40] sm:$0xff]
    %v743 = vpack.c.bf16 %v738, %v738
    %744 = vmatpush.bf16.msra.mxu0 %v537
    %745 = vmatpush.bf16.msra.mxu0 %v534
    %746 = vmatpush.bf16.msra.mxu0 %v531
    %747 = vmatpush.bf16.msra.mxu0 %v528
    %748 = vmatpush.bf16.msra.mxu0 %v525
    %749 = vmatpush.bf16.msra.mxu0 %v522
    %750 = vmatpush.bf16.msra.mxu0 %v519
    %751 = vmatpush.bf16.msra.mxu0 %v516
    %752 = vmatmul.bf16.gmra.mxu0 %v743
    %v753 = vpop.f32.mrf.mxu0
    %v754 = vadd.f32 %v430, %v753
    %v755 = vpop.f32.mrf.mxu0
    %756 = vdwg.mxu0
    %757 = vmatpush.bf16.msra.mxu0 %v538
    %758 = vmatpush.bf16.msra.mxu0 %v535
    %759 = vmatpush.bf16.msra.mxu0 %v532
    %760 = vmatpush.bf16.msra.mxu0 %v529
    %761 = vmatpush.bf16.msra.mxu0 %v526
    %762 = vmatpush.bf16.msra.mxu0 %v523
    %763 = vmatpush.bf16.msra.mxu0 %v520
    %764 = vmatpush.bf16.msra.mxu0 %v517
    %765 = vmatmul.bf16.gmra.mxu0 %v743
    %v766 = vpop.f32.mrf.mxu0
    %v767 = vadd.f32 %v431, %v766
    %v768 = vpop.f32.mrf.mxu0
    %769 = vdwg.mxu0
    %770 = vmatpush.bf16.msra.mxu0 %v539
    %771 = vmatpush.bf16.msra.mxu0 %v536
    %772 = vmatpush.bf16.msra.mxu0 %v533
    %773 = vmatpush.bf16.msra.mxu0 %v530
    %774 = vmatpush.bf16.msra.mxu0 %v527
    %775 = vmatpush.bf16.msra.mxu0 %v524
    %776 = vmatpush.bf16.msra.mxu0 %v521
    %777 = vmatpush.bf16.msra.mxu0 %v518
    %778 = vmatmul.bf16.gmra.mxu0 %v743
    %v779 = vpop.f32.mrf.mxu0
    %v780 = vadd.f32 %v432, %v779
    %v781 = vpop.f32.mrf.mxu0
    %782 = vdwg.mxu0
    %v783 = vadd.f32 %v740, %v754
    %v784 = vxor.u32 %v783, 2147483648
    %v785 = vmul.f32 %v784, 1.442695
    %v786 = vpow.pop %v785
    %v787 = vadd.f32 %v786, 1.0
    %v788 = vrcp.pop %v787
    %v789 = vmul.f32 %v787, %v788
    %v790 = vsub.f32 1.0, %v789
    %v791 = vmul.f32 %v788, %v790
    %v792 = vadd.f32 %v788, %v791
    %vm793 = vweird.f32 %v787
    %vm794 = vweird.f32 %v788
    %vm795 = vmor %vm793, %vm794
    %v796 = vsel %vm795, %v788, %v792
    %v797 = vand.u32 2147483647, %v787
    %vm798 = vcmp.eq.f32.partialorder %v797, 8.507059e+37
    %v799 = vand.u32 %v787, 2147483648
    %v800 = vor.u32 1.1754944e-38, %v799
    %v801 = vsel %vm798, %v800, %v796
    %v802 = vmul.f32 1.0, %v801
    %v803 = vadd.f32 %v741, %v767
    %v804 = vxor.u32 %v803, 2147483648
    %v805 = vmul.f32 %v804, 1.442695
    %v806 = vpow.pop %v805
    %v807 = vadd.f32 %v806, 1.0
    %v808 = vrcp.pop %v807
    %v809 = vmul.f32 %v807, %v808
    %v810 = vsub.f32 1.0, %v809
    %v811 = vmul.f32 %v808, %v810
    %v812 = vadd.f32 %v808, %v811
    %vm813 = vweird.f32 %v807
    %vm814 = vweird.f32 %v808
    %vm815 = vmor %vm813, %vm814
    %v816 = vsel %vm815, %v808, %v812
    %v817 = vand.u32 2147483647, %v807
    %vm818 = vcmp.eq.f32.partialorder %v817, 8.507059e+37
    %v819 = vand.u32 %v807, 2147483648
    %v820 = vor.u32 1.1754944e-38, %v819
    %v821 = vsel %vm818, %v820, %v816
    %v822 = vmul.f32 1.0, %v821
    %v823 = vmul.f32 %v802, %v780
    %v824 = vadd.f32 %v742, %v823
    %v825 = vtanh.pop %v824
    %v826 = vsub.f32 %v738, %v825
    %v827 = vmul.f32 %v822, %v826
    %v828 = vadd.f32 %v825, %v827
    %829 = vst [vmem:[#allocation3 + $0x10] sm:$0xff] %v828
    %v830 = vld [vmem:[#allocation2 + $0x48] sm:$0xff]
    %v831 = vld [vmem:[#allocation2 + $0x50] sm:$0xff]
    %v832 = vld [vmem:[#allocation2 + $0x58] sm:$0xff]
    %v833 = vpack.c.bf16 %v828, %v828
    %834 = vmatpush.bf16.msra.mxu0 %v537
    %835 = vmatpush.bf16.msra.mxu0 %v534
    %836 = vmatpush.bf16.msra.mxu0 %v531
    %837 = vmatpush.bf16.msra.mxu0 %v528
    %838 = vmatpush.bf16.msra.mxu0 %v525
    %839 = vmatpush.bf16.msra.mxu0 %v522
    %840 = vmatpush.bf16.msra.mxu0 %v519
    %841 = vmatpush.bf16.msra.mxu0 %v516
    %842 = vmatmul.bf16.gmra.mxu0 %v833
    %v843 = vpop.f32.mrf.mxu0
    %v844 = vadd.f32 %v430, %v843
    %v845 = vpop.f32.mrf.mxu0
    %846 = vdwg.mxu0
    %847 = vmatpush.bf16.msra.mxu0 %v538
    %848 = vmatpush.bf16.msra.mxu0 %v535
    %849 = vmatpush.bf16.msra.mxu0 %v532
    %850 = vmatpush.bf16.msra.mxu0 %v529
    %851 = vmatpush.bf16.msra.mxu0 %v526
    %852 = vmatpush.bf16.msra.mxu0 %v523
    %853 = vmatpush.bf16.msra.mxu0 %v520
    %854 = vmatpush.bf16.msra.mxu0 %v517
    %855 = vmatmul.bf16.gmra.mxu0 %v833
    %v856 = vpop.f32.mrf.mxu0
    %v857 = vadd.f32 %v431, %v856
    %v858 = vpop.f32.mrf.mxu0
    %859 = vdwg.mxu0
    %860 = vmatpush.bf16.msra.mxu0 %v539
    %861 = vmatpush.bf16.msra.mxu0 %v536
    %862 = vmatpush.bf16.msra.mxu0 %v533
    %863 = vmatpush.bf16.msra.mxu0 %v530
    %864 = vmatpush.bf16.msra.mxu0 %v527
    %865 = vmatpush.bf16.msra.mxu0 %v524
    %866 = vmatpush.bf16.msra.mxu0 %v521
    %867 = vmatpush.bf16.msra.mxu0 %v518
    %868 = vmatmul.bf16.gmra.mxu0 %v833
    %v869 = vpop.f32.mrf.mxu0
    %v870 = vadd.f32 %v432, %v869
    %v871 = vpop.f32.mrf.mxu0
    %872 = vdwg.mxu0
    %v873 = vadd.f32 %v830, %v844
    %v874 = vxor.u32 %v873, 2147483648
    %v875 = vmul.f32 %v874, 1.442695
    %v876 = vpow.pop %v875
    %v877 = vadd.f32 %v876, 1.0
    %v878 = vrcp.pop %v877
    %v879 = vmul.f32 %v877, %v878
    %v880 = vsub.f32 1.0, %v879
    %v881 = vmul.f32 %v878, %v880
    %v882 = vadd.f32 %v878, %v881
    %vm883 = vweird.f32 %v877
    %vm884 = vweird.f32 %v878
    %vm885 = vmor %vm883, %vm884
    %v886 = vsel %vm885, %v878, %v882
    %v887 = vand.u32 2147483647, %v877
    %vm888 = vcmp.eq.f32.partialorder %v887, 8.507059e+37
    %v889 = vand.u32 %v877, 2147483648
    %v890 = vor.u32 1.1754944e-38, %v889
    %v891 = vsel %vm888, %v890, %v886
    %v892 = vmul.f32 1.0, %v891
    %v893 = vadd.f32 %v831, %v857
    %v894 = vxor.u32 %v893, 2147483648
    %v895 = vmul.f32 %v894, 1.442695
    %v896 = vpow.pop %v895
    %v897 = vadd.f32 %v896, 1.0
    %v898 = vrcp.pop %v897
    %v899 = vmul.f32 %v897, %v898
    %v900 = vsub.f32 1.0, %v899
    %v901 = vmul.f32 %v898, %v900
    %v902 = vadd.f32 %v898, %v901
    %vm903 = vweird.f32 %v897
    %vm904 = vweird.f32 %v898
    %vm905 = vmor %vm903, %vm904
    %v906 = vsel %vm905, %v898, %v902
    %v907 = vand.u32 2147483647, %v897
    %vm908 = vcmp.eq.f32.partialorder %v907, 8.507059e+37
    %v909 = vand.u32 %v897, 2147483648
    %v910 = vor.u32 1.1754944e-38, %v909
    %v911 = vsel %vm908, %v910, %v906
    %v912 = vmul.f32 1.0, %v911
    %v913 = vmul.f32 %v892, %v870
    %v914 = vadd.f32 %v832, %v913
    %v915 = vtanh.pop %v914
    %v916 = vsub.f32 %v828, %v915
    %v917 = vmul.f32 %v912, %v916
    %v918 = vadd.f32 %v915, %v917
    %919 = vst [vmem:[#allocation3 + $0x18] sm:$0xff] %v918
    %v920 = vld [vmem:[#allocation2 + $0x60] sm:$0xff]
    %v921 = vld [vmem:[#allocation2 + $0x68] sm:$0xff]
    %v922 = vld [vmem:[#allocation2 + $0x70] sm:$0xff]
    %v923 = vpack.c.bf16 %v918, %v918
    %924 = vmatpush.bf16.msra.mxu0 %v537
    %925 = vmatpush.bf16.msra.mxu0 %v534
    %926 = vmatpush.bf16.msra.mxu0 %v531
    %927 = vmatpush.bf16.msra.mxu0 %v528
    %928 = vmatpush.bf16.msra.mxu0 %v525
    %929 = vmatpush.bf16.msra.mxu0 %v522
    %930 = vmatpush.bf16.msra.mxu0 %v519
    %931 = vmatpush.bf16.msra.mxu0 %v516
    %932 = vmatmul.bf16.gmra.mxu0 %v923
    %v933 = vpop.f32.mrf.mxu0
    %v934 = vadd.f32 %v430, %v933
    %v935 = vpop.f32.mrf.mxu0
    %936 = vdwg.mxu0
    %937 = vmatpush.bf16.msra.mxu0 %v538
    %938 = vmatpush.bf16.msra.mxu0 %v535
    %939 = vmatpush.bf16.msra.mxu0 %v532
    %940 = vmatpush.bf16.msra.mxu0 %v529
    %941 = vmatpush.bf16.msra.mxu0 %v526
    %942 = vmatpush.bf16.msra.mxu0 %v523
    %943 = vmatpush.bf16.msra.mxu0 %v520
    %944 = vmatpush.bf16.msra.mxu0 %v517
    %945 = vmatmul.bf16.gmra.mxu0 %v923
    %v946 = vpop.f32.mrf.mxu0
    %v947 = vadd.f32 %v431, %v946
    %v948 = vpop.f32.mrf.mxu0
    %949 = vdwg.mxu0
    %950 = vmatpush.bf16.msra.mxu0 %v539
    %951 = vmatpush.bf16.msra.mxu0 %v536
    %952 = vmatpush.bf16.msra.mxu0 %v533
    %953 = vmatpush.bf16.msra.mxu0 %v530
    %954 = vmatpush.bf16.msra.mxu0 %v527
    %955 = vmatpush.bf16.msra.mxu0 %v524
    %956 = vmatpush.bf16.msra.mxu0 %v521
    %957 = vmatpush.bf16.msra.mxu0 %v518
    %958 = vmatmul.bf16.gmra.mxu0 %v923
    %v959 = vpop.f32.mrf.mxu0
    %v960 = vadd.f32 %v432, %v959
    %v961 = vpop.f32.mrf.mxu0
    %962 = vdwg.mxu0
    %v963 = vadd.f32 %v920, %v934
    %v964 = vxor.u32 %v963, 2147483648
    %v965 = vmul.f32 %v964, 1.442695
    %v966 = vpow.pop %v965
    %v967 = vadd.f32 %v966, 1.0
    %v968 = vrcp.pop %v967
    %v969 = vmul.f32 %v967, %v968
    %v970 = vsub.f32 1.0, %v969
    %v971 = vmul.f32 %v968, %v970
    %v972 = vadd.f32 %v968, %v971
    %vm973 = vweird.f32 %v967
    %vm974 = vweird.f32 %v968
    %vm975 = vmor %vm973, %vm974
    %v976 = vsel %vm975, %v968, %v972
    %v977 = vand.u32 2147483647, %v967
    %vm978 = vcmp.eq.f32.partialorder %v977, 8.507059e+37
    %v979 = vand.u32 %v967, 2147483648
    %v980 = vor.u32 1.1754944e-38, %v979
    %v981 = vsel %vm978, %v980, %v976
    %v982 = vmul.f32 1.0, %v981
    %v983 = vadd.f32 %v921, %v947
    %v984 = vxor.u32 %v983, 2147483648
    %v985 = vmul.f32 %v984, 1.442695
    %v986 = vpow.pop %v985
    %v987 = vadd.f32 %v986, 1.0
    %v988 = vrcp.pop %v987
    %v989 = vmul.f32 %v987, %v988
    %v990 = vsub.f32 1.0, %v989
    %v991 = vmul.f32 %v988, %v990
    %v992 = vadd.f32 %v988, %v991
    %vm993 = vweird.f32 %v987
    %vm994 = vweird.f32 %v988
    %vm995 = vmor %vm993, %vm994
    %v996 = vsel %vm995, %v988, %v992
    %v997 = vand.u32 2147483647, %v987
    %vm998 = vcmp.eq.f32.partialorder %v997, 8.507059e+37
    %v999 = vand.u32 %v987, 2147483648
    %v1000 = vor.u32 1.1754944e-38, %v999
    %v1001 = vsel %vm998, %v1000, %v996
    %v1002 = vmul.f32 1.0, %v1001
    %v1003 = vmul.f32 %v982, %v960
    %v1004 = vadd.f32 %v922, %v1003
    %v1005 = vtanh.pop %v1004
    %v1006 = vsub.f32 %v918, %v1005
    %v1007 = vmul.f32 %v1002, %v1006
    %v1008 = vadd.f32 %v1005, %v1007
    %1009 = vst [vmem:[#allocation3 + $0x20] sm:$0xff] %v1008
    %v1010 = vld [vmem:[#allocation2 + $0x78] sm:$0xff]
    %v1011 = vld [vmem:[#allocation2 + $0x80] sm:$0xff]
    %v1012 = vld [vmem:[#allocation2 + $0x88] sm:$0xff]
    %v1013 = vpack.c.bf16 %v1008, %v1008
    %1014 = vmatpush.bf16.msra.mxu0 %v537
    %1015 = vmatpush.bf16.msra.mxu0 %v534
    %1016 = vmatpush.bf16.msra.mxu0 %v531
    %1017 = vmatpush.bf16.msra.mxu0 %v528
    %1018 = vmatpush.bf16.msra.mxu0 %v525
    %1019 = vmatpush.bf16.msra.mxu0 %v522
    %1020 = vmatpush.bf16.msra.mxu0 %v519
    %1021 = vmatpush.bf16.msra.mxu0 %v516
    %1022 = vmatmul.bf16.gmra.mxu0 %v1013
    %v1023 = vpop.f32.mrf.mxu0
    %v1024 = vadd.f32 %v430, %v1023
    %v1025 = vpop.f32.mrf.mxu0
    %1026 = vdwg.mxu0
    %1027 = vmatpush.bf16.msra.mxu0 %v538
    %1028 = vmatpush.bf16.msra.mxu0 %v535
    %1029 = vmatpush.bf16.msra.mxu0 %v532
    %1030 = vmatpush.bf16.msra.mxu0 %v529
    %1031 = vmatpush.bf16.msra.mxu0 %v526
    %1032 = vmatpush.bf16.msra.mxu0 %v523
    %1033 = vmatpush.bf16.msra.mxu0 %v520
    %1034 = vmatpush.bf16.msra.mxu0 %v517
    %1035 = vmatmul.bf16.gmra.mxu0 %v1013
    %v1036 = vpop.f32.mrf.mxu0
    %v1037 = vadd.f32 %v431, %v1036
    %v1038 = vpop.f32.mrf.mxu0
    %1039 = vdwg.mxu0
    %1040 = vmatpush.bf16.msra.mxu0 %v539
    %1041 = vmatpush.bf16.msra.mxu0 %v536
    %1042 = vmatpush.bf16.msra.mxu0 %v533
    %1043 = vmatpush.bf16.msra.mxu0 %v530
    %1044 = vmatpush.bf16.msra.mxu0 %v527
    %1045 = vmatpush.bf16.msra.mxu0 %v524
    %1046 = vmatpush.bf16.msra.mxu0 %v521
    %1047 = vmatpush.bf16.msra.mxu0 %v518
    %1048 = vmatmul.bf16.gmra.mxu0 %v1013
    %v1049 = vpop.f32.mrf.mxu0
    %v1050 = vadd.f32 %v432, %v1049
    %v1051 = vpop.f32.mrf.mxu0
    %1052 = vdwg.mxu0
    %v1053 = vadd.f32 %v1010, %v1024
    %v1054 = vxor.u32 %v1053, 2147483648
    %v1055 = vmul.f32 %v1054, 1.442695
    %v1056 = vpow.pop %v1055
    %v1057 = vadd.f32 %v1056, 1.0
    %v1058 = vrcp.pop %v1057
    %v1059 = vmul.f32 %v1057, %v1058
    %v1060 = vsub.f32 1.0, %v1059
    %v1061 = vmul.f32 %v1058, %v1060
    %v1062 = vadd.f32 %v1058, %v1061
    %vm1063 = vweird.f32 %v1057
    %vm1064 = vweird.f32 %v1058
    %vm1065 = vmor %vm1063, %vm1064
    %v1066 = vsel %vm1065, %v1058, %v1062
    %v1067 = vand.u32 2147483647, %v1057
    %vm1068 = vcmp.eq.f32.partialorder %v1067, 8.507059e+37
    %v1069 = vand.u32 %v1057, 2147483648
    %v1070 = vor.u32 1.1754944e-38, %v1069
    %v1071 = vsel %vm1068, %v1070, %v1066
    %v1072 = vmul.f32 1.0, %v1071
    %v1073 = vadd.f32 %v1011, %v1037
    %v1074 = vxor.u32 %v1073, 2147483648
    %v1075 = vmul.f32 %v1074, 1.442695
    %v1076 = vpow.pop %v1075
    %v1077 = vadd.f32 %v1076, 1.0
    %v1078 = vrcp.pop %v1077
    %v1079 = vmul.f32 %v1077, %v1078
    %v1080 = vsub.f32 1.0, %v1079
    %v1081 = vmul.f32 %v1078, %v1080
    %v1082 = vadd.f32 %v1078, %v1081
    %vm1083 = vweird.f32 %v1077
    %vm1084 = vweird.f32 %v1078
    %vm1085 = vmor %vm1083, %vm1084
    %v1086 = vsel %vm1085, %v1078, %v1082
    %v1087 = vand.u32 2147483647, %v1077
    %vm1088 = vcmp.eq.f32.partialorder %v1087, 8.507059e+37
    %v1089 = vand.u32 %v1077, 2147483648
    %v1090 = vor.u32 1.1754944e-38, %v1089
    %v1091 = vsel %vm1088, %v1090, %v1086
    %v1092 = vmul.f32 1.0, %v1091
    %v1093 = vmul.f32 %v1072, %v1050
    %v1094 = vadd.f32 %v1012, %v1093
    %v1095 = vtanh.pop %v1094
    %v1096 = vsub.f32 %v1008, %v1095
    %v1097 = vmul.f32 %v1092, %v1096
    %v1098 = vadd.f32 %v1095, %v1097
    %1099 = vst [vmem:[#allocation3 + $0x28] sm:$0xff] %v1098
    %v1100 = vld [vmem:[#allocation2 + $0x90] sm:$0xff]
    %v1101 = vld [vmem:[#allocation2 + $0x98] sm:$0xff]
    %v1102 = vld [vmem:[#allocation2 + $0xa0] sm:$0xff]
    %v1103 = vpack.c.bf16 %v1098, %v1098
    %1104 = vmatpush.bf16.msra.mxu0 %v537
    %1105 = vmatpush.bf16.msra.mxu0 %v534
    %1106 = vmatpush.bf16.msra.mxu0 %v531
    %1107 = vmatpush.bf16.msra.mxu0 %v528
    %1108 = vmatpush.bf16.msra.mxu0 %v525
    %1109 = vmatpush.bf16.msra.mxu0 %v522
    %1110 = vmatpush.bf16.msra.mxu0 %v519
    %1111 = vmatpush.bf16.msra.mxu0 %v516
    %1112 = vmatmul.bf16.gmra.mxu0 %v1103
    %v1113 = vpop.f32.mrf.mxu0
    %v1114 = vadd.f32 %v430, %v1113
    %v1115 = vpop.f32.mrf.mxu0
    %1116 = vdwg.mxu0
    %1117 = vmatpush.bf16.msra.mxu0 %v538
    %1118 = vmatpush.bf16.msra.mxu0 %v535
    %1119 = vmatpush.bf16.msra.mxu0 %v532
    %1120 = vmatpush.bf16.msra.mxu0 %v529
    %1121 = vmatpush.bf16.msra.mxu0 %v526
    %1122 = vmatpush.bf16.msra.mxu0 %v523
    %1123 = vmatpush.bf16.msra.mxu0 %v520
    %1124 = vmatpush.bf16.msra.mxu0 %v517
    %1125 = vmatmul.bf16.gmra.mxu0 %v1103
    %v1126 = vpop.f32.mrf.mxu0
    %v1127 = vadd.f32 %v431, %v1126
    %v1128 = vpop.f32.mrf.mxu0
    %1129 = vdwg.mxu0
    %1130 = vmatpush.bf16.msra.mxu0 %v539
    %1131 = vmatpush.bf16.msra.mxu0 %v536
    %1132 = vmatpush.bf16.msra.mxu0 %v533
    %1133 = vmatpush.bf16.msra.mxu0 %v530
    %1134 = vmatpush.bf16.msra.mxu0 %v527
    %1135 = vmatpush.bf16.msra.mxu0 %v524
    %1136 = vmatpush.bf16.msra.mxu0 %v521
    %1137 = vmatpush.bf16.msra.mxu0 %v518
    %1138 = vmatmul.bf16.gmra.mxu0 %v1103
    %v1139 = vpop.f32.mrf.mxu0
    %v1140 = vadd.f32 %v432, %v1139
    %v1141 = vpop.f32.mrf.mxu0
    %1142 = vdwg.mxu0
    %v1143 = vadd.f32 %v1100, %v1114
    %v1144 = vxor.u32 %v1143, 2147483648
    %v1145 = vmul.f32 %v1144, 1.442695
    %v1146 = vpow.pop %v1145
    %v1147 = vadd.f32 %v1146, 1.0
    %v1148 = vrcp.pop %v1147
    %v1149 = vmul.f32 %v1147, %v1148
    %v1150 = vsub.f32 1.0, %v1149
    %v1151 = vmul.f32 %v1148, %v1150
    %v1152 = vadd.f32 %v1148, %v1151
    %vm1153 = vweird.f32 %v1147
    %vm1154 = vweird.f32 %v1148
    %vm1155 = vmor %vm1153, %vm1154
    %v1156 = vsel %vm1155, %v1148, %v1152
    %v1157 = vand.u32 2147483647, %v1147
    %vm1158 = vcmp.eq.f32.partialorder %v1157, 8.507059e+37
    %v1159 = vand.u32 %v1147, 2147483648
    %v1160 = vor.u32 1.1754944e-38, %v1159
    %v1161 = vsel %vm1158, %v1160, %v1156
    %v1162 = vmul.f32 1.0, %v1161
    %v1163 = vadd.f32 %v1101, %v1127
    %v1164 = vxor.u32 %v1163, 2147483648
    %v1165 = vmul.f32 %v1164, 1.442695
    %v1166 = vpow.pop %v1165
    %v1167 = vadd.f32 %v1166, 1.0
    %v1168 = vrcp.pop %v1167
    %v1169 = vmul.f32 %v1167, %v1168
    %v1170 = vsub.f32 1.0, %v1169
    %v1171 = vmul.f32 %v1168, %v1170
    %v1172 = vadd.f32 %v1168, %v1171
    %vm1173 = vweird.f32 %v1167
    %vm1174 = vweird.f32 %v1168
    %vm1175 = vmor %vm1173, %vm1174
    %v1176 = vsel %vm1175, %v1168, %v1172
    %v1177 = vand.u32 2147483647, %v1167
    %vm1178 = vcmp.eq.f32.partialorder %v1177, 8.507059e+37
    %v1179 = vand.u32 %v1167, 2147483648
    %v1180 = vor.u32 1.1754944e-38, %v1179
    %v1181 = vsel %vm1178, %v1180, %v1176
    %v1182 = vmul.f32 1.0, %v1181
    %v1183 = vmul.f32 %v1162, %v1140
    %v1184 = vadd.f32 %v1102, %v1183
    %v1185 = vtanh.pop %v1184
    %v1186 = vsub.f32 %v1098, %v1185
    %v1187 = vmul.f32 %v1182, %v1186
    %v1188 = vadd.f32 %v1185, %v1187
    %1189 = vst [vmem:[#allocation3 + $0x30] sm:$0xff] %v1188
    %v1190 = vld [vmem:[#allocation2 + $0xa8] sm:$0xff]
    %v1191 = vld [vmem:[#allocation2 + $0xb0] sm:$0xff]
    %v1192 = vld [vmem:[#allocation2 + $0xb8] sm:$0xff]
    %v1193 = vpack.c.bf16 %v1188, %v1188
    %1194 = vmatpush.bf16.msra.mxu0 %v537
    %1195 = vmatpush.bf16.msra.mxu0 %v534
    %1196 = vmatpush.bf16.msra.mxu0 %v531
    %1197 = vmatpush.bf16.msra.mxu0 %v528
    %1198 = vmatpush.bf16.msra.mxu0 %v525
    %1199 = vmatpush.bf16.msra.mxu0 %v522
    %1200 = vmatpush.bf16.msra.mxu0 %v519
    %1201 = vmatpush.bf16.msra.mxu0 %v516
    %1202 = vmatmul.bf16.gmra.mxu0 %v1193
    %v1203 = vpop.f32.mrf.mxu0
    %v1204 = vadd.f32 %v430, %v1203
    %v1205 = vpop.f32.mrf.mxu0
    %1206 = vdwg.mxu0
    %1207 = vmatpush.bf16.msra.mxu0 %v538
    %1208 = vmatpush.bf16.msra.mxu0 %v535
    %1209 = vmatpush.bf16.msra.mxu0 %v532
    %1210 = vmatpush.bf16.msra.mxu0 %v529
    %1211 = vmatpush.bf16.msra.mxu0 %v526
    %1212 = vmatpush.bf16.msra.mxu0 %v523
    %1213 = vmatpush.bf16.msra.mxu0 %v520
    %1214 = vmatpush.bf16.msra.mxu0 %v517
    %1215 = vmatmul.bf16.gmra.mxu0 %v1193
    %v1216 = vpop.f32.mrf.mxu0
    %v1217 = vadd.f32 %v431, %v1216
    %v1218 = vpop.f32.mrf.mxu0
    %1219 = vdwg.mxu0
    %1220 = vmatpush.bf16.msra.mxu0 %v539
    %1221 = vmatpush.bf16.msra.mxu0 %v536
    %1222 = vmatpush.bf16.msra.mxu0 %v533
    %1223 = vmatpush.bf16.msra.mxu0 %v530
    %1224 = vmatpush.bf16.msra.mxu0 %v527
    %1225 = vmatpush.bf16.msra.mxu0 %v524
    %1226 = vmatpush.bf16.msra.mxu0 %v521
    %1227 = vmatpush.bf16.msra.mxu0 %v518
    %1228 = vmatmul.bf16.gmra.mxu0 %v1193
    %v1229 = vpop.f32.mrf.mxu0
    %v1230 = vadd.f32 %v432, %v1229
    %v1231 = vpop.f32.mrf.mxu0
    %1232 = vdwg.mxu0
    %v1233 = vadd.f32 %v1190, %v1204
    %v1234 = vxor.u32 %v1233, 2147483648
    %v1235 = vmul.f32 %v1234, 1.442695
    %v1236 = vpow.pop %v1235
    %v1237 = vadd.f32 %v1236, 1.0
    %v1238 = vrcp.pop %v1237
    %v1239 = vmul.f32 %v1237, %v1238
    %v1240 = vsub.f32 1.0, %v1239
    %v1241 = vmul.f32 %v1238, %v1240
    %v1242 = vadd.f32 %v1238, %v1241
    %vm1243 = vweird.f32 %v1237
    %vm1244 = vweird.f32 %v1238
    %vm1245 = vmor %vm1243, %vm1244
    %v1246 = vsel %vm1245, %v1238, %v1242
    %v1247 = vand.u32 2147483647, %v1237
    %vm1248 = vcmp.eq.f32.partialorder %v1247, 8.507059e+37
    %v1249 = vand.u32 %v1237, 2147483648
    %v1250 = vor.u32 1.1754944e-38, %v1249
    %v1251 = vsel %vm1248, %v1250, %v1246
    %v1252 = vmul.f32 1.0, %v1251
    %v1253 = vadd.f32 %v1191, %v1217
    %v1254 = vxor.u32 %v1253, 2147483648
    %v1255 = vmul.f32 %v1254, 1.442695
    %v1256 = vpow.pop %v1255
    %v1257 = vadd.f32 %v1256, 1.0
    %v1258 = vrcp.pop %v1257
    %v1259 = vmul.f32 %v1257, %v1258
    %v1260 = vsub.f32 1.0, %v1259
    %v1261 = vmul.f32 %v1258, %v1260
    %v1262 = vadd.f32 %v1258, %v1261
    %vm1263 = vweird.f32 %v1257
    %vm1264 = vweird.f32 %v1258
    %vm1265 = vmor %vm1263, %vm1264
    %v1266 = vsel %vm1265, %v1258, %v1262
    %v1267 = vand.u32 2147483647, %v1257
    %vm1268 = vcmp.eq.f32.partialorder %v1267, 8.507059e+37
    %v1269 = vand.u32 %v1257, 2147483648
    %v1270 = vor.u32 1.1754944e-38, %v1269
    %v1271 = vsel %vm1268, %v1270, %v1266
    %v1272 = vmul.f32 1.0, %v1271
    %v1273 = vmul.f32 %v1252, %v1230
    %v1274 = vadd.f32 %v1192, %v1273
    %v1275 = vtanh.pop %v1274
    %v1276 = vsub.f32 %v1188, %v1275
    %v1277 = vmul.f32 %v1272, %v1276
    %v1278 = vadd.f32 %v1275, %v1277
    %1279 = vst [vmem:[#allocation3 + $0x38] sm:$0xff] %v1278
    %v1280 = vld [vmem:[#allocation3] sm:$0xff]
    %v1281 = vld [vmem:[#allocation3 + $0x8] sm:$0xff]
    %v1282 = vld [vmem:[#allocation3 + $0x10] sm:$0xff]
    %v1283 = vld [vmem:[#allocation3 + $0x18] sm:$0xff]
    %v1284 = vld [vmem:[#allocation3 + $0x20] sm:$0xff]
    %v1285 = vld [vmem:[#allocation3 + $0x28] sm:$0xff]
    %v1286 = vld [vmem:[#allocation3 + $0x30] sm:$0xff]
    %v1287 = vld [vmem:[#allocation3 + $0x38] sm:$0xff]
    %v1288 = vpack.c.bf16 %v1281, %v1280
    %v1289 = vpack.c.bf16 %v1283, %v1282
    %v1290 = vpack.c.bf16 %v1285, %v1284
    %v1291 = vpack.c.bf16 %v1287, %v1286
    %v1292 = vld [vmem:[#allocation8] sm:$0xff]
    %v1293 = vld [vmem:[#allocation8 + $0x8] sm:$0xf]
    %v1294 = vld [vmem:[#allocation8 + $0xc] sm:$0xff]
    %v1295 = vld [vmem:[#allocation8 + $0x14] sm:$0xf]
    %v1296 = vld [vmem:[#allocation8 + $0x18] sm:$0xff]
    %v1297 = vld [vmem:[#allocation8 + $0x20] sm:$0xf]
    %v1298 = vld [vmem:[#allocation8 + $0x24] sm:$0xff]
    %v1299 = vld [vmem:[#allocation8 + $0x2c] sm:$0xf]
    %v1300 = vld [vmem:[#allocation8 + $0x30] sm:$0xff]
    %v1301 = vld [vmem:[#allocation8 + $0x38] sm:$0xf]
    %v1302 = vld [vmem:[#allocation8 + $0x3c] sm:$0xff]
    %v1303 = vld [vmem:[#allocation8 + $0x44] sm:$0xf]
    %v1304 = vld [vmem:[#allocation8 + $0x48] sm:$0xff]
    %v1305 = vld [vmem:[#allocation8 + $0x50] sm:$0xf]
    %v1306 = vld [vmem:[#allocation8 + $0x54] sm:$0xff]
    %v1307 = vld [vmem:[#allocation8 + $0x5c] sm:$0xf]
    %v1308 = vld [vmem:[#allocation8 + $0x60] sm:$0xff]
    %v1309 = vld [vmem:[#allocation8 + $0x68] sm:$0xf]
    %v1310 = vld [vmem:[#allocation8 + $0x6c] sm:$0xff]
    %v1311 = vld [vmem:[#allocation8 + $0x74] sm:$0xf]
    %v1312 = vld [vmem:[#allocation8 + $0x78] sm:$0xff]
    %v1313 = vld [vmem:[#allocation8 + $0x80] sm:$0xf]
    %v1314 = vld [vmem:[#allocation8 + $0x84] sm:$0xff]
    %v1315 = vld [vmem:[#allocation8 + $0x8c] sm:$0xf]
    %v1316 = vld [vmem:[#allocation8 + $0x90] sm:$0xff]
    %v1317 = vld [vmem:[#allocation8 + $0x98] sm:$0xf]
    %v1318 = vld [vmem:[#allocation8 + $0x9c] sm:$0xff]
    %v1319 = vld [vmem:[#allocation8 + $0xa4] sm:$0xf]
    %v1320 = vld [vmem:[#allocation8 + $0xa8] sm:$0xff]
    %v1321 = vld [vmem:[#allocation8 + $0xb0] sm:$0xf]
    %v1322 = vld [vmem:[#allocation8 + $0xb4] sm:$0xff]
    %v1323 = vld [vmem:[#allocation8 + $0xbc] sm:$0xf]
    %v1324 = vld [vmem:[%s7] sm:$0x7]
    %v1326 = vperm.slane %v1324, 0
    %v1327 = vperm.slane %v1324, 1
    %v1328 = vperm.slane %v1324, 2
    %v1364 = vunpack.c.l.b16 %v1292
    %v1365 = vunpack.c.h.b16 %v1292
    %v1366 = vunpack.c.l.b16 %v1293
    %v1367 = vunpack.c.l.b16 %v1294
    %v1368 = vunpack.c.h.b16 %v1294
    %v1369 = vunpack.c.l.b16 %v1295
    %v1370 = vunpack.c.l.b16 %v1296
    %v1371 = vunpack.c.h.b16 %v1296
    %v1372 = vunpack.c.l.b16 %v1297
    %v1373 = vunpack.c.l.b16 %v1298
    %v1374 = vunpack.c.h.b16 %v1298
    %v1375 = vunpack.c.l.b16 %v1299
    %v1376 = vunpack.c.l.b16 %v1300
    %v1377 = vunpack.c.h.b16 %v1300
    %v1378 = vunpack.c.l.b16 %v1301
    %v1379 = vunpack.c.l.b16 %v1302
    %v1380 = vunpack.c.h.b16 %v1302
    %v1381 = vunpack.c.l.b16 %v1303
    %v1382 = vunpack.c.l.b16 %v1304
    %v1383 = vunpack.c.h.b16 %v1304
    %v1384 = vunpack.c.l.b16 %v1305
    %v1385 = vunpack.c.l.b16 %v1306
    %v1386 = vunpack.c.h.b16 %v1306
    %v1387 = vunpack.c.l.b16 %v1307
    %v1388 = vunpack.c.l.b16 %v1308
    %v1389 = vunpack.c.h.b16 %v1308
    %v1390 = vunpack.c.l.b16 %v1309
    %v1391 = vunpack.c.l.b16 %v1310
    %v1392 = vunpack.c.h.b16 %v1310
    %v1393 = vunpack.c.l.b16 %v1311
    %v1394 = vunpack.c.l.b16 %v1312
    %v1395 = vunpack.c.h.b16 %v1312
    %v1396 = vunpack.c.l.b16 %v1313
    %v1397 = vunpack.c.l.b16 %v1314
    %v1398 = vunpack.c.h.b16 %v1314
    %v1399 = vunpack.c.l.b16 %v1315
    %v1400 = vunpack.c.l.b16 %v1316
    %v1401 = vunpack.c.h.b16 %v1316
    %v1402 = vunpack.c.l.b16 %v1317
    %v1403 = vunpack.c.l.b16 %v1318
    %v1404 = vunpack.c.h.b16 %v1318
    %v1405 = vunpack.c.l.b16 %v1319
    %v1406 = vunpack.c.l.b16 %v1320
    %v1407 = vunpack.c.h.b16 %v1320
    %v1408 = vunpack.c.l.b16 %v1321
    %v1409 = vunpack.c.l.b16 %v1322
    %v1410 = vunpack.c.h.b16 %v1322
    %v1411 = vunpack.c.l.b16 %v1323
    %v1412 = vpack.c.b16 %v1367, %v1364
    %v1413 = vpack.c.b16 %v1368, %v1365
    %v1414 = vpack.c.b16 %v1369, %v1366
    %v1415 = vpack.c.b16 %v1373, %v1370
    %v1416 = vpack.c.b16 %v1374, %v1371
    %v1417 = vpack.c.b16 %v1375, %v1372
    %v1418 = vpack.c.b16 %v1379, %v1376
    %v1419 = vpack.c.b16 %v1380, %v1377
    %v1420 = vpack.c.b16 %v1381, %v1378
    %v1421 = vpack.c.b16 %v1385, %v1382
    %v1422 = vpack.c.b16 %v1386, %v1383
    %v1423 = vpack.c.b16 %v1387, %v1384
    %v1424 = vpack.c.b16 %v1391, %v1388
    %v1425 = vpack.c.b16 %v1392, %v1389
    %v1426 = vpack.c.b16 %v1393, %v1390
    %v1427 = vpack.c.b16 %v1397, %v1394
    %v1428 = vpack.c.b16 %v1398, %v1395
    %v1429 = vpack.c.b16 %v1399, %v1396
    %v1430 = vpack.c.b16 %v1403, %v1400
    %v1431 = vpack.c.b16 %v1404, %v1401
    %v1432 = vpack.c.b16 %v1405, %v1402
    %v1433 = vpack.c.b16 %v1409, %v1406
    %v1434 = vpack.c.b16 %v1410, %v1407
    %v1435 = vpack.c.b16 %v1411, %v1408
    %1460 = vmatpush.bf16.msra.mxu0 %v1433
    %1461 = vmatpush.bf16.msra.mxu0 %v1430
    %1462 = vmatpush.bf16.msra.mxu0 %v1427
    %1463 = vmatpush.bf16.msra.mxu0 %v1424
    %1464 = vmatpush.bf16.msra.mxu0 %v1421
    %1465 = vmatpush.bf16.msra.mxu0 %v1418
    %1466 = vmatpush.bf16.msra.mxu0 %v1415
    %1467 = vmatpush.bf16.msra.mxu0 %v1412
    %1468 = vmatmul.bf16.gmra.mxu0 %v1288
    %v1469 = vpop.f32.mrf.mxu0
    %v1470 = vadd.f32 %v1326, %v1469
    %v1471 = vpop.f32.mrf.mxu0
    %v1472 = vadd.f32 %v1326, %v1471
    %1473 = vmatmul.bf16.gmra.mxu0 %v1289
    %v1474 = vpop.f32.mrf.mxu0
    %v1475 = vadd.f32 %v1326, %v1474
    %v1476 = vpop.f32.mrf.mxu0
    %v1477 = vadd.f32 %v1326, %v1476
    %1478 = vmatmul.bf16.gmra.mxu0 %v1290
    %v1479 = vpop.f32.mrf.mxu0
    %v1480 = vadd.f32 %v1326, %v1479
    %v1481 = vpop.f32.mrf.mxu0
    %v1482 = vadd.f32 %v1326, %v1481
    %1483 = vmatmul.bf16.gmra.mxu0 %v1291
    %v1484 = vpop.f32.mrf.mxu0
    %v1485 = vadd.f32 %v1326, %v1484
    %v1486 = vpop.f32.mrf.mxu0
    %v1487 = vadd.f32 %v1326, %v1486
    %1488 = vdwg.mxu0
    %1489 = vmatpush.bf16.msra.mxu0 %v1434
    %1490 = vmatpush.bf16.msra.mxu0 %v1431
    %1491 = vmatpush.bf16.msra.mxu0 %v1428
    %1492 = vmatpush.bf16.msra.mxu0 %v1425
    %1493 = vmatpush.bf16.msra.mxu0 %v1422
    %1494 = vmatpush.bf16.msra.mxu0 %v1419
    %1495 = vmatpush.bf16.msra.mxu0 %v1416
    %1496 = vmatpush.bf16.msra.mxu0 %v1413
    %1497 = vmatmul.bf16.gmra.mxu0 %v1288
    %v1498 = vpop.f32.mrf.mxu0
    %v1499 = vadd.f32 %v1327, %v1498
    %v1500 = vpop.f32.mrf.mxu0
    %v1501 = vadd.f32 %v1327, %v1500
    %1502 = vmatmul.bf16.gmra.mxu0 %v1289
    %v1503 = vpop.f32.mrf.mxu0
    %v1504 = vadd.f32 %v1327, %v1503
    %v1505 = vpop.f32.mrf.mxu0
    %v1506 = vadd.f32 %v1327, %v1505
    %1507 = vmatmul.bf16.gmra.mxu0 %v1290
    %v1508 = vpop.f32.mrf.mxu0
    %v1509 = vadd.f32 %v1327, %v1508
    %v1510 = vpop.f32.mrf.mxu0
    %v1511 = vadd.f32 %v1327, %v1510
    %1512 = vmatmul.bf16.gmra.mxu0 %v1291
    %v1513 = vpop.f32.mrf.mxu0
    %v1514 = vadd.f32 %v1327, %v1513
    %v1515 = vpop.f32.mrf.mxu0
    %v1516 = vadd.f32 %v1327, %v1515
    %1517 = vdwg.mxu0
    %1518 = vmatpush.bf16.msra.mxu0 %v1435
    %1519 = vmatpush.bf16.msra.mxu0 %v1432
    %1520 = vmatpush.bf16.msra.mxu0 %v1429
    %1521 = vmatpush.bf16.msra.mxu0 %v1426
    %1522 = vmatpush.bf16.msra.mxu0 %v1423
    %1523 = vmatpush.bf16.msra.mxu0 %v1420
    %1524 = vmatpush.bf16.msra.mxu0 %v1417
    %1525 = vmatpush.bf16.msra.mxu0 %v1414
    %1526 = vmatmul.bf16.gmra.mxu0 %v1288
    %v1527 = vpop.f32.mrf.mxu0
    %v1528 = vadd.f32 %v1328, %v1527
    %v1529 = vpop.f32.mrf.mxu0
    %v1530 = vadd.f32 %v1328, %v1529
    %1531 = vmatmul.bf16.gmra.mxu0 %v1289
    %v1532 = vpop.f32.mrf.mxu0
    %v1533 = vadd.f32 %v1328, %v1532
    %v1534 = vpop.f32.mrf.mxu0
    %v1535 = vadd.f32 %v1328, %v1534
    %1536 = vmatmul.bf16.gmra.mxu0 %v1290
    %v1537 = vpop.f32.mrf.mxu0
    %v1538 = vadd.f32 %v1328, %v1537
    %v1539 = vpop.f32.mrf.mxu0
    %v1540 = vadd.f32 %v1328, %v1539
    %1541 = vmatmul.bf16.gmra.mxu0 %v1291
    %v1542 = vpop.f32.mrf.mxu0
    %v1543 = vadd.f32 %v1328, %v1542
    %v1544 = vpop.f32.mrf.mxu0
    %v1545 = vadd.f32 %v1328, %v1544
    %1546 = vdwg.mxu0
    %1547 = vst [vmem:[#allocation2] sm:$0xff] %v1470
    %1548 = vst [vmem:[#allocation2 + $0x8] sm:$0xff] %v1499
    %1549 = vst [vmem:[#allocation2 + $0x10] sm:$0xff] %v1528
    %1550 = vst [vmem:[#allocation2 + $0x18] sm:$0xff] %v1472
    %1551 = vst [vmem:[#allocation2 + $0x20] sm:$0xff] %v1501
    %1552 = vst [vmem:[#allocation2 + $0x28] sm:$0xff] %v1530
    %1553 = vst [vmem:[#allocation2 + $0x30] sm:$0xff] %v1475
    %1554 = vst [vmem:[#allocation2 + $0x38] sm:$0xff] %v1504
    %1555 = vst [vmem:[#allocation2 + $0x40] sm:$0xff] %v1533
    %1556 = vst [vmem:[#allocation2 + $0x48] sm:$0xff] %v1477
    %1557 = vst [vmem:[#allocation2 + $0x50] sm:$0xff] %v1506
    %1558 = vst [vmem:[#allocation2 + $0x58] sm:$0xff] %v1535
    %1559 = vst [vmem:[#allocation2 + $0x60] sm:$0xff] %v1480
    %1560 = vst [vmem:[#allocation2 + $0x68] sm:$0xff] %v1509
    %1561 = vst [vmem:[#allocation2 + $0x70] sm:$0xff] %v1538
    %1562 = vst [vmem:[#allocation2 + $0x78] sm:$0xff] %v1482
    %1563 = vst [vmem:[#allocation2 + $0x80] sm:$0xff] %v1511
    %1564 = vst [vmem:[#allocation2 + $0x88] sm:$0xff] %v1540
    %1565 = vst [vmem:[#allocation2 + $0x90] sm:$0xff] %v1485
    %1566 = vst [vmem:[#allocation2 + $0x98] sm:$0xff] %v1514
    %1567 = vst [vmem:[#allocation2 + $0xa0] sm:$0xff] %v1543
    %1568 = vst [vmem:[#allocation2 + $0xa8] sm:$0xff] %v1487
    %1569 = vst [vmem:[#allocation2 + $0xb0] sm:$0xff] %v1516
    %1570 = vst [vmem:[#allocation2 + $0xb8] sm:$0xff] %v1545
    %v1571 = vld [vmem:[#allocation9] sm:$0xff]
    %v1572 = vld [vmem:[#allocation9 + $0x8] sm:$0xf]
    %v1573 = vld [vmem:[#allocation9 + $0xc] sm:$0xff]
    %v1574 = vld [vmem:[#allocation9 + $0x14] sm:$0xf]
    %v1575 = vld [vmem:[#allocation9 + $0x18] sm:$0xff]
    %v1576 = vld [vmem:[#allocation9 + $0x20] sm:$0xf]
    %v1577 = vld [vmem:[#allocation9 + $0x24] sm:$0xff]
    %v1578 = vld [vmem:[#allocation9 + $0x2c] sm:$0xf]
    %v1579 = vld [vmem:[#allocation9 + $0x30] sm:$0xff]
    %v1580 = vld [vmem:[#allocation9 + $0x38] sm:$0xf]
    %v1581 = vld [vmem:[#allocation9 + $0x3c] sm:$0xff]
    %v1582 = vld [vmem:[#allocation9 + $0x44] sm:$0xf]
    %v1583 = vld [vmem:[#allocation9 + $0x48] sm:$0xff]
    %v1584 = vld [vmem:[#allocation9 + $0x50] sm:$0xf]
    %v1585 = vld [vmem:[#allocation9 + $0x54] sm:$0xff]
    %v1586 = vld [vmem:[#allocation9 + $0x5c] sm:$0xf]
    %v1587 = vld [vmem:[#allocation9 + $0x60] sm:$0xff]
    %v1588 = vld [vmem:[#allocation9 + $0x68] sm:$0xf]
    %v1589 = vld [vmem:[#allocation9 + $0x6c] sm:$0xff]
    %v1590 = vld [vmem:[#allocation9 + $0x74] sm:$0xf]
    %v1591 = vld [vmem:[#allocation9 + $0x78] sm:$0xff]
    %v1592 = vld [vmem:[#allocation9 + $0x80] sm:$0xf]
    %v1593 = vld [vmem:[#allocation9 + $0x84] sm:$0xff]
    %v1594 = vld [vmem:[#allocation9 + $0x8c] sm:$0xf]
    %v1595 = vld [vmem:[#allocation9 + $0x90] sm:$0xff]
    %v1596 = vld [vmem:[#allocation9 + $0x98] sm:$0xf]
    %v1597 = vld [vmem:[#allocation9 + $0x9c] sm:$0xff]
    %v1598 = vld [vmem:[#allocation9 + $0xa4] sm:$0xf]
    %v1599 = vld [vmem:[#allocation9 + $0xa8] sm:$0xff]
    %v1600 = vld [vmem:[#allocation9 + $0xb0] sm:$0xf]
    %v1601 = vld [vmem:[#allocation9 + $0xb4] sm:$0xff]
    %v1602 = vld [vmem:[#allocation9 + $0xbc] sm:$0xf]
    %v1603 = vld [vmem:[%s8] sm:$0x7]
    %v1604 = vld [vmem:[#allocation2] sm:$0xff]
    %v1605 = vld [vmem:[#allocation2 + $0x8] sm:$0xff]
    %v1606 = vld [vmem:[#allocation2 + $0x10] sm:$0xff]
    %v1608 = vperm.slane %v1603, 0
    %v1609 = vperm.slane %v1603, 1
    %v1610 = vperm.slane %v1603, 2
    %v1646 = vunpack.c.l.b16 %v1571
    %v1647 = vunpack.c.h.b16 %v1571
    %v1648 = vunpack.c.l.b16 %v1572
    %v1649 = vunpack.c.l.b16 %v1573
    %v1650 = vunpack.c.h.b16 %v1573
    %v1651 = vunpack.c.l.b16 %v1574
    %v1652 = vunpack.c.l.b16 %v1575
    %v1653 = vunpack.c.h.b16 %v1575
    %v1654 = vunpack.c.l.b16 %v1576
    %v1655 = vunpack.c.l.b16 %v1577
    %v1656 = vunpack.c.h.b16 %v1577
    %v1657 = vunpack.c.l.b16 %v1578
    %v1658 = vunpack.c.l.b16 %v1579
    %v1659 = vunpack.c.h.b16 %v1579
    %v1660 = vunpack.c.l.b16 %v1580
    %v1661 = vunpack.c.l.b16 %v1581
    %v1662 = vunpack.c.h.b16 %v1581
    %v1663 = vunpack.c.l.b16 %v1582
    %v1664 = vunpack.c.l.b16 %v1583
    %v1665 = vunpack.c.h.b16 %v1583
    %v1666 = vunpack.c.l.b16 %v1584
    %v1667 = vunpack.c.l.b16 %v1585
    %v1668 = vunpack.c.h.b16 %v1585
    %v1669 = vunpack.c.l.b16 %v1586
    %v1670 = vunpack.c.l.b16 %v1587
    %v1671 = vunpack.c.h.b16 %v1587
    %v1672 = vunpack.c.l.b16 %v1588
    %v1673 = vunpack.c.l.b16 %v1589
    %v1674 = vunpack.c.h.b16 %v1589
    %v1675 = vunpack.c.l.b16 %v1590
    %v1676 = vunpack.c.l.b16 %v1591
    %v1677 = vunpack.c.h.b16 %v1591
    %v1678 = vunpack.c.l.b16 %v1592
    %v1679 = vunpack.c.l.b16 %v1593
    %v1680 = vunpack.c.h.b16 %v1593
    %v1681 = vunpack.c.l.b16 %v1594
    %v1682 = vunpack.c.l.b16 %v1595
    %v1683 = vunpack.c.h.b16 %v1595
    %v1684 = vunpack.c.l.b16 %v1596
    %v1685 = vunpack.c.l.b16 %v1597
    %v1686 = vunpack.c.h.b16 %v1597
    %v1687 = vunpack.c.l.b16 %v1598
    %v1688 = vunpack.c.l.b16 %v1599
    %v1689 = vunpack.c.h.b16 %v1599
    %v1690 = vunpack.c.l.b16 %v1600
    %v1691 = vunpack.c.l.b16 %v1601
    %v1692 = vunpack.c.h.b16 %v1601
    %v1693 = vunpack.c.l.b16 %v1602
    %v1694 = vpack.c.b16 %v1649, %v1646
    %v1695 = vpack.c.b16 %v1650, %v1647
    %v1696 = vpack.c.b16 %v1651, %v1648
    %v1697 = vpack.c.b16 %v1655, %v1652
    %v1698 = vpack.c.b16 %v1656, %v1653
    %v1699 = vpack.c.b16 %v1657, %v1654
    %v1700 = vpack.c.b16 %v1661, %v1658
    %v1701 = vpack.c.b16 %v1662, %v1659
    %v1702 = vpack.c.b16 %v1663, %v1660
    %v1703 = vpack.c.b16 %v1667, %v1664
    %v1704 = vpack.c.b16 %v1668, %v1665
    %v1705 = vpack.c.b16 %v1669, %v1666
    %v1706 = vpack.c.b16 %v1673, %v1670
    %v1707 = vpack.c.b16 %v1674, %v1671
    %v1708 = vpack.c.b16 %v1675, %v1672
    %v1709 = vpack.c.b16 %v1679, %v1676
    %v1710 = vpack.c.b16 %v1680, %v1677
    %v1711 = vpack.c.b16 %v1681, %v1678
    %v1712 = vpack.c.b16 %v1685, %v1682
    %v1713 = vpack.c.b16 %v1686, %v1683
    %v1714 = vpack.c.b16 %v1687, %v1684
    %v1715 = vpack.c.b16 %v1691, %v1688
    %v1716 = vpack.c.b16 %v1692, %v1689
    %v1717 = vpack.c.b16 %v1693, %v1690
    %1742 = vmatpush.bf16.msra.mxu0 %v1715
    %1743 = vmatpush.bf16.msra.mxu0 %v1712
    %1744 = vmatpush.bf16.msra.mxu0 %v1709
    %1745 = vmatpush.bf16.msra.mxu0 %v1706
    %1746 = vmatpush.bf16.msra.mxu0 %v1703
    %1747 = vmatpush.bf16.msra.mxu0 %v1700
    %1748 = vmatpush.bf16.msra.mxu0 %v1697
    %1749 = vmatpush.bf16.msra.mxu0 %v1694
    %1750 = vmatmul.bf16.gmra.mxu0 0
    %v1751 = vpop.f32.mrf.mxu0
    %v1752 = vadd.f32 %v1608, %v1751
    %v1753 = vpop.f32.mrf.mxu0
    %1754 = vdwg.mxu0
    %1755 = vmatpush.bf16.msra.mxu0 %v1716
    %1756 = vmatpush.bf16.msra.mxu0 %v1713
    %1757 = vmatpush.bf16.msra.mxu0 %v1710
    %1758 = vmatpush.bf16.msra.mxu0 %v1707
    %1759 = vmatpush.bf16.msra.mxu0 %v1704
    %1760 = vmatpush.bf16.msra.mxu0 %v1701
    %1761 = vmatpush.bf16.msra.mxu0 %v1698
    %1762 = vmatpush.bf16.msra.mxu0 %v1695
    %1763 = vmatmul.bf16.gmra.mxu0 0
    %v1764 = vpop.f32.mrf.mxu0
    %v1765 = vadd.f32 %v1609, %v1764
    %v1766 = vpop.f32.mrf.mxu0
    %1767 = vdwg.mxu0
    %1768 = vmatpush.bf16.msra.mxu0 %v1717
    %1769 = vmatpush.bf16.msra.mxu0 %v1714
    %1770 = vmatpush.bf16.msra.mxu0 %v1711
    %1771 = vmatpush.bf16.msra.mxu0 %v1708
    %1772 = vmatpush.bf16.msra.mxu0 %v1705
    %1773 = vmatpush.bf16.msra.mxu0 %v1702
    %1774 = vmatpush.bf16.msra.mxu0 %v1699
    %1775 = vmatpush.bf16.msra.mxu0 %v1696
    %1776 = vmatmul.bf16.gmra.mxu0 0
    %v1777 = vpop.f32.mrf.mxu0
    %v1778 = vadd.f32 %v1610, %v1777
    %v1779 = vpop.f32.mrf.mxu0
    %1780 = vdwg.mxu0
    %v1781 = vadd.f32 %v1604, %v1752
    %v1782 = vxor.u32 %v1781, 2147483648
    %v1783 = vmul.f32 %v1782, 1.442695
    %v1784 = vpow.pop %v1783
    %v1785 = vadd.f32 %v1784, 1.0
    %v1786 = vrcp.pop %v1785
    %v1787 = vmul.f32 %v1785, %v1786
    %v1788 = vsub.f32 1.0, %v1787
    %v1789 = vmul.f32 %v1786, %v1788
    %v1790 = vadd.f32 %v1786, %v1789
    %vm1791 = vweird.f32 %v1785
    %vm1792 = vweird.f32 %v1786
    %vm1793 = vmor %vm1791, %vm1792
    %v1794 = vsel %vm1793, %v1786, %v1790
    %v1795 = vand.u32 2147483647, %v1785
    %vm1796 = vcmp.eq.f32.partialorder %v1795, 8.507059e+37
    %v1797 = vand.u32 %v1785, 2147483648
    %v1798 = vor.u32 1.1754944e-38, %v1797
    %v1799 = vsel %vm1796, %v1798, %v1794
    %v1800 = vmul.f32 1.0, %v1799
    %v1801 = vadd.f32 %v1605, %v1765
    %v1802 = vxor.u32 %v1801, 2147483648
    %v1803 = vmul.f32 %v1802, 1.442695
    %v1804 = vpow.pop %v1803
    %v1805 = vadd.f32 %v1804, 1.0
    %v1806 = vrcp.pop %v1805
    %v1807 = vmul.f32 %v1805, %v1806
    %v1808 = vsub.f32 1.0, %v1807
    %v1809 = vmul.f32 %v1806, %v1808
    %v1810 = vadd.f32 %v1806, %v1809
    %vm1811 = vweird.f32 %v1805
    %vm1812 = vweird.f32 %v1806
    %vm1813 = vmor %vm1811, %vm1812
    %v1814 = vsel %vm1813, %v1806, %v1810
    %v1815 = vand.u32 2147483647, %v1805
    %vm1816 = vcmp.eq.f32.partialorder %v1815, 8.507059e+37
    %v1817 = vand.u32 %v1805, 2147483648
    %v1818 = vor.u32 1.1754944e-38, %v1817
    %v1819 = vsel %vm1816, %v1818, %v1814
    %v1820 = vmul.f32 1.0, %v1819
    %v1821 = vmul.f32 %v1800, %v1778
    %v1822 = vadd.f32 %v1606, %v1821
    %v1823 = vtanh.pop %v1822
    %v1824 = vsub.f32 0.0, %v1823
    %v1825 = vmul.f32 %v1820, %v1824
    %v1826 = vadd.f32 %v1823, %v1825
    %1827 = vst [vmem:[#allocation3] sm:$0xff] %v1826
    %v1828 = vld [vmem:[#allocation2 + $0x18] sm:$0xff]
    %v1829 = vld [vmem:[#allocation2 + $0x20] sm:$0xff]
    %v1830 = vld [vmem:[#allocation2 + $0x28] sm:$0xff]
    %v1831 = vpack.c.bf16 %v1826, %v1826
    %1832 = vmatpush.bf16.msra.mxu0 %v1715
    %1833 = vmatpush.bf16.msra.mxu0 %v1712
    %1834 = vmatpush.bf16.msra.mxu0 %v1709
    %1835 = vmatpush.bf16.msra.mxu0 %v1706
    %1836 = vmatpush.bf16.msra.mxu0 %v1703
    %1837 = vmatpush.bf16.msra.mxu0 %v1700
    %1838 = vmatpush.bf16.msra.mxu0 %v1697
    %1839 = vmatpush.bf16.msra.mxu0 %v1694
    %1840 = vmatmul.bf16.gmra.mxu0 %v1831
    %v1841 = vpop.f32.mrf.mxu0
    %v1842 = vadd.f32 %v1608, %v1841
    %v1843 = vpop.f32.mrf.mxu0
    %1844 = vdwg.mxu0
    %1845 = vmatpush.bf16.msra.mxu0 %v1716
    %1846 = vmatpush.bf16.msra.mxu0 %v1713
    %1847 = vmatpush.bf16.msra.mxu0 %v1710
    %1848 = vmatpush.bf16.msra.mxu0 %v1707
    %1849 = vmatpush.bf16.msra.mxu0 %v1704
    %1850 = vmatpush.bf16.msra.mxu0 %v1701
    %1851 = vmatpush.bf16.msra.mxu0 %v1698
    %1852 = vmatpush.bf16.msra.mxu0 %v1695
    %1853 = vmatmul.bf16.gmra.mxu0 %v1831
    %v1854 = vpop.f32.mrf.mxu0
    %v1855 = vadd.f32 %v1609, %v1854
    %v1856 = vpop.f32.mrf.mxu0
    %1857 = vdwg.mxu0
    %1858 = vmatpush.bf16.msra.mxu0 %v1717
    %1859 = vmatpush.bf16.msra.mxu0 %v1714
    %1860 = vmatpush.bf16.msra.mxu0 %v1711
    %1861 = vmatpush.bf16.msra.mxu0 %v1708
    %1862 = vmatpush.bf16.msra.mxu0 %v1705
    %1863 = vmatpush.bf16.msra.mxu0 %v1702
    %1864 = vmatpush.bf16.msra.mxu0 %v1699
    %1865 = vmatpush.bf16.msra.mxu0 %v1696
    %1866 = vmatmul.bf16.gmra.mxu0 %v1831
    %v1867 = vpop.f32.mrf.mxu0
    %v1868 = vadd.f32 %v1610, %v1867
    %v1869 = vpop.f32.mrf.mxu0
    %1870 = vdwg.mxu0
    %v1871 = vadd.f32 %v1828, %v1842
    %v1872 = vxor.u32 %v1871, 2147483648
    %v1873 = vmul.f32 %v1872, 1.442695
    %v1874 = vpow.pop %v1873
    %v1875 = vadd.f32 %v1874, 1.0
    %v1876 = vrcp.pop %v1875
    %v1877 = vmul.f32 %v1875, %v1876
    %v1878 = vsub.f32 1.0, %v1877
    %v1879 = vmul.f32 %v1876, %v1878
    %v1880 = vadd.f32 %v1876, %v1879
    %vm1881 = vweird.f32 %v1875
    %vm1882 = vweird.f32 %v1876
    %vm1883 = vmor %vm1881, %vm1882
    %v1884 = vsel %vm1883, %v1876, %v1880
    %v1885 = vand.u32 2147483647, %v1875
    %vm1886 = vcmp.eq.f32.partialorder %v1885, 8.507059e+37
    %v1887 = vand.u32 %v1875, 2147483648
    %v1888 = vor.u32 1.1754944e-38, %v1887
    %v1889 = vsel %vm1886, %v1888, %v1884
    %v1890 = vmul.f32 1.0, %v1889
    %v1891 = vadd.f32 %v1829, %v1855
    %v1892 = vxor.u32 %v1891, 2147483648
    %v1893 = vmul.f32 %v1892, 1.442695
    %v1894 = vpow.pop %v1893
    %v1895 = vadd.f32 %v1894, 1.0
    %v1896 = vrcp.pop %v1895
    %v1897 = vmul.f32 %v1895, %v1896
    %v1898 = vsub.f32 1.0, %v1897
    %v1899 = vmul.f32 %v1896, %v1898
    %v1900 = vadd.f32 %v1896, %v1899
    %vm1901 = vweird.f32 %v1895
    %vm1902 = vweird.f32 %v1896
    %vm1903 = vmor %vm1901, %vm1902
    %v1904 = vsel %vm1903, %v1896, %v1900
    %v1905 = vand.u32 2147483647, %v1895
    %vm1906 = vcmp.eq.f32.partialorder %v1905, 8.507059e+37
    %v1907 = vand.u32 %v1895, 2147483648
    %v1908 = vor.u32 1.1754944e-38, %v1907
    %v1909 = vsel %vm1906, %v1908, %v1904
    %v1910 = vmul.f32 1.0, %v1909
    %v1911 = vmul.f32 %v1890, %v1868
    %v1912 = vadd.f32 %v1830, %v1911
    %v1913 = vtanh.pop %v1912
    %v1914 = vsub.f32 %v1826, %v1913
    %v1915 = vmul.f32 %v1910, %v1914
    %v1916 = vadd.f32 %v1913, %v1915
    %1917 = vst [vmem:[#allocation3 + $0x8] sm:$0xff] %v1916
    %v1918 = vld [vmem:[#allocation2 + $0x30] sm:$0xff]
    %v1919 = vld [vmem:[#allocation2 + $0x38] sm:$0xff]
    %v1920 = vld [vmem:[#allocation2 + $0x40] sm:$0xff]
    %v1921 = vpack.c.bf16 %v1916, %v1916
    %1922 = vmatpush.bf16.msra.mxu0 %v1715
    %1923 = vmatpush.bf16.msra.mxu0 %v1712
    %1924 = vmatpush.bf16.msra.mxu0 %v1709
    %1925 = vmatpush.bf16.msra.mxu0 %v1706
    %1926 = vmatpush.bf16.msra.mxu0 %v1703
    %1927 = vmatpush.bf16.msra.mxu0 %v1700
    %1928 = vmatpush.bf16.msra.mxu0 %v1697
    %1929 = vmatpush.bf16.msra.mxu0 %v1694
    %1930 = vmatmul.bf16.gmra.mxu0 %v1921
    %v1931 = vpop.f32.mrf.mxu0
    %v1932 = vadd.f32 %v1608, %v1931
    %v1933 = vpop.f32.mrf.mxu0
    %1934 = vdwg.mxu0
    %1935 = vmatpush.bf16.msra.mxu0 %v1716
    %1936 = vmatpush.bf16.msra.mxu0 %v1713
    %1937 = vmatpush.bf16.msra.mxu0 %v1710
    %1938 = vmatpush.bf16.msra.mxu0 %v1707
    %1939 = vmatpush.bf16.msra.mxu0 %v1704
    %1940 = vmatpush.bf16.msra.mxu0 %v1701
    %1941 = vmatpush.bf16.msra.mxu0 %v1698
    %1942 = vmatpush.bf16.msra.mxu0 %v1695
    %1943 = vmatmul.bf16.gmra.mxu0 %v1921
    %v1944 = vpop.f32.mrf.mxu0
    %v1945 = vadd.f32 %v1609, %v1944
    %v1946 = vpop.f32.mrf.mxu0
    %1947 = vdwg.mxu0
    %1948 = vmatpush.bf16.msra.mxu0 %v1717
    %1949 = vmatpush.bf16.msra.mxu0 %v1714
    %1950 = vmatpush.bf16.msra.mxu0 %v1711
    %1951 = vmatpush.bf16.msra.mxu0 %v1708
    %1952 = vmatpush.bf16.msra.mxu0 %v1705
    %1953 = vmatpush.bf16.msra.mxu0 %v1702
    %1954 = vmatpush.bf16.msra.mxu0 %v1699
    %1955 = vmatpush.bf16.msra.mxu0 %v1696
    %1956 = vmatmul.bf16.gmra.mxu0 %v1921
    %v1957 = vpop.f32.mrf.mxu0
    %v1958 = vadd.f32 %v1610, %v1957
    %v1959 = vpop.f32.mrf.mxu0
    %1960 = vdwg.mxu0
    %v1961 = vadd.f32 %v1918, %v1932
    %v1962 = vxor.u32 %v1961, 2147483648
    %v1963 = vmul.f32 %v1962, 1.442695
    %v1964 = vpow.pop %v1963
    %v1965 = vadd.f32 %v1964, 1.0
    %v1966 = vrcp.pop %v1965
    %v1967 = vmul.f32 %v1965, %v1966
    %v1968 = vsub.f32 1.0, %v1967
    %v1969 = vmul.f32 %v1966, %v1968
    %v1970 = vadd.f32 %v1966, %v1969
    %vm1971 = vweird.f32 %v1965
    %vm1972 = vweird.f32 %v1966
    %vm1973 = vmor %vm1971, %vm1972
    %v1974 = vsel %vm1973, %v1966, %v1970
    %v1975 = vand.u32 2147483647, %v1965
    %vm1976 = vcmp.eq.f32.partialorder %v1975, 8.507059e+37
    %v1977 = vand.u32 %v1965, 2147483648
    %v1978 = vor.u32 1.1754944e-38, %v1977
    %v1979 = vsel %vm1976, %v1978, %v1974
    %v1980 = vmul.f32 1.0, %v1979
    %v1981 = vadd.f32 %v1919, %v1945
    %v1982 = vxor.u32 %v1981, 2147483648
    %v1983 = vmul.f32 %v1982, 1.442695
    %v1984 = vpow.pop %v1983
    %v1985 = vadd.f32 %v1984, 1.0
    %v1986 = vrcp.pop %v1985
    %v1987 = vmul.f32 %v1985, %v1986
    %v1988 = vsub.f32 1.0, %v1987
    %v1989 = vmul.f32 %v1986, %v1988
    %v1990 = vadd.f32 %v1986, %v1989
    %vm1991 = vweird.f32 %v1985
    %vm1992 = vweird.f32 %v1986
    %vm1993 = vmor %vm1991, %vm1992
    %v1994 = vsel %vm1993, %v1986, %v1990
    %v1995 = vand.u32 2147483647, %v1985
    %vm1996 = vcmp.eq.f32.partialorder %v1995, 8.507059e+37
    %v1997 = vand.u32 %v1985, 2147483648
    %v1998 = vor.u32 1.1754944e-38, %v1997
    %v1999 = vsel %vm1996, %v1998, %v1994
    %v2000 = vmul.f32 1.0, %v1999
    %v2001 = vmul.f32 %v1980, %v1958
    %v2002 = vadd.f32 %v1920, %v2001
    %v2003 = vtanh.pop %v2002
    %v2004 = vsub.f32 %v1916, %v2003
    %v2005 = vmul.f32 %v2000, %v2004
    %v2006 = vadd.f32 %v2003, %v2005
    %2007 = vst [vmem:[#allocation3 + $0x10] sm:$0xff] %v2006
    %v2008 = vld [vmem:[#allocation2 + $0x48] sm:$0xff]
    %v2009 = vld [vmem:[#allocation2 + $0x50] sm:$0xff]
    %v2010 = vld [vmem:[#allocation2 + $0x58] sm:$0xff]
    %v2011 = vpack.c.bf16 %v2006, %v2006
    %2012 = vmatpush.bf16.msra.mxu0 %v1715
    %2013 = vmatpush.bf16.msra.mxu0 %v1712
    %2014 = vmatpush.bf16.msra.mxu0 %v1709
    %2015 = vmatpush.bf16.msra.mxu0 %v1706
    %2016 = vmatpush.bf16.msra.mxu0 %v1703
    %2017 = vmatpush.bf16.msra.mxu0 %v1700
    %2018 = vmatpush.bf16.msra.mxu0 %v1697
    %2019 = vmatpush.bf16.msra.mxu0 %v1694
    %2020 = vmatmul.bf16.gmra.mxu0 %v2011
    %v2021 = vpop.f32.mrf.mxu0
    %v2022 = vadd.f32 %v1608, %v2021
    %v2023 = vpop.f32.mrf.mxu0
    %2024 = vdwg.mxu0
    %2025 = vmatpush.bf16.msra.mxu0 %v1716
    %2026 = vmatpush.bf16.msra.mxu0 %v1713
    %2027 = vmatpush.bf16.msra.mxu0 %v1710
    %2028 = vmatpush.bf16.msra.mxu0 %v1707
    %2029 = vmatpush.bf16.msra.mxu0 %v1704
    %2030 = vmatpush.bf16.msra.mxu0 %v1701
    %2031 = vmatpush.bf16.msra.mxu0 %v1698
    %2032 = vmatpush.bf16.msra.mxu0 %v1695
    %2033 = vmatmul.bf16.gmra.mxu0 %v2011
    %v2034 = vpop.f32.mrf.mxu0
    %v2035 = vadd.f32 %v1609, %v2034
    %v2036 = vpop.f32.mrf.mxu0
    %2037 = vdwg.mxu0
    %2038 = vmatpush.bf16.msra.mxu0 %v1717
    %2039 = vmatpush.bf16.msra.mxu0 %v1714
    %2040 = vmatpush.bf16.msra.mxu0 %v1711
    %2041 = vmatpush.bf16.msra.mxu0 %v1708
    %2042 = vmatpush.bf16.msra.mxu0 %v1705
    %2043 = vmatpush.bf16.msra.mxu0 %v1702
    %2044 = vmatpush.bf16.msra.mxu0 %v1699
    %2045 = vmatpush.bf16.msra.mxu0 %v1696
    %2046 = vmatmul.bf16.gmra.mxu0 %v2011
    %v2047 = vpop.f32.mrf.mxu0
    %v2048 = vadd.f32 %v1610, %v2047
    %v2049 = vpop.f32.mrf.mxu0
    %2050 = vdwg.mxu0
    %v2051 = vadd.f32 %v2008, %v2022
    %v2052 = vxor.u32 %v2051, 2147483648
    %v2053 = vmul.f32 %v2052, 1.442695
    %v2054 = vpow.pop %v2053
    %v2055 = vadd.f32 %v2054, 1.0
    %v2056 = vrcp.pop %v2055
    %v2057 = vmul.f32 %v2055, %v2056
    %v2058 = vsub.f32 1.0, %v2057
    %v2059 = vmul.f32 %v2056, %v2058
    %v2060 = vadd.f32 %v2056, %v2059
    %vm2061 = vweird.f32 %v2055
    %vm2062 = vweird.f32 %v2056
    %vm2063 = vmor %vm2061, %vm2062
    %v2064 = vsel %vm2063, %v2056, %v2060
    %v2065 = vand.u32 2147483647, %v2055
    %vm2066 = vcmp.eq.f32.partialorder %v2065, 8.507059e+37
    %v2067 = vand.u32 %v2055, 2147483648
    %v2068 = vor.u32 1.1754944e-38, %v2067
    %v2069 = vsel %vm2066, %v2068, %v2064
    %v2070 = vmul.f32 1.0, %v2069
    %v2071 = vadd.f32 %v2009, %v2035
    %v2072 = vxor.u32 %v2071, 2147483648
    %v2073 = vmul.f32 %v2072, 1.442695
    %v2074 = vpow.pop %v2073
    %v2075 = vadd.f32 %v2074, 1.0
    %v2076 = vrcp.pop %v2075
    %v2077 = vmul.f32 %v2075, %v2076
    %v2078 = vsub.f32 1.0, %v2077
    %v2079 = vmul.f32 %v2076, %v2078
    %v2080 = vadd.f32 %v2076, %v2079
    %vm2081 = vweird.f32 %v2075
    %vm2082 = vweird.f32 %v2076
    %vm2083 = vmor %vm2081, %vm2082
    %v2084 = vsel %vm2083, %v2076, %v2080
    %v2085 = vand.u32 2147483647, %v2075
    %vm2086 = vcmp.eq.f32.partialorder %v2085, 8.507059e+37
    %v2087 = vand.u32 %v2075, 2147483648
    %v2088 = vor.u32 1.1754944e-38, %v2087
    %v2089 = vsel %vm2086, %v2088, %v2084
    %v2090 = vmul.f32 1.0, %v2089
    %v2091 = vmul.f32 %v2070, %v2048
    %v2092 = vadd.f32 %v2010, %v2091
    %v2093 = vtanh.pop %v2092
    %v2094 = vsub.f32 %v2006, %v2093
    %v2095 = vmul.f32 %v2090, %v2094
    %v2096 = vadd.f32 %v2093, %v2095
    %2097 = vst [vmem:[#allocation3 + $0x18] sm:$0xff] %v2096
    %v2098 = vld [vmem:[#allocation2 + $0x60] sm:$0xff]
    %v2099 = vld [vmem:[#allocation2 + $0x68] sm:$0xff]
    %v2100 = vld [vmem:[#allocation2 + $0x70] sm:$0xff]
    %v2101 = vpack.c.bf16 %v2096, %v2096
    %2102 = vmatpush.bf16.msra.mxu0 %v1715
    %2103 = vmatpush.bf16.msra.mxu0 %v1712
    %2104 = vmatpush.bf16.msra.mxu0 %v1709
    %2105 = vmatpush.bf16.msra.mxu0 %v1706
    %2106 = vmatpush.bf16.msra.mxu0 %v1703
    %2107 = vmatpush.bf16.msra.mxu0 %v1700
    %2108 = vmatpush.bf16.msra.mxu0 %v1697
    %2109 = vmatpush.bf16.msra.mxu0 %v1694
    %2110 = vmatmul.bf16.gmra.mxu0 %v2101
    %v2111 = vpop.f32.mrf.mxu0
    %v2112 = vadd.f32 %v1608, %v2111
    %v2113 = vpop.f32.mrf.mxu0
    %2114 = vdwg.mxu0
    %2115 = vmatpush.bf16.msra.mxu0 %v1716
    %2116 = vmatpush.bf16.msra.mxu0 %v1713
    %2117 = vmatpush.bf16.msra.mxu0 %v1710
    %2118 = vmatpush.bf16.msra.mxu0 %v1707
    %2119 = vmatpush.bf16.msra.mxu0 %v1704
    %2120 = vmatpush.bf16.msra.mxu0 %v1701
    %2121 = vmatpush.bf16.msra.mxu0 %v1698
    %2122 = vmatpush.bf16.msra.mxu0 %v1695
    %2123 = vmatmul.bf16.gmra.mxu0 %v2101
    %v2124 = vpop.f32.mrf.mxu0
    %v2125 = vadd.f32 %v1609, %v2124
    %v2126 = vpop.f32.mrf.mxu0
    %2127 = vdwg.mxu0
    %2128 = vmatpush.bf16.msra.mxu0 %v1717
    %2129 = vmatpush.bf16.msra.mxu0 %v1714
    %2130 = vmatpush.bf16.msra.mxu0 %v1711
    %2131 = vmatpush.bf16.msra.mxu0 %v1708
    %2132 = vmatpush.bf16.msra.mxu0 %v1705
    %2133 = vmatpush.bf16.msra.mxu0 %v1702
    %2134 = vmatpush.bf16.msra.mxu0 %v1699
    %2135 = vmatpush.bf16.msra.mxu0 %v1696
    %2136 = vmatmul.bf16.gmra.mxu0 %v2101
    %v2137 = vpop.f32.mrf.mxu0
    %v2138 = vadd.f32 %v1610, %v2137
    %v2139 = vpop.f32.mrf.mxu0
    %2140 = vdwg.mxu0
    %v2141 = vadd.f32 %v2098, %v2112
    %v2142 = vxor.u32 %v2141, 2147483648
    %v2143 = vmul.f32 %v2142, 1.442695
    %v2144 = vpow.pop %v2143
    %v2145 = vadd.f32 %v2144, 1.0
    %v2146 = vrcp.pop %v2145
    %v2147 = vmul.f32 %v2145, %v2146
    %v2148 = vsub.f32 1.0, %v2147
    %v2149 = vmul.f32 %v2146, %v2148
    %v2150 = vadd.f32 %v2146, %v2149
    %vm2151 = vweird.f32 %v2145
    %vm2152 = vweird.f32 %v2146
    %vm2153 = vmor %vm2151, %vm2152
    %v2154 = vsel %vm2153, %v2146, %v2150
    %v2155 = vand.u32 2147483647, %v2145
    %vm2156 = vcmp.eq.f32.partialorder %v2155, 8.507059e+37
    %v2157 = vand.u32 %v2145, 2147483648
    %v2158 = vor.u32 1.1754944e-38, %v2157
    %v2159 = vsel %vm2156, %v2158, %v2154
    %v2160 = vmul.f32 1.0, %v2159
    %v2161 = vadd.f32 %v2099, %v2125
    %v2162 = vxor.u32 %v2161, 2147483648
    %v2163 = vmul.f32 %v2162, 1.442695
    %v2164 = vpow.pop %v2163
    %v2165 = vadd.f32 %v2164, 1.0
    %v2166 = vrcp.pop %v2165
    %v2167 = vmul.f32 %v2165, %v2166
    %v2168 = vsub.f32 1.0, %v2167
    %v2169 = vmul.f32 %v2166, %v2168
    %v2170 = vadd.f32 %v2166, %v2169
    %vm2171 = vweird.f32 %v2165
    %vm2172 = vweird.f32 %v2166
    %vm2173 = vmor %vm2171, %vm2172
    %v2174 = vsel %vm2173, %v2166, %v2170
    %v2175 = vand.u32 2147483647, %v2165
    %vm2176 = vcmp.eq.f32.partialorder %v2175, 8.507059e+37
    %v2177 = vand.u32 %v2165, 2147483648
    %v2178 = vor.u32 1.1754944e-38, %v2177
    %v2179 = vsel %vm2176, %v2178, %v2174
    %v2180 = vmul.f32 1.0, %v2179
    %v2181 = vmul.f32 %v2160, %v2138
    %v2182 = vadd.f32 %v2100, %v2181
    %v2183 = vtanh.pop %v2182
    %v2184 = vsub.f32 %v2096, %v2183
    %v2185 = vmul.f32 %v2180, %v2184
    %v2186 = vadd.f32 %v2183, %v2185
    %2187 = vst [vmem:[#allocation3 + $0x20] sm:$0xff] %v2186
    %v2188 = vld [vmem:[#allocation2 + $0x78] sm:$0xff]
    %v2189 = vld [vmem:[#allocation2 + $0x80] sm:$0xff]
    %v2190 = vld [vmem:[#allocation2 + $0x88] sm:$0xff]
    %v2191 = vpack.c.bf16 %v2186, %v2186
    %2192 = vmatpush.bf16.msra.mxu0 %v1715
    %2193 = vmatpush.bf16.msra.mxu0 %v1712
    %2194 = vmatpush.bf16.msra.mxu0 %v1709
    %2195 = vmatpush.bf16.msra.mxu0 %v1706
    %2196 = vmatpush.bf16.msra.mxu0 %v1703
    %2197 = vmatpush.bf16.msra.mxu0 %v1700
    %2198 = vmatpush.bf16.msra.mxu0 %v1697
    %2199 = vmatpush.bf16.msra.mxu0 %v1694
    %2200 = vmatmul.bf16.gmra.mxu0 %v2191
    %v2201 = vpop.f32.mrf.mxu0
    %v2202 = vadd.f32 %v1608, %v2201
    %v2203 = vpop.f32.mrf.mxu0
    %2204 = vdwg.mxu0
    %2205 = vmatpush.bf16.msra.mxu0 %v1716
    %2206 = vmatpush.bf16.msra.mxu0 %v1713
    %2207 = vmatpush.bf16.msra.mxu0 %v1710
    %2208 = vmatpush.bf16.msra.mxu0 %v1707
    %2209 = vmatpush.bf16.msra.mxu0 %v1704
    %2210 = vmatpush.bf16.msra.mxu0 %v1701
    %2211 = vmatpush.bf16.msra.mxu0 %v1698
    %2212 = vmatpush.bf16.msra.mxu0 %v1695
    %2213 = vmatmul.bf16.gmra.mxu0 %v2191
    %v2214 = vpop.f32.mrf.mxu0
    %v2215 = vadd.f32 %v1609, %v2214
    %v2216 = vpop.f32.mrf.mxu0
    %2217 = vdwg.mxu0
    %2218 = vmatpush.bf16.msra.mxu0 %v1717
    %2219 = vmatpush.bf16.msra.mxu0 %v1714
    %2220 = vmatpush.bf16.msra.mxu0 %v1711
    %2221 = vmatpush.bf16.msra.mxu0 %v1708
    %2222 = vmatpush.bf16.msra.mxu0 %v1705
    %2223 = vmatpush.bf16.msra.mxu0 %v1702
    %2224 = vmatpush.bf16.msra.mxu0 %v1699
    %2225 = vmatpush.bf16.msra.mxu0 %v1696
    %2226 = vmatmul.bf16.gmra.mxu0 %v2191
    %v2227 = vpop.f32.mrf.mxu0
    %v2228 = vadd.f32 %v1610, %v2227
    %v2229 = vpop.f32.mrf.mxu0
    %2230 = vdwg.mxu0
    %v2231 = vadd.f32 %v2188, %v2202
    %v2232 = vxor.u32 %v2231, 2147483648
    %v2233 = vmul.f32 %v2232, 1.442695
    %v2234 = vpow.pop %v2233
    %v2235 = vadd.f32 %v2234, 1.0
    %v2236 = vrcp.pop %v2235
    %v2237 = vmul.f32 %v2235, %v2236
    %v2238 = vsub.f32 1.0, %v2237
    %v2239 = vmul.f32 %v2236, %v2238
    %v2240 = vadd.f32 %v2236, %v2239
    %vm2241 = vweird.f32 %v2235
    %vm2242 = vweird.f32 %v2236
    %vm2243 = vmor %vm2241, %vm2242
    %v2244 = vsel %vm2243, %v2236, %v2240
    %v2245 = vand.u32 2147483647, %v2235
    %vm2246 = vcmp.eq.f32.partialorder %v2245, 8.507059e+37
    %v2247 = vand.u32 %v2235, 2147483648
    %v2248 = vor.u32 1.1754944e-38, %v2247
    %v2249 = vsel %vm2246, %v2248, %v2244
    %v2250 = vmul.f32 1.0, %v2249
    %v2251 = vadd.f32 %v2189, %v2215
    %v2252 = vxor.u32 %v2251, 2147483648
    %v2253 = vmul.f32 %v2252, 1.442695
    %v2254 = vpow.pop %v2253
    %v2255 = vadd.f32 %v2254, 1.0
    %v2256 = vrcp.pop %v2255
    %v2257 = vmul.f32 %v2255, %v2256
    %v2258 = vsub.f32 1.0, %v2257
    %v2259 = vmul.f32 %v2256, %v2258
    %v2260 = vadd.f32 %v2256, %v2259
    %vm2261 = vweird.f32 %v2255
    %vm2262 = vweird.f32 %v2256
    %vm2263 = vmor %vm2261, %vm2262
    %v2264 = vsel %vm2263, %v2256, %v2260
    %v2265 = vand.u32 2147483647, %v2255
    %vm2266 = vcmp.eq.f32.partialorder %v2265, 8.507059e+37
    %v2267 = vand.u32 %v2255, 2147483648
    %v2268 = vor.u32 1.1754944e-38, %v2267
    %v2269 = vsel %vm2266, %v2268, %v2264
    %v2270 = vmul.f32 1.0, %v2269
    %v2271 = vmul.f32 %v2250, %v2228
    %v2272 = vadd.f32 %v2190, %v2271
    %v2273 = vtanh.pop %v2272
    %v2274 = vsub.f32 %v2186, %v2273
    %v2275 = vmul.f32 %v2270, %v2274
    %v2276 = vadd.f32 %v2273, %v2275
    %2277 = vst [vmem:[#allocation3 + $0x28] sm:$0xff] %v2276
    %v2278 = vld [vmem:[#allocation2 + $0x90] sm:$0xff]
    %v2279 = vld [vmem:[#allocation2 + $0x98] sm:$0xff]
    %v2280 = vld [vmem:[#allocation2 + $0xa0] sm:$0xff]
    %v2281 = vpack.c.bf16 %v2276, %v2276
    %2282 = vmatpush.bf16.msra.mxu0 %v1715
    %2283 = vmatpush.bf16.msra.mxu0 %v1712
    %2284 = vmatpush.bf16.msra.mxu0 %v1709
    %2285 = vmatpush.bf16.msra.mxu0 %v1706
    %2286 = vmatpush.bf16.msra.mxu0 %v1703
    %2287 = vmatpush.bf16.msra.mxu0 %v1700
    %2288 = vmatpush.bf16.msra.mxu0 %v1697
    %2289 = vmatpush.bf16.msra.mxu0 %v1694
    %2290 = vmatmul.bf16.gmra.mxu0 %v2281
    %v2291 = vpop.f32.mrf.mxu0
    %v2292 = vadd.f32 %v1608, %v2291
    %v2293 = vpop.f32.mrf.mxu0
    %2294 = vdwg.mxu0
    %2295 = vmatpush.bf16.msra.mxu0 %v1716
    %2296 = vmatpush.bf16.msra.mxu0 %v1713
    %2297 = vmatpush.bf16.msra.mxu0 %v1710
    %2298 = vmatpush.bf16.msra.mxu0 %v1707
    %2299 = vmatpush.bf16.msra.mxu0 %v1704
    %2300 = vmatpush.bf16.msra.mxu0 %v1701
    %2301 = vmatpush.bf16.msra.mxu0 %v1698
    %2302 = vmatpush.bf16.msra.mxu0 %v1695
    %2303 = vmatmul.bf16.gmra.mxu0 %v2281
    %v2304 = vpop.f32.mrf.mxu0
    %v2305 = vadd.f32 %v1609, %v2304
    %v2306 = vpop.f32.mrf.mxu0
    %2307 = vdwg.mxu0
    %2308 = vmatpush.bf16.msra.mxu0 %v1717
    %2309 = vmatpush.bf16.msra.mxu0 %v1714
    %2310 = vmatpush.bf16.msra.mxu0 %v1711
    %2311 = vmatpush.bf16.msra.mxu0 %v1708
    %2312 = vmatpush.bf16.msra.mxu0 %v1705
    %2313 = vmatpush.bf16.msra.mxu0 %v1702
    %2314 = vmatpush.bf16.msra.mxu0 %v1699
    %2315 = vmatpush.bf16.msra.mxu0 %v1696
    %2316 = vmatmul.bf16.gmra.mxu0 %v2281
    %v2317 = vpop.f32.mrf.mxu0
    %v2318 = vadd.f32 %v1610, %v2317
    %v2319 = vpop.f32.mrf.mxu0
    %2320 = vdwg.mxu0
    %v2321 = vadd.f32 %v2278, %v2292
    %v2322 = vxor.u32 %v2321, 2147483648
    %v2323 = vmul.f32 %v2322, 1.442695
    %v2324 = vpow.pop %v2323
    %v2325 = vadd.f32 %v2324, 1.0
    %v2326 = vrcp.pop %v2325
    %v2327 = vmul.f32 %v2325, %v2326
    %v2328 = vsub.f32 1.0, %v2327
    %v2329 = vmul.f32 %v2326, %v2328
    %v2330 = vadd.f32 %v2326, %v2329
    %vm2331 = vweird.f32 %v2325
    %vm2332 = vweird.f32 %v2326
    %vm2333 = vmor %vm2331, %vm2332
    %v2334 = vsel %vm2333, %v2326, %v2330
    %v2335 = vand.u32 2147483647, %v2325
    %vm2336 = vcmp.eq.f32.partialorder %v2335, 8.507059e+37
    %v2337 = vand.u32 %v2325, 2147483648
    %v2338 = vor.u32 1.1754944e-38, %v2337
    %v2339 = vsel %vm2336, %v2338, %v2334
    %v2340 = vmul.f32 1.0, %v2339
    %v2341 = vadd.f32 %v2279, %v2305
    %v2342 = vxor.u32 %v2341, 2147483648
    %v2343 = vmul.f32 %v2342, 1.442695
    %v2344 = vpow.pop %v2343
    %v2345 = vadd.f32 %v2344, 1.0
    %v2346 = vrcp.pop %v2345
    %v2347 = vmul.f32 %v2345, %v2346
    %v2348 = vsub.f32 1.0, %v2347
    %v2349 = vmul.f32 %v2346, %v2348
    %v2350 = vadd.f32 %v2346, %v2349
    %vm2351 = vweird.f32 %v2345
    %vm2352 = vweird.f32 %v2346
    %vm2353 = vmor %vm2351, %vm2352
    %v2354 = vsel %vm2353, %v2346, %v2350
    %v2355 = vand.u32 2147483647, %v2345
    %vm2356 = vcmp.eq.f32.partialorder %v2355, 8.507059e+37
    %v2357 = vand.u32 %v2345, 2147483648
    %v2358 = vor.u32 1.1754944e-38, %v2357
    %v2359 = vsel %vm2356, %v2358, %v2354
    %v2360 = vmul.f32 1.0, %v2359
    %v2361 = vmul.f32 %v2340, %v2318
    %v2362 = vadd.f32 %v2280, %v2361
    %v2363 = vtanh.pop %v2362
    %v2364 = vsub.f32 %v2276, %v2363
    %v2365 = vmul.f32 %v2360, %v2364
    %v2366 = vadd.f32 %v2363, %v2365
    %2367 = vst [vmem:[#allocation3 + $0x30] sm:$0xff] %v2366
    %v2368 = vld [vmem:[#allocation2 + $0xa8] sm:$0xff]
    %v2369 = vld [vmem:[#allocation2 + $0xb0] sm:$0xff]
    %v2370 = vld [vmem:[#allocation2 + $0xb8] sm:$0xff]
    %v2371 = vpack.c.bf16 %v2366, %v2366
    %2372 = vmatpush.bf16.msra.mxu0 %v1715
    %2373 = vmatpush.bf16.msra.mxu0 %v1712
    %2374 = vmatpush.bf16.msra.mxu0 %v1709
    %2375 = vmatpush.bf16.msra.mxu0 %v1706
    %2376 = vmatpush.bf16.msra.mxu0 %v1703
    %2377 = vmatpush.bf16.msra.mxu0 %v1700
    %2378 = vmatpush.bf16.msra.mxu0 %v1697
    %2379 = vmatpush.bf16.msra.mxu0 %v1694
    %2380 = vmatmul.bf16.gmra.mxu0 %v2371
    %v2381 = vpop.f32.mrf.mxu0
    %v2382 = vadd.f32 %v1608, %v2381
    %v2383 = vpop.f32.mrf.mxu0
    %2384 = vdwg.mxu0
    %2385 = vmatpush.bf16.msra.mxu0 %v1716
    %2386 = vmatpush.bf16.msra.mxu0 %v1713
    %2387 = vmatpush.bf16.msra.mxu0 %v1710
    %2388 = vmatpush.bf16.msra.mxu0 %v1707
    %2389 = vmatpush.bf16.msra.mxu0 %v1704
    %2390 = vmatpush.bf16.msra.mxu0 %v1701
    %2391 = vmatpush.bf16.msra.mxu0 %v1698
    %2392 = vmatpush.bf16.msra.mxu0 %v1695
    %2393 = vmatmul.bf16.gmra.mxu0 %v2371
    %v2394 = vpop.f32.mrf.mxu0
    %v2395 = vadd.f32 %v1609, %v2394
    %v2396 = vpop.f32.mrf.mxu0
    %2397 = vdwg.mxu0
    %2398 = vmatpush.bf16.msra.mxu0 %v1717
    %2399 = vmatpush.bf16.msra.mxu0 %v1714
    %2400 = vmatpush.bf16.msra.mxu0 %v1711
    %2401 = vmatpush.bf16.msra.mxu0 %v1708
    %2402 = vmatpush.bf16.msra.mxu0 %v1705
    %2403 = vmatpush.bf16.msra.mxu0 %v1702
    %2404 = vmatpush.bf16.msra.mxu0 %v1699
    %2405 = vmatpush.bf16.msra.mxu0 %v1696
    %2406 = vmatmul.bf16.gmra.mxu0 %v2371
    %v2407 = vpop.f32.mrf.mxu0
    %v2408 = vadd.f32 %v1610, %v2407
    %v2409 = vpop.f32.mrf.mxu0
    %2410 = vdwg.mxu0
    %v2411 = vadd.f32 %v2368, %v2382
    %v2412 = vxor.u32 %v2411, 2147483648
    %v2413 = vmul.f32 %v2412, 1.442695
    %v2414 = vpow.pop %v2413
    %v2415 = vadd.f32 %v2414, 1.0
    %v2416 = vrcp.pop %v2415
    %v2417 = vmul.f32 %v2415, %v2416
    %v2418 = vsub.f32 1.0, %v2417
    %v2419 = vmul.f32 %v2416, %v2418
    %v2420 = vadd.f32 %v2416, %v2419
    %vm2421 = vweird.f32 %v2415
    %vm2422 = vweird.f32 %v2416
    %vm2423 = vmor %vm2421, %vm2422
    %v2424 = vsel %vm2423, %v2416, %v2420
    %v2425 = vand.u32 2147483647, %v2415
    %vm2426 = vcmp.eq.f32.partialorder %v2425, 8.507059e+37
    %v2427 = vand.u32 %v2415, 2147483648
    %v2428 = vor.u32 1.1754944e-38, %v2427
    %v2429 = vsel %vm2426, %v2428, %v2424
    %v2430 = vmul.f32 1.0, %v2429
    %v2431 = vadd.f32 %v2369, %v2395
    %v2432 = vxor.u32 %v2431, 2147483648
    %v2433 = vmul.f32 %v2432, 1.442695
    %v2434 = vpow.pop %v2433
    %v2435 = vadd.f32 %v2434, 1.0
    %v2436 = vrcp.pop %v2435
    %v2437 = vmul.f32 %v2435, %v2436
    %v2438 = vsub.f32 1.0, %v2437
    %v2439 = vmul.f32 %v2436, %v2438
    %v2440 = vadd.f32 %v2436, %v2439
    %vm2441 = vweird.f32 %v2435
    %vm2442 = vweird.f32 %v2436
    %vm2443 = vmor %vm2441, %vm2442
    %v2444 = vsel %vm2443, %v2436, %v2440
    %v2445 = vand.u32 2147483647, %v2435
    %vm2446 = vcmp.eq.f32.partialorder %v2445, 8.507059e+37
    %v2447 = vand.u32 %v2435, 2147483648
    %v2448 = vor.u32 1.1754944e-38, %v2447
    %v2449 = vsel %vm2446, %v2448, %v2444
    %v2450 = vmul.f32 1.0, %v2449
    %v2451 = vmul.f32 %v2430, %v2408
    %v2452 = vadd.f32 %v2370, %v2451
    %v2453 = vtanh.pop %v2452
    %v2454 = vsub.f32 %v2366, %v2453
    %v2455 = vmul.f32 %v2450, %v2454
    %v2456 = vadd.f32 %v2453, %v2455
    %2457 = vst [vmem:[#allocation3 + $0x38] sm:$0xff] %v2456
    %v2458 = vpack.c.bf16 %v2456, %v2456
    %v2459 = vld [vmem:[%s9] sm:$0xf]
    %v2460 = vld [vmem:[%s9 + $0x4] sm:$0xf]
    %v2461 = vld [vmem:[%s9 + $0x8] sm:$0xf]
    %v2462 = vld [vmem:[%s9 + $0xc] sm:$0xf]
    %v2463 = vld [vmem:[%s9 + $0x10] sm:$0xf]
    %v2464 = vld [vmem:[%s9 + $0x14] sm:$0xf]
    %v2465 = vld [vmem:[%s9 + $0x18] sm:$0xf]
    %v2466 = vld [vmem:[%s9 + $0x1c] sm:$0xf]
    %v2467 = vld [vmem:[%s9 + $0x20] sm:$0xf]
    %v2468 = vld [vmem:[%s9 + $0x24] sm:$0xf]
    %v2469 = vld [vmem:[%s9 + $0x28] sm:$0xf]
    %v2470 = vld [vmem:[%s9 + $0x2c] sm:$0xf]
    %v2471 = vld [vmem:[%s9 + $0x30] sm:$0xf]
    %v2472 = vld [vmem:[%s9 + $0x34] sm:$0xf]
    %v2473 = vld [vmem:[%s9 + $0x38] sm:$0xf]
    %v2474 = vld [vmem:[%s9 + $0x3c] sm:$0xf]
    %v2475 = vld [vmem:[%s10] sm:$0x1]
    %v2477 = vperm.slane %v2475, 0
    %v2495 = vunpack.c.l.b16 %v2459
    %v2496 = vunpack.c.l.b16 %v2460
    %v2497 = vunpack.c.l.b16 %v2461
    %v2498 = vunpack.c.l.b16 %v2462
    %v2499 = vunpack.c.l.b16 %v2463
    %v2500 = vunpack.c.l.b16 %v2464
    %v2501 = vunpack.c.l.b16 %v2465
    %v2502 = vunpack.c.l.b16 %v2466
    %v2503 = vunpack.c.l.b16 %v2467
    %v2504 = vunpack.c.l.b16 %v2468
    %v2505 = vunpack.c.l.b16 %v2469
    %v2506 = vunpack.c.l.b16 %v2470
    %v2507 = vunpack.c.l.b16 %v2471
    %v2508 = vunpack.c.l.b16 %v2472
    %v2509 = vunpack.c.l.b16 %v2473
    %v2510 = vunpack.c.l.b16 %v2474
    %v2511 = vpack.c.b16 %v2496, %v2495
    %v2512 = vpack.c.b16 %v2498, %v2497
    %v2513 = vpack.c.b16 %v2500, %v2499
    %v2514 = vpack.c.b16 %v2502, %v2501
    %v2515 = vpack.c.b16 %v2504, %v2503
    %v2516 = vpack.c.b16 %v2506, %v2505
    %v2517 = vpack.c.b16 %v2508, %v2507
    %v2518 = vpack.c.b16 %v2510, %v2509
    %2527 = vmatpush.bf16.msra.mxu0 %v2518
    %2528 = vmatpush.bf16.msra.mxu0 %v2517
    %2529 = vmatpush.bf16.msra.mxu0 %v2516
    %2530 = vmatpush.bf16.msra.mxu0 %v2515
    %2531 = vmatpush.bf16.msra.mxu0 %v2514
    %2532 = vmatpush.bf16.msra.mxu0 %v2513
    %2533 = vmatpush.bf16.msra.mxu0 %v2512
    %2534 = vmatpush.bf16.msra.mxu0 %v2511
    %2535 = vmatmul.bf16.gmra.mxu0 %v2458
    %v2536 = vpop.f32.mrf.mxu0
    %v2537 = vadd.f32 %v2477, %v2536
    %v2538 = vpop.f32.mrf.mxu0
    %2539 = vdwg.mxu0
    %2540 = vst [vmem:[%s11] sm:$0xff] %v2537
    // Predicated region
    $region62: #{gru_model_forward.1} parent=1 // pred_check
      _
    $region63: #{gru_model_forward.1} parent=1 // pred_check_branch
      %2542 = sbr.rel (0) target = $region65
    $region64: #{gru_model_forward.1} parent=1 // pred_region
      _
    $region65: #{gru_model_forward.1} parent=1 // pred_fallthru
      _
    // Predicated region
    $region66: #{gru_model_forward.1} parent=1 // pred_check
      _
    $region67: #{gru_model_forward.1} parent=1 // pred_check_branch
      %2544 = sbr.rel (0) target = $region69
    $region68: #{gru_model_forward.1} parent=1 // pred_region
      _
    $region69: #{gru_model_forward.1} parent=1 // pred_fallthru
      _
    %2545 = vsyncpa [#allocation5], 1
    %2546 = vsyncpa [#allocation7], 1
    %2547 = vsyncpa [#allocation10], 1

</llo_original>
